<compile_context>
chip_gen: v5e
topology: v5e:2x2
jax: 0.10.0
libtpu: 0.0.40
codegen_flags: <defaults>
</compile_context>

<pallas_src>
import math

import numpy as np

import jax
import jax.numpy as jnp
from jax import lax
from jax.experimental import pallas as pl
from jax.experimental.pallas import tpu as pltpu


def _round_up(a, b):
    return (a + b - 1) // b * b


def _vmem_limit_bytes(frac=0.8, fallback=32 * 1024 * 1024):
    """Per-generation scoped-VMEM limit: ~100 MiB on v5e/v6e (128 MiB physical),
    ~51 MiB on v7x (64 MiB/TC).  Falls back to a known-safe 32 MiB."""
    try:
        cap = getattr(pltpu.get_tpu_info(), "vmem_capacity_bytes", None)
        if cap:
            return int(cap * frac)
    except Exception:
        pass
    return fallback


# -----------------------------------------------------------------------------------
# Kernel 1: tiled feature projection  S = relu(X @ W_feat)  (+ fused lamb = S @ q)
# -----------------------------------------------------------------------------------
def feat_proj_kernel(x_ref, w_ref, q_ref, s_ref, lamb_ref, acc_ref):
    j = pl.program_id(1)

    @pl.when(pl.program_id(2) == 0)
    def _init():
        acc_ref[...] = jnp.zeros_like(acc_ref)

    acc_ref[...] += jnp.dot(x_ref[...], w_ref[...],
                            preferred_element_type=jnp.float32)

    @pl.when(pl.program_id(2) == pl.num_programs(2) - 1)
    def _finalize():
        s = jnp.maximum(acc_ref[...], 0.0)            # (tn, tm) f32, already in vregs
        s_ref[...] = s.astype(jnp.bfloat16)           # bf16 writeback: half the traffic
        # Fused partial of lamb = S @ q: VPU multiply + XLU lane-reduce, filler slots
        # under the MXU; accumulated across the M-chunk axis (j).
        partial = jnp.sum(s * q_ref[...], axis=-1, keepdims=True)   # (tn, 1) f32

        @pl.when(j == 0)
        def _first():
            lamb_ref[...] = partial

        @pl.when(j > 0)
        def _rest():
            lamb_ref[...] += partial


def feature_projection(x_bf16, w_bf16, q_row, *, tn, tm, tk, vmem_limit):
    n_pad, f_pad = x_bf16.shape
    _, m_dim = w_bf16.shape
    return pl.pallas_call(
        feat_proj_kernel,
        out_shape=(
            jax.ShapeDtypeStruct((n_pad, m_dim), jnp.bfloat16),   # S (bf16)
            jax.ShapeDtypeStruct((n_pad, 1), jnp.float32),        # lamb = S @ q
        ),
        grid_spec=pltpu.PrefetchScalarGridSpec(
            num_scalar_prefetch=0,
            grid=(n_pad // tn, m_dim // tm, f_pad // tk),
            in_specs=[
                pl.BlockSpec((tn, tk), lambda i, j, k: (i, k)),
                pl.BlockSpec((tk, tm), lambda i, j, k: (k, j)),
                pl.BlockSpec((1, tm), lambda i, j, k: (0, j)),
            ],
            out_specs=(
                pl.BlockSpec((tn, tm), lambda i, j, k: (i, j)),
                pl.BlockSpec((tn, 1), lambda i, j, k: (i, 0)),
            ),
            scratch_shapes=[pltpu.VMEM((tn, tm), jnp.float32)],
        ),
        compiler_params=pltpu.CompilerParams(
            # j must be "arbitrary": lamb accumulates across it.  i stays "parallel"
            # so v7x megacore splits along instances when N_pad/tn >= 2.
            dimension_semantics=("parallel", "arbitrary", "arbitrary"),
            vmem_limit_bytes=vmem_limit,
        ),
        cost_estimate=pl.CostEstimate(
            flops=2 * n_pad * f_pad * m_dim + 2 * n_pad * m_dim,
            transcendentals=0,
            bytes_accessed=(n_pad * f_pad * 2 + f_pad * m_dim * 2 + m_dim * 4
                            + n_pad * m_dim * 2 + n_pad * 4),
        ),
    )(x_bf16, w_bf16, q_row)


# -----------------------------------------------------------------------------------
# Kernel 2: fused MIL attention pooling + classifier head, streamed over M chunks
# -----------------------------------------------------------------------------------
def mil_pool_kernel(bag_ids_ref, lamb_ref, s_ref, fcw_ref, fcb_ref,
                    logits_ref, att_ref):
    @pl.when(pl.program_id(0) == 0)
    def _softmax_init():
        n_bags_p, n_inst = att_ref.shape
        # Per-bag masked softmax over the instance (lane) axis, all in f32.
        bag_row = lax.broadcasted_iota(jnp.int32, (n_bags_p, n_inst), 0)
        mask = bag_row == bag_ids_ref[...]                       # (n_bags_p, N_pad)
        scores = jnp.where(mask, lamb_ref[...], jnp.float32(-1e30))
        m = jnp.max(scores, axis=-1, keepdims=True)
        # NOTE: the `* mask` multiply is load-bearing: for an empty/padded bag every
        # score is -1e30, so exp(scores - m) == 1 and only the mask zeroes it out.
        p = jnp.exp(scores - m) * mask.astype(jnp.float32)
        l = jnp.sum(p, axis=-1, keepdims=True)
        inv_l = pl.reciprocal(jnp.maximum(l, jnp.float32(1e-30)), approx=False)
        att_ref[...] = p * inv_l                                 # exact softmax, f32
        logits_ref[...] = pl.broadcast_to(fcb_ref[...], logits_ref.shape)

    # Streaming pooled-feature + classifier accumulation over this M chunk.
    # Both matmuls use bf16 operands with f32 accumulation on the MXU; S is never
    # fully resident (only this (N_pad, tm) chunk, double-buffered by the pipeline).
    att_bf = att_ref[...].astype(jnp.bfloat16)
    h_chunk = jnp.dot(att_bf, s_ref[...], preferred_element_type=jnp.float32)
    logits_ref[...] += jnp.dot(h_chunk.astype(jnp.bfloat16), fcw_ref[...],
                               preferred_element_type=jnp.float32)


def mil_attention_pool(bag_ids, lamb_row, s_bf16, fcw_bf16, fcb_row, *,
                       n_bags_p, tm, vmem_limit):
    n_pad, m_dim = s_bf16.shape
    c_pad = fcw_bf16.shape[1]
    return pl.pallas_call(
        mil_pool_kernel,
        out_shape=(
            jax.ShapeDtypeStruct((n_bags_p, c_pad), jnp.float32),   # logits (padded)
            jax.ShapeDtypeStruct((n_bags_p, n_pad), jnp.float32),   # attention
        ),
        grid_spec=pltpu.PrefetchScalarGridSpec(
            num_scalar_prefetch=0,
            grid=(m_dim // tm,),
            in_specs=[
                pl.BlockSpec((1, n_pad), lambda j: (0, 0)),        # bag ids
                pl.BlockSpec((1, n_pad), lambda j: (0, 0)),        # lamb (lane-dense)
                pl.BlockSpec((n_pad, tm), lambda j: (0, j)),       # S chunk (bf16)
                pl.BlockSpec((tm, c_pad), lambda j: (j, 0)),       # fc_w chunk (bf16)
                pl.BlockSpec((1, c_pad), lambda j: (0, 0)),        # fc_b
            ],
            out_specs=(
                pl.BlockSpec((n_bags_p, c_pad), lambda j: (0, 0)),
                pl.BlockSpec((n_bags_p, n_pad), lambda j: (0, 0)),
            ),
        ),
        compiler_params=pltpu.CompilerParams(
            dimension_semantics=("arbitrary",),
            vmem_limit_bytes=vmem_limit,
        ),
        cost_estimate=pl.CostEstimate(
            flops=2 * n_bags_p * n_pad * m_dim + 2 * n_bags_p * m_dim * c_pad,
            transcendentals=n_bags_p * n_pad,
            bytes_accessed=(n_pad * m_dim * 2 + m_dim * c_pad * 2 + n_pad * 4
                            + n_pad * 4 + c_pad * 4
                            + n_bags_p * (n_pad + c_pad) * 4),
        ),
    )(bag_ids, lamb_row, s_bf16, fcw_bf16, fcb_row)


# -----------------------------------------------------------------------------------
# Host wrapper mirroring ModifiedModel.forward(x, markers)
# -----------------------------------------------------------------------------------
def modified_model_forward(x, markers, params):
    """x: (N, C, H, W) f32 (NCHW).  markers: python list, len = n_bags + 1.
    Returns (logits (n_bags, num_classes), attention_weights_list, Y_hat (n_bags,))."""
    w_feat, q, fc_w, fc_b = params
    n_inst = x.shape[0]
    feat_dim = x.shape[1] * x.shape[2] * x.shape[3]
    m_dim = w_feat.shape[1]
    num_classes = fc_w.shape[1]
    n_bags = len(markers) - 1

    vmem_limit = _vmem_limit_bytes()

    # ---- tiling / padding choices ------------------------------------------------
    n_pad = _round_up(max(n_inst, 1), 128)     # lane-dense attention / MXU-friendly
    tn = 256 if n_pad % 256 == 0 else 128      # fill the 2x256^2 MXU rows when possible
    f_pad = _round_up(feat_dim, 512)
    tk = 1024 if f_pad % 1024 == 0 else 512    # big K tiles: fewer grid steps
    tm = 512 if m_dim % 512 == 0 else (256 if m_dim % 256 == 0 else
                                       (128 if m_dim % 128 == 0 else m_dim))
    n_bags_p = _round_up(max(n_bags, 1), 8)
    c_pad = _round_up(num_classes, 128)        # lane-dense logits store (+ zero-pad fc)

    # ---- operand prep: flatten NCHW, zero-pad, bf16 for all MXU operands ----------
    x_flat = x.reshape(n_inst, feat_dim)
    x_bf16 = jnp.pad(x_flat.astype(jnp.bfloat16),
                     ((0, n_pad - n_inst), (0, f_pad - feat_dim)))
    w_bf16 = jnp.pad(w_feat.astype(jnp.bfloat16), ((0, f_pad - feat_dim), (0, 0)))
    q_row = q.reshape(1, m_dim).astype(jnp.float32)
    fcw_bf16 = jnp.pad(fc_w, ((0, 0), (0, c_pad - num_classes))).astype(jnp.bfloat16)
    fcb_row = jnp.pad(fc_b, (0, c_pad - num_classes)).reshape(1, c_pad).astype(jnp.float32)

    # Per-instance bag id (-1 for padded instances) replaces the start/end markers:
    # one lane-iota compare builds the whole (n_bags, N) mask in-kernel.
    ids = [-1] * n_pad
    for b in range(n_bags):
        for i in range(markers[b], markers[b + 1]):
            ids[i] = b
    bag_ids = jnp.asarray(ids, jnp.int32).reshape(1, n_pad)

    # ---- kernel 1: tiled, pipelined feature projection (+ fused lamb) -------------
    s_bf16, lamb_col = feature_projection(x_bf16, w_bf16, q_row,
                                          tn=tn, tm=tm, tk=tk, vmem_limit=vmem_limit)
    lamb_row = lamb_col.reshape(1, n_pad)      # tiny relayout onto the lane axis

    # ---- kernel 2: fused MIL attention pooling + fc head (M-streamed) -------------
    logits_pad, att_t = mil_attention_pool(bag_ids, lamb_row, s_bf16, fcw_bf16,
                                           fcb_row, n_bags_p=n_bags_p, tm=tm,
                                           vmem_limit=vmem_limit)

    logits = logits_pad[:n_bags, :num_classes]
    y_hat = jnp.argmax(logits, axis=1)

    # One bulk device->host copy, then per-bag numpy slices (avoids n_bags tiny
    # device dynamic-slice dispatches).
    att_host = np.asarray(jax.device_get(att_t))
    attention_weights_list = [
        att_host[b, markers[b]:markers[b + 1]].reshape(-1, 1) for b in range(n_bags)
    ]
    return logits, attention_weights_list, y_hat


def init_params(key, feat_dim, M=2048, num_classes=3):
    k1, k2, k3, k4 = jax.random.split(key, 4)
    w_feat = jax.random.normal(k1, (feat_dim, M), jnp.float32) / math.sqrt(feat_dim)
    q = jax.random.normal(k2, (M, 1), jnp.float32)          # torch.randn(M, 1)
    fc_w = jax.random.normal(k3, (M, num_classes), jnp.float32) / math.sqrt(M)
    fc_b = 0.01 * jax.random.normal(k4, (num_classes,), jnp.float32)
    return w_feat, q, fc_w, fc_b


if __name__ == "__main__":
    key = jax.random.PRNGKey(0)
    k_x, k_p = jax.random.split(key)

    # small shapes consistent with the module: in_chans=1, M=2048, num_classes=3
    n_inst, c_in, h, w = 8, 1, 32, 32
    m_dim, num_classes = 2048, 3
    markers = [0, 2, 5, 8]                                    # 3 bags over 8 instances

    x = jax.random.normal(k_x, (n_inst, c_in, h, w), jnp.float32)
    params = init_params(k_p, c_in * h * w, M=m_dim, num_classes=num_classes)

    logits, att_list, y_hat = modified_model_forward(x, markers, params)
    jax.block_until_ready((logits, y_hat))

    n_bags = len(markers) - 1
    assert logits.shape == (n_bags, num_classes)
    assert y_hat.shape == (n_bags,)
    assert all(att_list[i].shape == (markers[i + 1] - markers[i], 1)
               for i in range(n_bags))
    assert bool(jnp.all(jnp.isfinite(logits)))
    assert all(abs(float(np.sum(att_list[i])) - 1.0) < 1e-2 for i in range(n_bags))
    print("KERNEL_OK")
</pallas_src>

<mosaic_0001>
module attributes {stable_mosaic.version = 11 : i64} {
  func.func @feat_proj_kernel(%arg0: i32, %arg1: i32, %arg2: i32, %arg3: memref<128x1024xbf16, #tpu.memory_space<vmem>>, %arg4: memref<1024x512xbf16, #tpu.memory_space<vmem>>, %arg5: memref<1x512xf32, #tpu.memory_space<vmem>>, %arg6: memref<128x512xbf16, #tpu.memory_space<vmem>>, %arg7: memref<128x1xf32, #tpu.memory_space<vmem>>, %arg8: memref<128x512xf32, #tpu.memory_space<vmem>>) attributes {dimension_semantics = [#tpu.dimension_semantics<parallel>, #tpu.dimension_semantics<arbitrary>, #tpu.dimension_semantics<arbitrary>], iteration_bounds = array<i64: 1, 4, 1>, scalar_prefetch = 0 : i64, scratch_operands = 1 : i64, tpu.core_type = #tpu.core_type<tc>, window_params = [{transform_indices = @transform_0, window_bounds = array<i64: 128, 1024>}, {transform_indices = @transform_1, window_bounds = array<i64: 1024, 512>}, {transform_indices = @transform_2, window_bounds = array<i64: 1, 512>}, {transform_indices = @transform_3, window_bounds = array<i64: 128, 512>}, {transform_indices = @transform_4, window_bounds = array<i64: 128, 1>}]} {
    %c0_i32 = arith.constant 0 : i32
    %0 = arith.cmpi eq, %arg2, %c0_i32 : i32
    %1 = arith.extui %0 : i1 to i32
    %c0_i32_0 = arith.constant 0 : i32
    %2 = arith.cmpi ne, %1, %c0_i32_0 : i32
    scf.if %2 {
      %cst_10 = arith.constant 0.000000e+00 : f32
      %12 = vector.broadcast %cst_10 : f32 to vector<128x512xf32>
      %c0_11 = arith.constant 0 : index
      %c0_12 = arith.constant 0 : index
      %13 = vector.load %arg8[%c0_11, %c0_12] : memref<128x512xf32, #tpu.memory_space<vmem>>, vector<128x512xf32>
      tpu.vector_store %arg8[%c0_11, %c0_12], %12 {strides = array<i32>} : memref<128x512xf32, #tpu.memory_space<vmem>>, vector<128x512xf32>,
    } else {
    }
    %c0 = arith.constant 0 : index
    %c0_1 = arith.constant 0 : index
    %3 = vector.load %arg8[%c0, %c0_1] : memref<128x512xf32, #tpu.memory_space<vmem>>, vector<128x512xf32>
    %c0_2 = arith.constant 0 : index
    %c0_3 = arith.constant 0 : index
    %4 = vector.load %arg3[%c0_2, %c0_3] : memref<128x1024xbf16, #tpu.memory_space<vmem>>, vector<128x1024xbf16>
    %c0_4 = arith.constant 0 : index
    %c0_5 = arith.constant 0 : index
    %5 = vector.load %arg4[%c0_4, %c0_5] : memref<1024x512xbf16, #tpu.memory_space<vmem>>, vector<1024x512xbf16>
    %cst = arith.constant dense<0.000000e+00> : vector<128x512xf32>
    %6 = tpu.matmul %4, %5, %cst {dimension_numbers = #tpu.dot_dimension_numbers<[1], [0], [0], [1], [0, 0, 1, 1], [], []>} : vector<128x1024xbf16>, vector<1024x512xbf16>, vector<128x512xf32> -> vector<128x512xf32>
    %7 = arith.addf %3, %6 : vector<128x512xf32>
    %c0_6 = arith.constant 0 : index
    %c0_7 = arith.constant 0 : index
    %8 = vector.load %arg8[%c0_6, %c0_7] : memref<128x512xf32, #tpu.memory_space<vmem>>, vector<128x512xf32>
    tpu.vector_store %arg8[%c0_6, %c0_7], %7 {strides = array<i32>} : memref<128x512xf32, #tpu.memory_space<vmem>>, vector<128x512xf32>,
    %c0_i32_8 = arith.constant 0 : i32
    %9 = arith.cmpi eq, %arg2, %c0_i32_8 : i32
    %10 = arith.extui %9 : i1 to i32
    %c0_i32_9 = arith.constant 0 : i32
    %11 = arith.cmpi ne, %10, %c0_i32_9 : i32
    scf.if %11 {
      %c0_10 = arith.constant 0 : index
      %c0_11 = arith.constant 0 : index
      %12 = vector.load %arg8[%c0_10, %c0_11] : memref<128x512xf32, #tpu.memory_space<vmem>>, vector<128x512xf32>
      %cst_12 = arith.constant 0.000000e+00 : f32
      %13 = vector.broadcast %cst_12 : f32 to vector<128x512xf32>
      %14 = arith.maximumf %12, %13 : vector<128x512xf32>
      %15 = arith.truncf %14 : vector<128x512xf32> to vector<128x512xbf16>
      %c0_13 = arith.constant 0 : index
      %c0_14 = arith.constant 0 : index
      %16 = vector.load %arg6[%c0_13, %c0_14] : memref<128x512xbf16, #tpu.memory_space<vmem>>, vector<128x512xbf16>
      tpu.vector_store %arg6[%c0_13, %c0_14], %15 {strides = array<i32>} : memref<128x512xbf16, #tpu.memory_space<vmem>>, vector<128x512xbf16>,
      %c0_15 = arith.constant 0 : index
      %c0_16 = arith.constant 0 : index
      %17 = vector.load %arg5[%c0_15, %c0_16] : memref<1x512xf32, #tpu.memory_space<vmem>>, vector<1x512xf32>
      %18 = vector.broadcast %17 : vector<1x512xf32> to vector<128x512xf32>
      %19 = arith.mulf %14, %18 : vector<128x512xf32>
      %cst_17 = arith.constant dense<0.000000e+00> : vector<128xf32>
      %20 = vector.multi_reduction <add>, %19, %cst_17 [1] : vector<128x512xf32> to vector<128xf32>
      %21 = vector.shape_cast %20 : vector<128xf32> to vector<128x1xf32>
      %c0_i32_18 = arith.constant 0 : i32
      %22 = arith.cmpi eq, %arg1, %c0_i32_18 : i32
      %23 = arith.extui %22 : i1 to i32
      %c0_i32_19 = arith.constant 0 : i32
      %24 = arith.cmpi ne, %23, %c0_i32_19 : i32
      scf.if %24 {
        %c0_22 = arith.constant 0 : index
        %c0_23 = arith.constant 0 : index
        %28 = vector.load %arg7[%c0_22, %c0_23] : memref<128x1xf32, #tpu.memory_space<vmem>>, vector<128x1xf32>
        tpu.vector_store %arg7[%c0_22, %c0_23], %21 {strides = array<i32>} : memref<128x1xf32, #tpu.memory_space<vmem>>, vector<128x1xf32>,
      } else {
      }
      %c0_i32_20 = arith.constant 0 : i32
      %25 = arith.cmpi sgt, %arg1, %c0_i32_20 : i32
      %26 = arith.extui %25 : i1 to i32
      %c0_i32_21 = arith.constant 0 : i32
      %27 = arith.cmpi ne, %26, %c0_i32_21 : i32
      scf.if %27 {
        %c0_22 = arith.constant 0 : index
        %c0_23 = arith.constant 0 : index
        %28 = vector.load %arg7[%c0_22, %c0_23] : memref<128x1xf32, #tpu.memory_space<vmem>>, vector<128x1xf32>
        %29 = arith.addf %28, %21 : vector<128x1xf32>
        %c0_24 = arith.constant 0 : index
        %c0_25 = arith.constant 0 : index
        %30 = vector.load %arg7[%c0_24, %c0_25] : memref<128x1xf32, #tpu.memory_space<vmem>>, vector<128x1xf32>
        tpu.vector_store %arg7[%c0_24, %c0_25], %29 {strides = array<i32>} : memref<128x1xf32, #tpu.memory_space<vmem>>, vector<128x1xf32>,
      } else {
      }
    } else {
    }
    return
  }
  func.func @transform_0(%arg0: i32, %arg1: i32, %arg2: i32) -> (i32, i32) {
    %c0_i32 = arith.constant 0 : i32
    return %arg0, %arg2 : i32, i32
  }
  func.func @transform_1(%arg0: i32, %arg1: i32, %arg2: i32) -> (i32, i32) {
    %c0_i32 = arith.constant 0 : i32
    return %arg2, %arg1 : i32, i32
  }
  func.func @transform_2(%arg0: i32, %arg1: i32, %arg2: i32) -> (i32, i32) {
    %c0_i32 = arith.constant 0 : i32
    %c0_i32_0 = arith.constant 0 : i32
    return %c0_i32, %arg1 : i32, i32
  }
  func.func @transform_3(%arg0: i32, %arg1: i32, %arg2: i32) -> (i32, i32) {
    %c0_i32 = arith.constant 0 : i32
    return %arg0, %arg1 : i32, i32
  }
  func.func @transform_4(%arg0: i32, %arg1: i32, %arg2: i32) -> (i32, i32) {
    %c0_i32 = arith.constant 0 : i32
    %c0_i32_0 = arith.constant 0 : i32
    return %arg0, %c0_i32 : i32, i32
  }
}

</mosaic_0001>

<llo_original>
// kernel: tpu_custom_call.1
$region0: #{tpu_custom_call.1}
  #allocation0 [shape = 'u32[]', space=smem, size = 0x4, offset = 0x4, fixed_abs, tag = 'smem constant byte address 0x4 - core index']
  #allocation1 [shape = 'u32[72,128]{1,0:T(1,128)}', space=vmem, size = 0x9000, scoped, tag = 'internal scratch']
  #allocation2 [shape = 'f32[128,512]{1,0:T(8,128)}', space=vmem, size = 0x40000, scoped, tag = 'scratch operand']
  %s0 = inlined_call_operand.hbm [shape: bf16[128,1024], index: 0, kind: input, shape index: {}]
  %s1 = inlined_call_operand.hbm [shape: bf16[1024,2048], index: 1, kind: input, shape index: {}]
  %s2 = inlined_call_operand.hbm [shape: f32[1,2048], index: 2, kind: input, shape index: {}]
  %s3 = inlined_call_operand.hbm [shape: bf16[128,2048], index: 3, kind: output, shape index: {0}]
  %s4 = inlined_call_operand.vmem [shape: f32[128,1], index: 4, kind: output, shape index: {1}]
  %5 = xla_tuple %s3, %s4
  %s6 = sld [smem:[#allocation0]]
  $region81: #{tpu_custom_call.1} parent=0
    _
  %s8 = ssub.s32 1, %s6
  %s9 = scalar_select 0, %s8, %s6
  $region1: #{tpu_custom_call.1} parent=0
    #allocation3 [shape = 'u8[262144]{0}', space=vmem, size = 0x40000, scoped, tag = 'input window, operand 0, single buffered']
    #allocation4 [shape = 's32[2]{0}', space=sflag, size = 0x8, scoped, tag = 'scoped memory for tpu_custom_call.1']
    #allocation5 [shape = 's32[2]{0}', space=sflag, size = 0x8, scoped, tag = 'scoped memory for tpu_custom_call.1']
    #allocation6 [shape = 'u8[2097152]{0}', space=vmem, size = 0x200000, scoped, tag = 'input window, operand 1']
    #allocation7 [shape = 's32[2]{0}', space=sflag, size = 0x8, scoped, tag = 'scoped memory for tpu_custom_call.1']
    #allocation8 [shape = 'u8[4096]{0}', space=vmem, size = 0x1000, scoped, tag = 'input window, operand 2']
    #allocation9 [shape = 'u8[262144]{0}', space=vmem, size = 0x40000, scoped, tag = 'output window, operand 0']
    %10 = vsyncpa [#allocation4], 0
    %11 = vsyncpa [#allocation7], 0
    %s12 = scalar_lea.sflag [#allocation7], 1
    %13 = vsyncpa %s12, 0
    %14 = vsyncpa [#allocation5], 0
    %s15 = scalar_lea.sflag [#allocation5], 1
    %16 = vsyncpa %s15, 0
    loop: start=0, step=1, limit=6
    $region2: #{tpu_custom_call.1} parent=1 // loop_pre_header
      _
    $region3: #{tpu_custom_call.1} parent=1 // loop_header
      %s18 = sphi 0, %s22
      %p19 = scmp.ge.s32.totalorder %s18, 6
      %s25 = sphi 0, %s44
      %s26 = sphi 0, %s40
      %s27 = sphi 0, %s36
      %s28 = sphi 0, %s25
      %s29 = sphi 0, %s26
      %s30 = sphi 0, %s27
      %s31 = sphi 0, %s28
      %s32 = sphi 0, %s29
      %s33 = sphi 0, %s30
      %s49 = sphi 0, %s51
      %s52 = sphi 0, %s49
      %s53 = sphi 0, %s52
      %s69 = sphi 0, %s53
      %s77 = sphi 0, %s79
      %s80 = sphi 0, %s77
      %s81 = sphi 0, %s80
      %s97 = sphi 0, %s81
      %s103 = sphi 0, %s105
      %s106 = sphi 0, %s103
      %s107 = sphi 0, %s106
      %s123 = sphi 0, %s107
      %s131 = sphi 0, %s133
      %s134 = sphi 0, %s131
      %s135 = sphi 0, %s134
      %s151 = sphi 0, %s135
      %s157 = sphi 0, %s159
      %s160 = sphi 0, %s157
      %s161 = sphi 0, %s160
      %s177 = sphi 0, %s161
    $region4: #{tpu_custom_call.1} parent=1 // loop_header_branch
      %21 = sbr.rel (%p19) target = $region8
    $region5: #{tpu_custom_call.1} parent=1 // loop_body
      %s23 = ssub.s32 %s18, 1
      %s24 = ssub.s32 %s18, 2
      %s34 = sadd.s32 1, %s27
      %p35 = scmp.ge.s32.totalorder %s34, 1
      %s36 = scalar_select %p35, 0, %s34
      %s37 = sadd.s32 1, %s26
      %s38 = scalar_select %p35, %s37, %s26
      %p39 = scmp.ge.s32.totalorder %s38, 4
      %s40 = scalar_select %p39, 0, %s38
      %s41 = sadd.s32 1, %s25
      %s42 = scalar_select %p39, %s41, %s25
      %p43 = scmp.ge.s32.totalorder %s42, 1
      %s44 = scalar_select %p43, 0, %s42
      %s45 = ssub.s32 %s25, %s44
      %s46 = ssub.s32 %s27, %s36
      %s47 = sor.u32 %s45, %s46
      %p48 = scmp.eq.s32.totalorder %s47, 0
      %s50 = sadd.s32 %s49, 1
      %s51 = scalar_select %p48, %s49, %s50
      %p54 = pneg %p48
      %p55 = scmp.eq.s32.totalorder %s18, 3
      %p56 = por %p54, %p55
      %p57 = scmp.ne.s32.totalorder %s49, %s52
      %p58 = scmp.eq.s32.totalorder %s18, 0
      %p59 = por %p57, %p58
      %p60 = scmp.ne.s32.totalorder %s49, %s52
      %p61 = scmp.eq.s32.totalorder %s23, 3
      %p62 = por %p60, %p61
      %p63 = scmp.ne.s32.totalorder %s52, %s53
      %p64 = scmp.eq.s32.totalorder %s23, 0
      %p65 = por %p63, %p64
      %p66 = scmp.ne.s32.totalorder %s52, %s53
      %p67 = scmp.eq.s32.totalorder %s24, 3
      %p68 = por %p66, %p67
      %p70 = scmp.ne.s32.totalorder %s53, %s69
      %p71 = scmp.eq.s32.totalorder %s24, 0
      %p72 = por %p70, %p71
      %s73 = ssub.s32 %s27, %s36
      %s74 = ssub.s32 %s26, %s40
      %s75 = sor.u32 %s73, %s74
      %p76 = scmp.eq.s32.totalorder %s75, 0
      %s78 = sadd.s32 %s77, 1
      %s79 = scalar_select %p76, %s77, %s78
      %p82 = pneg %p76
      %p83 = scmp.eq.s32.totalorder %s18, 3
      %p84 = por %p82, %p83
      %p85 = scmp.ne.s32.totalorder %s77, %s80
      %p86 = scmp.eq.s32.totalorder %s18, 0
      %p87 = por %p85, %p86
      %p88 = scmp.ne.s32.totalorder %s77, %s80
      %p89 = scmp.eq.s32.totalorder %s23, 3
      %p90 = por %p88, %p89
      %p91 = scmp.ne.s32.totalorder %s80, %s81
      %p92 = scmp.eq.s32.totalorder %s23, 0
      %p93 = por %p91, %p92
      %p94 = scmp.ne.s32.totalorder %s80, %s81
      %p95 = scmp.eq.s32.totalorder %s24, 3
      %p96 = por %p94, %p95
      %p98 = scmp.ne.s32.totalorder %s81, %s97
      %p99 = scmp.eq.s32.totalorder %s24, 0
      %p100 = por %p98, %p99
      %s101 = ssub.s32 %s26, %s40
      %p102 = scmp.eq.s32.totalorder %s101, 0
      %s104 = sadd.s32 %s103, 1
      %s105 = scalar_select %p102, %s103, %s104
      %p108 = pneg %p102
      %p109 = scmp.eq.s32.totalorder %s18, 3
      %p110 = por %p108, %p109
      %p111 = scmp.ne.s32.totalorder %s103, %s106
      %p112 = scmp.eq.s32.totalorder %s18, 0
      %p113 = por %p111, %p112
      %p114 = scmp.ne.s32.totalorder %s103, %s106
      %p115 = scmp.eq.s32.totalorder %s23, 3
      %p116 = por %p114, %p115
      %p117 = scmp.ne.s32.totalorder %s106, %s107
      %p118 = scmp.eq.s32.totalorder %s23, 0
      %p119 = por %p117, %p118
      %p120 = scmp.ne.s32.totalorder %s106, %s107
      %p121 = scmp.eq.s32.totalorder %s24, 3
      %p122 = por %p120, %p121
      %p124 = scmp.ne.s32.totalorder %s107, %s123
      %p125 = scmp.eq.s32.totalorder %s24, 0
      %p126 = por %p124, %p125
      %s127 = ssub.s32 %s25, %s44
      %s128 = ssub.s32 %s26, %s40
      %s129 = sor.u32 %s127, %s128
      %p130 = scmp.eq.s32.totalorder %s129, 0
      %s132 = sadd.s32 %s131, 1
      %s133 = scalar_select %p130, %s131, %s132
      %p136 = pneg %p130
      %p137 = scmp.eq.s32.totalorder %s18, 3
      %p138 = por %p136, %p137
      %p139 = scmp.ne.s32.totalorder %s131, %s134
      %p140 = scmp.eq.s32.totalorder %s18, 0
      %p141 = por %p139, %p140
      %p142 = scmp.ne.s32.totalorder %s131, %s134
      %p143 = scmp.eq.s32.totalorder %s23, 3
      %p144 = por %p142, %p143
      %p145 = scmp.ne.s32.totalorder %s134, %s135
      %p146 = scmp.eq.s32.totalorder %s23, 0
      %p147 = por %p145, %p146
      %p148 = scmp.ne.s32.totalorder %s134, %s135
      %p149 = scmp.eq.s32.totalorder %s24, 3
      %p150 = por %p148, %p149
      %p152 = scmp.ne.s32.totalorder %s135, %s151
      %p153 = scmp.eq.s32.totalorder %s24, 0
      %p154 = por %p152, %p153
      %s155 = ssub.s32 %s25, %s44
      %p156 = scmp.eq.s32.totalorder %s155, 0
      %s158 = sadd.s32 %s157, 1
      %s159 = scalar_select %p156, %s157, %s158
      %p162 = pneg %p156
      %p163 = scmp.eq.s32.totalorder %s18, 3
      %p164 = por %p162, %p163
      %p165 = scmp.ne.s32.totalorder %s157, %s160
      %p166 = scmp.eq.s32.totalorder %s18, 0
      %p167 = por %p165, %p166
      %p168 = scmp.ne.s32.totalorder %s157, %s160
      %p169 = scmp.eq.s32.totalorder %s23, 3
      %p170 = por %p168, %p169
      %p171 = scmp.ne.s32.totalorder %s160, %s161
      %p172 = scmp.eq.s32.totalorder %s23, 0
      %p173 = por %p171, %p172
      %p174 = scmp.ne.s32.totalorder %s160, %s161
      %p175 = scmp.eq.s32.totalorder %s24, 3
      %p176 = por %p174, %p175
      %p178 = scmp.ne.s32.totalorder %s161, %s177
      %p179 = scmp.eq.s32.totalorder %s24, 0
      %p180 = por %p178, %p179
      %p181 = scmp.le.s32.totalorder 1, %s18
      %p182 = scmp.lt.s32.totalorder %s18, 5
      %p183 = pnand %p181, %p182
      %p184 = pneg %p183
      // Predicated region
      $region9: #{tpu_custom_call.1} parent=5 // pred_check
        _
      $region10: #{tpu_custom_call.1} parent=5 // pred_check_branch
        %186 = sbr.rel (%p183) target = $region12
      $region11: #{tpu_custom_call.1} parent=5 // pred_region
        %s187 = ssub.s32 %s18, 1
        // Predicated region
        $region13: #{tpu_custom_call.1} parent=11 // pred_check
          %p188 = pneg %p65
        $region14: #{tpu_custom_call.1} parent=11 // pred_check_branch
          %190 = sbr.rel (%p188) target = $region16
        $region15: #{tpu_custom_call.1} parent=11 // pred_region
          %s191 = smul.u32 16, %s28
          %s192 = smul.u32 8, %s30
          %194 = vsyncadd [#allocation4], 0
          %s195 = smul.addr %s191, 8
          %s196 = sadd.s32 %s192, %s195
          %s197 = smul.addr %s196, 4
          %s198 = scalar_lea.hbm %s0, %s197
          %s199 = sshll.u32 %s198, 4
          %s200 = int_to_ptr.hbm [resolvable:$true] %s199
          %s201 = sshll.u32 [#allocation3], 4
          %s202 = int_to_ptr.vmem [resolvable:$true] %s201
          %207 = dma.hbm_to_vmem [thread:$0]  %s200, 8192, %s202, [#allocation4], 512, 512, 32
        $region16: #{tpu_custom_call.1} parent=11 // pred_fallthru
          _
      $region12: #{tpu_custom_call.1} parent=5 // pred_fallthru
        _
      %p208 = scmp.lt.s32.totalorder %s18, 4
      // Predicated region
      $region17: #{tpu_custom_call.1} parent=5 // pred_check
        %p209 = pneg %p208
      $region18: #{tpu_custom_call.1} parent=5 // pred_check_branch
        %211 = sbr.rel (%p209) target = $region20
      $region19: #{tpu_custom_call.1} parent=5 // pred_region
        // Predicated region
        $region21: #{tpu_custom_call.1} parent=19 // pred_check
          %p212 = pneg %p87
        $region22: #{tpu_custom_call.1} parent=19 // pred_check_branch
          %214 = sbr.rel (%p212) target = $region24
        $region23: #{tpu_custom_call.1} parent=19 // pred_region
          %s215 = sand.u32 %s18, 1
          %s216 = scalar_lea.sflag [#allocation7], %s215
          %s217 = sand.u32 %s77, 1
          %s218 = smul.addr %s217, 2048
          %s219 = scalar_lea.vmem [#allocation6], %s218
          %s220 = smul.u32 128, %s27
          %s221 = smul.u32 4, %s26
          %223 = vsyncadd %s216, 0
          %s224 = smul.addr %s220, 16
          %s225 = sadd.s32 %s221, %s224
          %s226 = smul.addr %s225, 4
          %s227 = scalar_lea.hbm %s1, %s226
          %s228 = sshll.u32 %s227, 4
          %s229 = int_to_ptr.hbm [resolvable:$true] %s228
          %s230 = sshll.u32 %s219, 4
          %s231 = int_to_ptr.vmem [resolvable:$true] %s230
          %236 = dma.hbm_to_vmem [thread:$0]  %s229, 32768, %s231, %s216, 1024, 256, 16
        $region24: #{tpu_custom_call.1} parent=19 // pred_fallthru
          _
        // Predicated region
        $region25: #{tpu_custom_call.1} parent=19 // pred_check
          %p237 = pneg %p113
        $region26: #{tpu_custom_call.1} parent=19 // pred_check_branch
          %239 = sbr.rel (%p237) target = $region28
        $region27: #{tpu_custom_call.1} parent=19 // pred_region
          %s240 = sand.u32 %s18, 1
          %s241 = scalar_lea.sflag [#allocation7], %s240
          %s242 = sand.u32 %s103, 1
          %s243 = smul.addr %s242, 4
          %s244 = scalar_lea.vmem [#allocation8], %s243
          %s245 = smul.u32 4, %s26
          %247 = vsyncadd %s241, 0
          %s248 = scalar_lea.hbm %s2, %s245
          %s250 = sshll.u32 %s248, 4
          %s251 = int_to_ptr.hbm [resolvable:$true] %s250
          %s252 = sshll.u32 %s244, 4
          %s253 = int_to_ptr.vmem [resolvable:$true] %s252
          %255 = dma.hbm_to_vmem [thread:$0]  %s251, 64, %s253, %s241
        $region28: #{tpu_custom_call.1} parent=19 // pred_fallthru
          _
      $region20: #{tpu_custom_call.1} parent=5 // pred_fallthru
        _
      %p256 = scmp.le.s32.totalorder 1, %s18
      %p257 = scmp.lt.s32.totalorder %s18, 5
      %p258 = pnand %p256, %p257
      %p259 = pneg %p258
      // Predicated region
      $region29: #{tpu_custom_call.1} parent=5 // pred_check
        _
      $region30: #{tpu_custom_call.1} parent=5 // pred_check_branch
        %261 = sbr.rel (%p258) target = $region32
      $region31: #{tpu_custom_call.1} parent=5 // pred_region
        %s262 = ssub.s32 %s18, 1
        // Predicated region
        $region33: #{tpu_custom_call.1} parent=31 // pred_check
          %p263 = pneg %p65
        $region34: #{tpu_custom_call.1} parent=31 // pred_check_branch
          %265 = sbr.rel (%p263) target = $region36
        $region35: #{tpu_custom_call.1} parent=31 // pred_region
          %267 = dma.done [#allocation4], 8192
        $region36: #{tpu_custom_call.1} parent=31 // pred_fallthru
          _
        %s268 = sand.u32 %s23, 1
        %s269 = scalar_lea.sflag [#allocation7], %s268
        %s270 = sand.u32 %s80, 1
        %s271 = smul.addr %s270, 2048
        %s272 = scalar_lea.vmem [#allocation6], %s271
        // Predicated region
        $region37: #{tpu_custom_call.1} parent=31 // pred_check
          %p273 = pneg %p93
        $region38: #{tpu_custom_call.1} parent=31 // pred_check_branch
          %275 = sbr.rel (%p273) target = $region40
        $region39: #{tpu_custom_call.1} parent=31 // pred_region
          %277 = dma.done %s269, 32768
        $region40: #{tpu_custom_call.1} parent=31 // pred_fallthru
          _
        %s278 = sand.u32 %s23, 1
        %s279 = scalar_lea.sflag [#allocation7], %s278
        %s280 = sand.u32 %s106, 1
        %s281 = smul.addr %s280, 4
        %s282 = scalar_lea.vmem [#allocation8], %s281
        // Predicated region
        $region41: #{tpu_custom_call.1} parent=31 // pred_check
          %p283 = pneg %p119
        $region42: #{tpu_custom_call.1} parent=31 // pred_check_branch
          %285 = sbr.rel (%p283) target = $region44
        $region43: #{tpu_custom_call.1} parent=31 // pred_region
          %287 = dma.done %s279, 64
        $region44: #{tpu_custom_call.1} parent=31 // pred_fallthru
          _
        %p288 = pneg %p65
        %p289 = pneg %p62
        %s290 = sand.u32 %s23, 1
        %s291 = scalar_lea.sflag [#allocation7], %s290
        %s292 = sand.u32 %s80, 1
        %s293 = smul.addr %s292, 2048
        %s294 = scalar_lea.vmem [#allocation6], %s293
        %p295 = pneg %p93
        %p296 = pneg %p90
        %s297 = sand.u32 %s23, 1
        %s298 = scalar_lea.sflag [#allocation7], %s297
        %s299 = sand.u32 %s106, 1
        %s300 = smul.addr %s299, 4
        %s301 = scalar_lea.vmem [#allocation8], %s300
        %p302 = pneg %p119
        %p303 = pneg %p116
        %p304 = pneg %p147
        %p305 = pneg %p144
        %s306 = sand.u32 %s134, 1
        %s307 = scalar_lea.sflag [#allocation5], %s306
        %s308 = sand.u32 %s134, 1
        %s309 = smul.addr %s308, 256
        %s310 = scalar_lea.vmem [#allocation9], %s309
        %p311 = pneg %p173
        %p312 = pneg %p170
        %s313 = smul.u32 16, %s28
        %p314 = scmp.lt.s32.totalorder %s313, 15
        %s315 = scalar_select %p314, %s313, 15
        %s316 = smul.addr %s315, 8
        %s317 = scalar_lea.vmem %s4, %s316
        %s318 = smul.u32 16, %s28
        %s319 = smul.u32 8, %s30
        %s320 = smul.u32 128, %s30
        %s321 = smul.u32 4, %s29
        %s322 = smul.u32 4, %s29
        %s323 = smul.u32 16, %s28
        %s324 = smul.u32 4, %s29
        %s325 = smul.u32 16, %s28
        %p326 = scmp.lt.s32.totalorder %s325, 15
        %s327 = scalar_select %p326, %s325, 15
        %s328 = smul.addr %s327, 8
        %s329 = scalar_lea.vmem %s4, %s328
        %s330 = smul.u32 16, %s28
        %p331 = scmp.eq.s32.totalorder %s30, 0
        // Predicated region
        $region45: #{tpu_custom_call.1} parent=31 // pred_check
          %p332 = pneg %p331
        $region46: #{tpu_custom_call.1} parent=31 // pred_check_branch
          %334 = sbr.rel (%p332) target = $region48
        $region47: #{tpu_custom_call.1} parent=31 // pred_region
          %335 = vst [vmem:[#allocation2] sm:$0xff] 0.0
          %336 = vst [vmem:[#allocation2 + $0x8] sm:$0xff] 0.0
          %337 = vst [vmem:[#allocation2 + $0x10] sm:$0xff] 0.0
          %338 = vst [vmem:[#allocation2 + $0x18] sm:$0xff] 0.0
          %339 = vst [vmem:[#allocation2 + $0x20] sm:$0xff] 0.0
          %340 = vst [vmem:[#allocation2 + $0x28] sm:$0xff] 0.0
          %341 = vst [vmem:[#allocation2 + $0x30] sm:$0xff] 0.0
          %342 = vst [vmem:[#allocation2 + $0x38] sm:$0xff] 0.0
          %343 = vst [vmem:[#allocation2 + $0x40] sm:$0xff] 0.0
          %344 = vst [vmem:[#allocation2 + $0x48] sm:$0xff] 0.0
          %345 = vst [vmem:[#allocation2 + $0x50] sm:$0xff] 0.0
          %346 = vst [vmem:[#allocation2 + $0x58] sm:$0xff] 0.0
          %347 = vst [vmem:[#allocation2 + $0x60] sm:$0xff] 0.0
          %348 = vst [vmem:[#allocation2 + $0x68] sm:$0xff] 0.0
          %349 = vst [vmem:[#allocation2 + $0x70] sm:$0xff] 0.0
          %350 = vst [vmem:[#allocation2 + $0x78] sm:$0xff] 0.0
          %351 = vst [vmem:[#allocation2 + $0x80] sm:$0xff] 0.0
          %352 = vst [vmem:[#allocation2 + $0x88] sm:$0xff] 0.0
          %353 = vst [vmem:[#allocation2 + $0x90] sm:$0xff] 0.0
          %354 = vst [vmem:[#allocation2 + $0x98] sm:$0xff] 0.0
          %355 = vst [vmem:[#allocation2 + $0xa0] sm:$0xff] 0.0
          %356 = vst [vmem:[#allocation2 + $0xa8] sm:$0xff] 0.0
          %357 = vst [vmem:[#allocation2 + $0xb0] sm:$0xff] 0.0
          %358 = vst [vmem:[#allocation2 + $0xb8] sm:$0xff] 0.0
          %359 = vst [vmem:[#allocation2 + $0xc0] sm:$0xff] 0.0
          %360 = vst [vmem:[#allocation2 + $0xc8] sm:$0xff] 0.0
          %361 = vst [vmem:[#allocation2 + $0xd0] sm:$0xff] 0.0
          %362 = vst [vmem:[#allocation2 + $0xd8] sm:$0xff] 0.0
          %363 = vst [vmem:[#allocation2 + $0xe0] sm:$0xff] 0.0
          %364 = vst [vmem:[#allocation2 + $0xe8] sm:$0xff] 0.0
          %365 = vst [vmem:[#allocation2 + $0xf0] sm:$0xff] 0.0
          %366 = vst [vmem:[#allocation2 + $0xf8] sm:$0xff] 0.0
          %367 = vst [vmem:[#allocation2 + $0x100] sm:$0xff] 0.0
          %368 = vst [vmem:[#allocation2 + $0x108] sm:$0xff] 0.0
          %369 = vst [vmem:[#allocation2 + $0x110] sm:$0xff] 0.0
          %370 = vst [vmem:[#allocation2 + $0x118] sm:$0xff] 0.0
          %371 = vst [vmem:[#allocation2 + $0x120] sm:$0xff] 0.0
          %372 = vst [vmem:[#allocation2 + $0x128] sm:$0xff] 0.0
          %373 = vst [vmem:[#allocation2 + $0x130] sm:$0xff] 0.0
          %374 = vst [vmem:[#allocation2 + $0x138] sm:$0xff] 0.0
          %375 = vst [vmem:[#allocation2 + $0x140] sm:$0xff] 0.0
          %376 = vst [vmem:[#allocation2 + $0x148] sm:$0xff] 0.0
          %377 = vst [vmem:[#allocation2 + $0x150] sm:$0xff] 0.0
          %378 = vst [vmem:[#allocation2 + $0x158] sm:$0xff] 0.0
          %379 = vst [vmem:[#allocation2 + $0x160] sm:$0xff] 0.0
          %380 = vst [vmem:[#allocation2 + $0x168] sm:$0xff] 0.0
          %381 = vst [vmem:[#allocation2 + $0x170] sm:$0xff] 0.0
          %382 = vst [vmem:[#allocation2 + $0x178] sm:$0xff] 0.0
          %383 = vst [vmem:[#allocation2 + $0x180] sm:$0xff] 0.0
          %384 = vst [vmem:[#allocation2 + $0x188] sm:$0xff] 0.0
          %385 = vst [vmem:[#allocation2 + $0x190] sm:$0xff] 0.0
          %386 = vst [vmem:[#allocation2 + $0x198] sm:$0xff] 0.0
          %387 = vst [vmem:[#allocation2 + $0x1a0] sm:$0xff] 0.0
          %388 = vst [vmem:[#allocation2 + $0x1a8] sm:$0xff] 0.0
          %389 = vst [vmem:[#allocation2 + $0x1b0] sm:$0xff] 0.0
          %390 = vst [vmem:[#allocation2 + $0x1b8] sm:$0xff] 0.0
          %391 = vst [vmem:[#allocation2 + $0x1c0] sm:$0xff] 0.0
          %392 = vst [vmem:[#allocation2 + $0x1c8] sm:$0xff] 0.0
          %393 = vst [vmem:[#allocation2 + $0x1d0] sm:$0xff] 0.0
          %394 = vst [vmem:[#allocation2 + $0x1d8] sm:$0xff] 0.0
          %395 = vst [vmem:[#allocation2 + $0x1e0] sm:$0xff] 0.0
          %396 = vst [vmem:[#allocation2 + $0x1e8] sm:$0xff] 0.0
          %397 = vst [vmem:[#allocation2 + $0x1f0] sm:$0xff] 0.0
          %398 = vst [vmem:[#allocation2 + $0x1f8] sm:$0xff] 0.0
        $region48: #{tpu_custom_call.1} parent=31 // pred_fallthru
          _
        %v399 = vld [vmem:[#allocation2] sm:$0xff]
        %v400 = vld [vmem:[#allocation2 + $0x8] sm:$0xff]
        %v401 = vld [vmem:[#allocation2 + $0x10] sm:$0xff]
        %v402 = vld [vmem:[#allocation2 + $0x18] sm:$0xff]
        %v403 = vld [vmem:[#allocation2 + $0x20] sm:$0xff]
        %v404 = vld [vmem:[#allocation2 + $0x28] sm:$0xff]
        %v405 = vld [vmem:[#allocation2 + $0x30] sm:$0xff]
        %v406 = vld [vmem:[#allocation2 + $0x38] sm:$0xff]
        %v407 = vld [vmem:[#allocation2 + $0x40] sm:$0xff]
        %v408 = vld [vmem:[#allocation2 + $0x48] sm:$0xff]
        %v409 = vld [vmem:[#allocation2 + $0x50] sm:$0xff]
        %v410 = vld [vmem:[#allocation2 + $0x58] sm:$0xff]
        %v411 = vld [vmem:[#allocation2 + $0x60] sm:$0xff]
        %v412 = vld [vmem:[#allocation2 + $0x68] sm:$0xff]
        %v413 = vld [vmem:[#allocation2 + $0x70] sm:$0xff]
        %v414 = vld [vmem:[#allocation2 + $0x78] sm:$0xff]
        %v415 = vld [vmem:[#allocation2 + $0x80] sm:$0xff]
        %v416 = vld [vmem:[#allocation2 + $0x88] sm:$0xff]
        %v417 = vld [vmem:[#allocation2 + $0x90] sm:$0xff]
        %v418 = vld [vmem:[#allocation2 + $0x98] sm:$0xff]
        %v419 = vld [vmem:[#allocation2 + $0xa0] sm:$0xff]
        %v420 = vld [vmem:[#allocation2 + $0xa8] sm:$0xff]
        %v421 = vld [vmem:[#allocation2 + $0xb0] sm:$0xff]
        %v422 = vld [vmem:[#allocation2 + $0xb8] sm:$0xff]
        %v423 = vld [vmem:[#allocation2 + $0xc0] sm:$0xff]
        %v424 = vld [vmem:[#allocation2 + $0xc8] sm:$0xff]
        %v425 = vld [vmem:[#allocation2 + $0xd0] sm:$0xff]
        %v426 = vld [vmem:[#allocation2 + $0xd8] sm:$0xff]
        %v427 = vld [vmem:[#allocation2 + $0xe0] sm:$0xff]
        %v428 = vld [vmem:[#allocation2 + $0xe8] sm:$0xff]
        %v429 = vld [vmem:[#allocation2 + $0xf0] sm:$0xff]
        %v430 = vld [vmem:[#allocation2 + $0xf8] sm:$0xff]
        %v431 = vld [vmem:[#allocation2 + $0x100] sm:$0xff]
        %v432 = vld [vmem:[#allocation2 + $0x108] sm:$0xff]
        %v433 = vld [vmem:[#allocation2 + $0x110] sm:$0xff]
        %v434 = vld [vmem:[#allocation2 + $0x118] sm:$0xff]
        %v435 = vld [vmem:[#allocation2 + $0x120] sm:$0xff]
        %v436 = vld [vmem:[#allocation2 + $0x128] sm:$0xff]
        %v437 = vld [vmem:[#allocation2 + $0x130] sm:$0xff]
        %v438 = vld [vmem:[#allocation2 + $0x138] sm:$0xff]
        %v439 = vld [vmem:[#allocation2 + $0x140] sm:$0xff]
        %v440 = vld [vmem:[#allocation2 + $0x148] sm:$0xff]
        %v441 = vld [vmem:[#allocation2 + $0x150] sm:$0xff]
        %v442 = vld [vmem:[#allocation2 + $0x158] sm:$0xff]
        %v443 = vld [vmem:[#allocation2 + $0x160] sm:$0xff]
        %v444 = vld [vmem:[#allocation2 + $0x168] sm:$0xff]
        %v445 = vld [vmem:[#allocation2 + $0x170] sm:$0xff]
        %v446 = vld [vmem:[#allocation2 + $0x178] sm:$0xff]
        %v447 = vld [vmem:[#allocation2 + $0x180] sm:$0xff]
        %v448 = vld [vmem:[#allocation2 + $0x188] sm:$0xff]
        %v449 = vld [vmem:[#allocation2 + $0x190] sm:$0xff]
        %v450 = vld [vmem:[#allocation2 + $0x198] sm:$0xff]
        %v451 = vld [vmem:[#allocation2 + $0x1a0] sm:$0xff]
        %v452 = vld [vmem:[#allocation2 + $0x1a8] sm:$0xff]
        %v453 = vld [vmem:[#allocation2 + $0x1b0] sm:$0xff]
        %v454 = vld [vmem:[#allocation2 + $0x1b8] sm:$0xff]
        %v455 = vld [vmem:[#allocation2 + $0x1c0] sm:$0xff]
        %v456 = vld [vmem:[#allocation2 + $0x1c8] sm:$0xff]
        %v457 = vld [vmem:[#allocation2 + $0x1d0] sm:$0xff]
        %v458 = vld [vmem:[#allocation2 + $0x1d8] sm:$0xff]
        %v459 = vld [vmem:[#allocation2 + $0x1e0] sm:$0xff]
        %v460 = vld [vmem:[#allocation2 + $0x1e8] sm:$0xff]
        %v461 = vld [vmem:[#allocation2 + $0x1f0] sm:$0xff]
        %v462 = vld [vmem:[#allocation2 + $0x1f8] sm:$0xff]
        %v463 = vld [vmem:[#allocation3] sm:$0xff]
        %v464 = vld [vmem:[#allocation3 + $0x8] sm:$0xff]
        %v465 = vld [vmem:[#allocation3 + $0x10] sm:$0xff]
        %v466 = vld [vmem:[#allocation3 + $0x18] sm:$0xff]
        %v467 = vld [vmem:[#allocation3 + $0x20] sm:$0xff]
        %v468 = vld [vmem:[#allocation3 + $0x28] sm:$0xff]
        %v469 = vld [vmem:[#allocation3 + $0x30] sm:$0xff]
        %v470 = vld [vmem:[#allocation3 + $0x38] sm:$0xff]
        %v471 = vld [vmem:[#allocation3 + $0x40] sm:$0xff]
        %v472 = vld [vmem:[#allocation3 + $0x48] sm:$0xff]
        %v473 = vld [vmem:[#allocation3 + $0x50] sm:$0xff]
        %v474 = vld [vmem:[#allocation3 + $0x58] sm:$0xff]
        %v475 = vld [vmem:[#allocation3 + $0x60] sm:$0xff]
        %v476 = vld [vmem:[#allocation3 + $0x68] sm:$0xff]
        %v477 = vld [vmem:[#allocation3 + $0x70] sm:$0xff]
        %v478 = vld [vmem:[#allocation3 + $0x78] sm:$0xff]
        %v479 = vld [vmem:[#allocation3 + $0x80] sm:$0xff]
        %v480 = vld [vmem:[#allocation3 + $0x88] sm:$0xff]
        %v481 = vld [vmem:[#allocation3 + $0x90] sm:$0xff]
        %v482 = vld [vmem:[#allocation3 + $0x98] sm:$0xff]
        %v483 = vld [vmem:[#allocation3 + $0xa0] sm:$0xff]
        %v484 = vld [vmem:[#allocation3 + $0xa8] sm:$0xff]
        %v485 = vld [vmem:[#allocation3 + $0xb0] sm:$0xff]
        %v486 = vld [vmem:[#allocation3 + $0xb8] sm:$0xff]
        %v487 = vld [vmem:[#allocation3 + $0xc0] sm:$0xff]
        %v488 = vld [vmem:[#allocation3 + $0xc8] sm:$0xff]
        %v489 = vld [vmem:[#allocation3 + $0xd0] sm:$0xff]
        %v490 = vld [vmem:[#allocation3 + $0xd8] sm:$0xff]
        %v491 = vld [vmem:[#allocation3 + $0xe0] sm:$0xff]
        %v492 = vld [vmem:[#allocation3 + $0xe8] sm:$0xff]
        %v493 = vld [vmem:[#allocation3 + $0xf0] sm:$0xff]
        %v494 = vld [vmem:[#allocation3 + $0xf8] sm:$0xff]
        %v495 = vld [vmem:[#allocation3 + $0x100] sm:$0xff]
        %v496 = vld [vmem:[#allocation3 + $0x108] sm:$0xff]
        %v497 = vld [vmem:[#allocation3 + $0x110] sm:$0xff]
        %v498 = vld [vmem:[#allocation3 + $0x118] sm:$0xff]
        %v499 = vld [vmem:[#allocation3 + $0x120] sm:$0xff]
        %v500 = vld [vmem:[#allocation3 + $0x128] sm:$0xff]
        %v501 = vld [vmem:[#allocation3 + $0x130] sm:$0xff]
        %v502 = vld [vmem:[#allocation3 + $0x138] sm:$0xff]
        %v503 = vld [vmem:[#allocation3 + $0x140] sm:$0xff]
        %v504 = vld [vmem:[#allocation3 + $0x148] sm:$0xff]
        %v505 = vld [vmem:[#allocation3 + $0x150] sm:$0xff]
        %v506 = vld [vmem:[#allocation3 + $0x158] sm:$0xff]
        %v507 = vld [vmem:[#allocation3 + $0x160] sm:$0xff]
        %v508 = vld [vmem:[#allocation3 + $0x168] sm:$0xff]
        %v509 = vld [vmem:[#allocation3 + $0x170] sm:$0xff]
        %v510 = vld [vmem:[#allocation3 + $0x178] sm:$0xff]
        %v511 = vld [vmem:[#allocation3 + $0x180] sm:$0xff]
        %v512 = vld [vmem:[#allocation3 + $0x188] sm:$0xff]
        %v513 = vld [vmem:[#allocation3 + $0x190] sm:$0xff]
        %v514 = vld [vmem:[#allocation3 + $0x198] sm:$0xff]
        %v515 = vld [vmem:[#allocation3 + $0x1a0] sm:$0xff]
        %v516 = vld [vmem:[#allocation3 + $0x1a8] sm:$0xff]
        %v517 = vld [vmem:[#allocation3 + $0x1b0] sm:$0xff]
        %v518 = vld [vmem:[#allocation3 + $0x1b8] sm:$0xff]
        %v519 = vld [vmem:[#allocation3 + $0x1c0] sm:$0xff]
        %v520 = vld [vmem:[#allocation3 + $0x1c8] sm:$0xff]
        %v521 = vld [vmem:[#allocation3 + $0x1d0] sm:$0xff]
        %v522 = vld [vmem:[#allocation3 + $0x1d8] sm:$0xff]
        %v523 = vld [vmem:[#allocation3 + $0x1e0] sm:$0xff]
        %v524 = vld [vmem:[#allocation3 + $0x1e8] sm:$0xff]
        %v525 = vld [vmem:[#allocation3 + $0x1f0] sm:$0xff]
        %v526 = vld [vmem:[#allocation3 + $0x1f8] sm:$0xff]
        %v527 = vld [vmem:[%s272] sm:$0xff]
        %v528 = vld [vmem:[%s272 + $0x8] sm:$0xff]
        %v529 = vld [vmem:[%s272 + $0x10] sm:$0xff]
        %v530 = vld [vmem:[%s272 + $0x18] sm:$0xff]
        %v531 = vld [vmem:[%s272 + $0x20] sm:$0xff]
        %v532 = vld [vmem:[%s272 + $0x28] sm:$0xff]
        %v533 = vld [vmem:[%s272 + $0x30] sm:$0xff]
        %v534 = vld [vmem:[%s272 + $0x38] sm:$0xff]
        %v535 = vld [vmem:[%s272 + $0x40] sm:$0xff]
        %v536 = vld [vmem:[%s272 + $0x48] sm:$0xff]
        %v537 = vld [vmem:[%s272 + $0x50] sm:$0xff]
        %v538 = vld [vmem:[%s272 + $0x58] sm:$0xff]
        %v539 = vld [vmem:[%s272 + $0x60] sm:$0xff]
        %v540 = vld [vmem:[%s272 + $0x68] sm:$0xff]
        %v541 = vld [vmem:[%s272 + $0x70] sm:$0xff]
        %v542 = vld [vmem:[%s272 + $0x78] sm:$0xff]
        %v543 = vld [vmem:[%s272 + $0x80] sm:$0xff]
        %v544 = vld [vmem:[%s272 + $0x88] sm:$0xff]
        %v545 = vld [vmem:[%s272 + $0x90] sm:$0xff]
        %v546 = vld [vmem:[%s272 + $0x98] sm:$0xff]
        %v547 = vld [vmem:[%s272 + $0xa0] sm:$0xff]
        %v548 = vld [vmem:[%s272 + $0xa8] sm:$0xff]
        %v549 = vld [vmem:[%s272 + $0xb0] sm:$0xff]
        %v550 = vld [vmem:[%s272 + $0xb8] sm:$0xff]
        %v551 = vld [vmem:[%s272 + $0xc0] sm:$0xff]
        %v552 = vld [vmem:[%s272 + $0xc8] sm:$0xff]
        %v553 = vld [vmem:[%s272 + $0xd0] sm:$0xff]
        %v554 = vld [vmem:[%s272 + $0xd8] sm:$0xff]
        %v555 = vld [vmem:[%s272 + $0xe0] sm:$0xff]
        %v556 = vld [vmem:[%s272 + $0xe8] sm:$0xff]
        %v557 = vld [vmem:[%s272 + $0xf0] sm:$0xff]
        %v558 = vld [vmem:[%s272 + $0xf8] sm:$0xff]
        %v559 = vld [vmem:[%s272 + $0x100] sm:$0xff]
        %v560 = vld [vmem:[%s272 + $0x108] sm:$0xff]
        %v561 = vld [vmem:[%s272 + $0x110] sm:$0xff]
        %v562 = vld [vmem:[%s272 + $0x118] sm:$0xff]
        %v563 = vld [vmem:[%s272 + $0x120] sm:$0xff]
        %v564 = vld [vmem:[%s272 + $0x128] sm:$0xff]
        %v565 = vld [vmem:[%s272 + $0x130] sm:$0xff]
        %v566 = vld [vmem:[%s272 + $0x138] sm:$0xff]
        %v567 = vld [vmem:[%s272 + $0x140] sm:$0xff]
        %v568 = vld [vmem:[%s272 + $0x148] sm:$0xff]
        %v569 = vld [vmem:[%s272 + $0x150] sm:$0xff]
        %v570 = vld [vmem:[%s272 + $0x158] sm:$0xff]
        %v571 = vld [vmem:[%s272 + $0x160] sm:$0xff]
        %v572 = vld [vmem:[%s272 + $0x168] sm:$0xff]
        %v573 = vld [vmem:[%s272 + $0x170] sm:$0xff]
        %v574 = vld [vmem:[%s272 + $0x178] sm:$0xff]
        %v575 = vld [vmem:[%s272 + $0x180] sm:$0xff]
        %v576 = vld [vmem:[%s272 + $0x188] sm:$0xff]
        %v577 = vld [vmem:[%s272 + $0x190] sm:$0xff]
        %v578 = vld [vmem:[%s272 + $0x198] sm:$0xff]
        %v579 = vld [vmem:[%s272 + $0x1a0] sm:$0xff]
        %v580 = vld [vmem:[%s272 + $0x1a8] sm:$0xff]
        %v581 = vld [vmem:[%s272 + $0x1b0] sm:$0xff]
        %v582 = vld [vmem:[%s272 + $0x1b8] sm:$0xff]
        %v583 = vld [vmem:[%s272 + $0x1c0] sm:$0xff]
        %v584 = vld [vmem:[%s272 + $0x1c8] sm:$0xff]
        %v585 = vld [vmem:[%s272 + $0x1d0] sm:$0xff]
        %v586 = vld [vmem:[%s272 + $0x1d8] sm:$0xff]
        %v587 = vld [vmem:[%s272 + $0x1e0] sm:$0xff]
        %v588 = vld [vmem:[%s272 + $0x1e8] sm:$0xff]
        %v589 = vld [vmem:[%s272 + $0x1f0] sm:$0xff]
        %v590 = vld [vmem:[%s272 + $0x1f8] sm:$0xff]
        %v591 = vld [vmem:[%s272 + $0x200] sm:$0xff]
        %v592 = vld [vmem:[%s272 + $0x208] sm:$0xff]
        %v593 = vld [vmem:[%s272 + $0x210] sm:$0xff]
        %v594 = vld [vmem:[%s272 + $0x218] sm:$0xff]
        %v595 = vld [vmem:[%s272 + $0x220] sm:$0xff]
        %v596 = vld [vmem:[%s272 + $0x228] sm:$0xff]
        %v597 = vld [vmem:[%s272 + $0x230] sm:$0xff]
        %v598 = vld [vmem:[%s272 + $0x238] sm:$0xff]
        %v599 = vld [vmem:[%s272 + $0x240] sm:$0xff]
        %v600 = vld [vmem:[%s272 + $0x248] sm:$0xff]
        %v601 = vld [vmem:[%s272 + $0x250] sm:$0xff]
        %v602 = vld [vmem:[%s272 + $0x258] sm:$0xff]
        %v603 = vld [vmem:[%s272 + $0x260] sm:$0xff]
        %v604 = vld [vmem:[%s272 + $0x268] sm:$0xff]
        %v605 = vld [vmem:[%s272 + $0x270] sm:$0xff]
        %v606 = vld [vmem:[%s272 + $0x278] sm:$0xff]
        %v607 = vld [vmem:[%s272 + $0x280] sm:$0xff]
        %v608 = vld [vmem:[%s272 + $0x288] sm:$0xff]
        %v609 = vld [vmem:[%s272 + $0x290] sm:$0xff]
        %v610 = vld [vmem:[%s272 + $0x298] sm:$0xff]
        %v611 = vld [vmem:[%s272 + $0x2a0] sm:$0xff]
        %v612 = vld [vmem:[%s272 + $0x2a8] sm:$0xff]
        %v613 = vld [vmem:[%s272 + $0x2b0] sm:$0xff]
        %v614 = vld [vmem:[%s272 + $0x2b8] sm:$0xff]
        %v615 = vld [vmem:[%s272 + $0x2c0] sm:$0xff]
        %v616 = vld [vmem:[%s272 + $0x2c8] sm:$0xff]
        %v617 = vld [vmem:[%s272 + $0x2d0] sm:$0xff]
        %v618 = vld [vmem:[%s272 + $0x2d8] sm:$0xff]
        %v619 = vld [vmem:[%s272 + $0x2e0] sm:$0xff]
        %v620 = vld [vmem:[%s272 + $0x2e8] sm:$0xff]
        %v621 = vld [vmem:[%s272 + $0x2f0] sm:$0xff]
        %v622 = vld [vmem:[%s272 + $0x2f8] sm:$0xff]
        %v623 = vld [vmem:[%s272 + $0x300] sm:$0xff]
        %v624 = vld [vmem:[%s272 + $0x308] sm:$0xff]
        %v625 = vld [vmem:[%s272 + $0x310] sm:$0xff]
        %v626 = vld [vmem:[%s272 + $0x318] sm:$0xff]
        %v627 = vld [vmem:[%s272 + $0x320] sm:$0xff]
        %v628 = vld [vmem:[%s272 + $0x328] sm:$0xff]
        %v629 = vld [vmem:[%s272 + $0x330] sm:$0xff]
        %v630 = vld [vmem:[%s272 + $0x338] sm:$0xff]
        %v631 = vld [vmem:[%s272 + $0x340] sm:$0xff]
        %v632 = vld [vmem:[%s272 + $0x348] sm:$0xff]
        %v633 = vld [vmem:[%s272 + $0x350] sm:$0xff]
        %v634 = vld [vmem:[%s272 + $0x358] sm:$0xff]
        %v635 = vld [vmem:[%s272 + $0x360] sm:$0xff]
        %v636 = vld [vmem:[%s272 + $0x368] sm:$0xff]
        %v637 = vld [vmem:[%s272 + $0x370] sm:$0xff]
        %v638 = vld [vmem:[%s272 + $0x378] sm:$0xff]
        %v639 = vld [vmem:[%s272 + $0x380] sm:$0xff]
        %v640 = vld [vmem:[%s272 + $0x388] sm:$0xff]
        %v641 = vld [vmem:[%s272 + $0x390] sm:$0xff]
        %v642 = vld [vmem:[%s272 + $0x398] sm:$0xff]
        %v643 = vld [vmem:[%s272 + $0x3a0] sm:$0xff]
        %v644 = vld [vmem:[%s272 + $0x3a8] sm:$0xff]
        %v645 = vld [vmem:[%s272 + $0x3b0] sm:$0xff]
        %v646 = vld [vmem:[%s272 + $0x3b8] sm:$0xff]
        %v647 = vld [vmem:[%s272 + $0x3c0] sm:$0xff]
        %v648 = vld [vmem:[%s272 + $0x3c8] sm:$0xff]
        %v649 = vld [vmem:[%s272 + $0x3d0] sm:$0xff]
        %v650 = vld [vmem:[%s272 + $0x3d8] sm:$0xff]
        %v651 = vld [vmem:[%s272 + $0x3e0] sm:$0xff]
        %v652 = vld [vmem:[%s272 + $0x3e8] sm:$0xff]
        %v653 = vld [vmem:[%s272 + $0x3f0] sm:$0xff]
        %v654 = vld [vmem:[%s272 + $0x3f8] sm:$0xff]
        %v655 = vld [vmem:[%s272 + $0x400] sm:$0xff]
        %v656 = vld [vmem:[%s272 + $0x408] sm:$0xff]
        %v657 = vld [vmem:[%s272 + $0x410] sm:$0xff]
        %v658 = vld [vmem:[%s272 + $0x418] sm:$0xff]
        %v659 = vld [vmem:[%s272 + $0x420] sm:$0xff]
        %v660 = vld [vmem:[%s272 + $0x428] sm:$0xff]
        %v661 = vld [vmem:[%s272 + $0x430] sm:$0xff]
        %v662 = vld [vmem:[%s272 + $0x438] sm:$0xff]
        %v663 = vld [vmem:[%s272 + $0x440] sm:$0xff]
        %v664 = vld [vmem:[%s272 + $0x448] sm:$0xff]
        %v665 = vld [vmem:[%s272 + $0x450] sm:$0xff]
        %v666 = vld [vmem:[%s272 + $0x458] sm:$0xff]
        %v667 = vld [vmem:[%s272 + $0x460] sm:$0xff]
        %v668 = vld [vmem:[%s272 + $0x468] sm:$0xff]
        %v669 = vld [vmem:[%s272 + $0x470] sm:$0xff]
        %v670 = vld [vmem:[%s272 + $0x478] sm:$0xff]
        %v671 = vld [vmem:[%s272 + $0x480] sm:$0xff]
        %v672 = vld [vmem:[%s272 + $0x488] sm:$0xff]
        %v673 = vld [vmem:[%s272 + $0x490] sm:$0xff]
        %v674 = vld [vmem:[%s272 + $0x498] sm:$0xff]
        %v675 = vld [vmem:[%s272 + $0x4a0] sm:$0xff]
        %v676 = vld [vmem:[%s272 + $0x4a8] sm:$0xff]
        %v677 = vld [vmem:[%s272 + $0x4b0] sm:$0xff]
        %v678 = vld [vmem:[%s272 + $0x4b8] sm:$0xff]
        %v679 = vld [vmem:[%s272 + $0x4c0] sm:$0xff]
        %v680 = vld [vmem:[%s272 + $0x4c8] sm:$0xff]
        %v681 = vld [vmem:[%s272 + $0x4d0] sm:$0xff]
        %v682 = vld [vmem:[%s272 + $0x4d8] sm:$0xff]
        %v683 = vld [vmem:[%s272 + $0x4e0] sm:$0xff]
        %v684 = vld [vmem:[%s272 + $0x4e8] sm:$0xff]
        %v685 = vld [vmem:[%s272 + $0x4f0] sm:$0xff]
        %v686 = vld [vmem:[%s272 + $0x4f8] sm:$0xff]
        %v687 = vld [vmem:[%s272 + $0x500] sm:$0xff]
        %v688 = vld [vmem:[%s272 + $0x508] sm:$0xff]
        %v689 = vld [vmem:[%s272 + $0x510] sm:$0xff]
        %v690 = vld [vmem:[%s272 + $0x518] sm:$0xff]
        %v691 = vld [vmem:[%s272 + $0x520] sm:$0xff]
        %v692 = vld [vmem:[%s272 + $0x528] sm:$0xff]
        %v693 = vld [vmem:[%s272 + $0x530] sm:$0xff]
        %v694 = vld [vmem:[%s272 + $0x538] sm:$0xff]
        %v695 = vld [vmem:[%s272 + $0x540] sm:$0xff]
        %v696 = vld [vmem:[%s272 + $0x548] sm:$0xff]
        %v697 = vld [vmem:[%s272 + $0x550] sm:$0xff]
        %v698 = vld [vmem:[%s272 + $0x558] sm:$0xff]
        %v699 = vld [vmem:[%s272 + $0x560] sm:$0xff]
        %v700 = vld [vmem:[%s272 + $0x568] sm:$0xff]
        %v701 = vld [vmem:[%s272 + $0x570] sm:$0xff]
        %v702 = vld [vmem:[%s272 + $0x578] sm:$0xff]
        %v703 = vld [vmem:[%s272 + $0x580] sm:$0xff]
        %v704 = vld [vmem:[%s272 + $0x588] sm:$0xff]
        %v705 = vld [vmem:[%s272 + $0x590] sm:$0xff]
        %v706 = vld [vmem:[%s272 + $0x598] sm:$0xff]
        %v707 = vld [vmem:[%s272 + $0x5a0] sm:$0xff]
        %v708 = vld [vmem:[%s272 + $0x5a8] sm:$0xff]
        %v709 = vld [vmem:[%s272 + $0x5b0] sm:$0xff]
        %v710 = vld [vmem:[%s272 + $0x5b8] sm:$0xff]
        %v711 = vld [vmem:[%s272 + $0x5c0] sm:$0xff]
        %v712 = vld [vmem:[%s272 + $0x5c8] sm:$0xff]
        %v713 = vld [vmem:[%s272 + $0x5d0] sm:$0xff]
        %v714 = vld [vmem:[%s272 + $0x5d8] sm:$0xff]
        %v715 = vld [vmem:[%s272 + $0x5e0] sm:$0xff]
        %v716 = vld [vmem:[%s272 + $0x5e8] sm:$0xff]
        %v717 = vld [vmem:[%s272 + $0x5f0] sm:$0xff]
        %v718 = vld [vmem:[%s272 + $0x5f8] sm:$0xff]
        %v719 = vld [vmem:[%s272 + $0x600] sm:$0xff]
        %v720 = vld [vmem:[%s272 + $0x608] sm:$0xff]
        %v721 = vld [vmem:[%s272 + $0x610] sm:$0xff]
        %v722 = vld [vmem:[%s272 + $0x618] sm:$0xff]
        %v723 = vld [vmem:[%s272 + $0x620] sm:$0xff]
        %v724 = vld [vmem:[%s272 + $0x628] sm:$0xff]
        %v725 = vld [vmem:[%s272 + $0x630] sm:$0xff]
        %v726 = vld [vmem:[%s272 + $0x638] sm:$0xff]
        %v727 = vld [vmem:[%s272 + $0x640] sm:$0xff]
        %v728 = vld [vmem:[%s272 + $0x648] sm:$0xff]
        %v729 = vld [vmem:[%s272 + $0x650] sm:$0xff]
        %v730 = vld [vmem:[%s272 + $0x658] sm:$0xff]
        %v731 = vld [vmem:[%s272 + $0x660] sm:$0xff]
        %v732 = vld [vmem:[%s272 + $0x668] sm:$0xff]
        %v733 = vld [vmem:[%s272 + $0x670] sm:$0xff]
        %v734 = vld [vmem:[%s272 + $0x678] sm:$0xff]
        %v735 = vld [vmem:[%s272 + $0x680] sm:$0xff]
        %v736 = vld [vmem:[%s272 + $0x688] sm:$0xff]
        %v737 = vld [vmem:[%s272 + $0x690] sm:$0xff]
        %v738 = vld [vmem:[%s272 + $0x698] sm:$0xff]
        %v739 = vld [vmem:[%s272 + $0x6a0] sm:$0xff]
        %v740 = vld [vmem:[%s272 + $0x6a8] sm:$0xff]
        %v741 = vld [vmem:[%s272 + $0x6b0] sm:$0xff]
        %v742 = vld [vmem:[%s272 + $0x6b8] sm:$0xff]
        %v743 = vld [vmem:[%s272 + $0x6c0] sm:$0xff]
        %v744 = vld [vmem:[%s272 + $0x6c8] sm:$0xff]
        %v745 = vld [vmem:[%s272 + $0x6d0] sm:$0xff]
        %v746 = vld [vmem:[%s272 + $0x6d8] sm:$0xff]
        %v747 = vld [vmem:[%s272 + $0x6e0] sm:$0xff]
        %v748 = vld [vmem:[%s272 + $0x6e8] sm:$0xff]
        %v749 = vld [vmem:[%s272 + $0x6f0] sm:$0xff]
        %v750 = vld [vmem:[%s272 + $0x6f8] sm:$0xff]
        %v751 = vld [vmem:[%s272 + $0x700] sm:$0xff]
        %v752 = vld [vmem:[%s272 + $0x708] sm:$0xff]
        %v753 = vld [vmem:[%s272 + $0x710] sm:$0xff]
        %v754 = vld [vmem:[%s272 + $0x718] sm:$0xff]
        %v755 = vld [vmem:[%s272 + $0x720] sm:$0xff]
        %v756 = vld [vmem:[%s272 + $0x728] sm:$0xff]
        %v757 = vld [vmem:[%s272 + $0x730] sm:$0xff]
        %v758 = vld [vmem:[%s272 + $0x738] sm:$0xff]
        %v759 = vld [vmem:[%s272 + $0x740] sm:$0xff]
        %v760 = vld [vmem:[%s272 + $0x748] sm:$0xff]
        %v761 = vld [vmem:[%s272 + $0x750] sm:$0xff]
        %v762 = vld [vmem:[%s272 + $0x758] sm:$0xff]
        %v763 = vld [vmem:[%s272 + $0x760] sm:$0xff]
        %v764 = vld [vmem:[%s272 + $0x768] sm:$0xff]
        %v765 = vld [vmem:[%s272 + $0x770] sm:$0xff]
        %v766 = vld [vmem:[%s272 + $0x778] sm:$0xff]
        %v767 = vld [vmem:[%s272 + $0x780] sm:$0xff]
        %v768 = vld [vmem:[%s272 + $0x788] sm:$0xff]
        %v769 = vld [vmem:[%s272 + $0x790] sm:$0xff]
        %v770 = vld [vmem:[%s272 + $0x798] sm:$0xff]
        %v771 = vld [vmem:[%s272 + $0x7a0] sm:$0xff]
        %v772 = vld [vmem:[%s272 + $0x7a8] sm:$0xff]
        %v773 = vld [vmem:[%s272 + $0x7b0] sm:$0xff]
        %v774 = vld [vmem:[%s272 + $0x7b8] sm:$0xff]
        %v775 = vld [vmem:[%s272 + $0x7c0] sm:$0xff]
        %v776 = vld [vmem:[%s272 + $0x7c8] sm:$0xff]
        %v777 = vld [vmem:[%s272 + $0x7d0] sm:$0xff]
        %v778 = vld [vmem:[%s272 + $0x7d8] sm:$0xff]
        %v779 = vld [vmem:[%s272 + $0x7e0] sm:$0xff]
        %v780 = vld [vmem:[%s272 + $0x7e8] sm:$0xff]
        %v781 = vld [vmem:[%s272 + $0x7f0] sm:$0xff]
        %v782 = vld [vmem:[%s272 + $0x7f8] sm:$0xff]
        %v847 = vunpack.c.l.b16 %v463
        %v848 = vunpack.c.h.b16 %v463
        %v849 = vunpack.c.l.b16 %v464
        %v850 = vunpack.c.h.b16 %v464
        %v851 = vunpack.c.l.b16 %v465
        %v852 = vunpack.c.h.b16 %v465
        %v853 = vunpack.c.l.b16 %v466
        %v854 = vunpack.c.h.b16 %v466
        %v855 = vunpack.c.l.b16 %v467
        %v856 = vunpack.c.h.b16 %v467
        %v857 = vunpack.c.l.b16 %v468
        %v858 = vunpack.c.h.b16 %v468
        %v859 = vunpack.c.l.b16 %v469
        %v860 = vunpack.c.h.b16 %v469
        %v861 = vunpack.c.l.b16 %v470
        %v862 = vunpack.c.h.b16 %v470
        %v863 = vunpack.c.l.b16 %v471
        %v864 = vunpack.c.h.b16 %v471
        %v865 = vunpack.c.l.b16 %v472
        %v866 = vunpack.c.h.b16 %v472
        %v867 = vunpack.c.l.b16 %v473
        %v868 = vunpack.c.h.b16 %v473
        %v869 = vunpack.c.l.b16 %v474
        %v870 = vunpack.c.h.b16 %v474
        %v871 = vunpack.c.l.b16 %v475
        %v872 = vunpack.c.h.b16 %v475
        %v873 = vunpack.c.l.b16 %v476
        %v874 = vunpack.c.h.b16 %v476
        %v875 = vunpack.c.l.b16 %v477
        %v876 = vunpack.c.h.b16 %v477
        %v877 = vunpack.c.l.b16 %v478
        %v878 = vunpack.c.h.b16 %v478
        %v879 = vunpack.c.l.b16 %v479
        %v880 = vunpack.c.h.b16 %v479
        %v881 = vunpack.c.l.b16 %v480
        %v882 = vunpack.c.h.b16 %v480
        %v883 = vunpack.c.l.b16 %v481
        %v884 = vunpack.c.h.b16 %v481
        %v885 = vunpack.c.l.b16 %v482
        %v886 = vunpack.c.h.b16 %v482
        %v887 = vunpack.c.l.b16 %v483
        %v888 = vunpack.c.h.b16 %v483
        %v889 = vunpack.c.l.b16 %v484
        %v890 = vunpack.c.h.b16 %v484
        %v891 = vunpack.c.l.b16 %v485
        %v892 = vunpack.c.h.b16 %v485
        %v893 = vunpack.c.l.b16 %v486
        %v894 = vunpack.c.h.b16 %v486
        %v895 = vunpack.c.l.b16 %v487
        %v896 = vunpack.c.h.b16 %v487
        %v897 = vunpack.c.l.b16 %v488
        %v898 = vunpack.c.h.b16 %v488
        %v899 = vunpack.c.l.b16 %v489
        %v900 = vunpack.c.h.b16 %v489
        %v901 = vunpack.c.l.b16 %v490
        %v902 = vunpack.c.h.b16 %v490
        %v903 = vunpack.c.l.b16 %v491
        %v904 = vunpack.c.h.b16 %v491
        %v905 = vunpack.c.l.b16 %v492
        %v906 = vunpack.c.h.b16 %v492
        %v907 = vunpack.c.l.b16 %v493
        %v908 = vunpack.c.h.b16 %v493
        %v909 = vunpack.c.l.b16 %v494
        %v910 = vunpack.c.h.b16 %v494
        %v911 = vunpack.c.l.b16 %v495
        %v912 = vunpack.c.h.b16 %v495
        %v913 = vunpack.c.l.b16 %v496
        %v914 = vunpack.c.h.b16 %v496
        %v915 = vunpack.c.l.b16 %v497
        %v916 = vunpack.c.h.b16 %v497
        %v917 = vunpack.c.l.b16 %v498
        %v918 = vunpack.c.h.b16 %v498
        %v919 = vunpack.c.l.b16 %v499
        %v920 = vunpack.c.h.b16 %v499
        %v921 = vunpack.c.l.b16 %v500
        %v922 = vunpack.c.h.b16 %v500
        %v923 = vunpack.c.l.b16 %v501
        %v924 = vunpack.c.h.b16 %v501
        %v925 = vunpack.c.l.b16 %v502
        %v926 = vunpack.c.h.b16 %v502
        %v927 = vunpack.c.l.b16 %v503
        %v928 = vunpack.c.h.b16 %v503
        %v929 = vunpack.c.l.b16 %v504
        %v930 = vunpack.c.h.b16 %v504
        %v931 = vunpack.c.l.b16 %v505
        %v932 = vunpack.c.h.b16 %v505
        %v933 = vunpack.c.l.b16 %v506
        %v934 = vunpack.c.h.b16 %v506
        %v935 = vunpack.c.l.b16 %v507
        %v936 = vunpack.c.h.b16 %v507
        %v937 = vunpack.c.l.b16 %v508
        %v938 = vunpack.c.h.b16 %v508
        %v939 = vunpack.c.l.b16 %v509
        %v940 = vunpack.c.h.b16 %v509
        %v941 = vunpack.c.l.b16 %v510
        %v942 = vunpack.c.h.b16 %v510
        %v943 = vunpack.c.l.b16 %v511
        %v944 = vunpack.c.h.b16 %v511
        %v945 = vunpack.c.l.b16 %v512
        %v946 = vunpack.c.h.b16 %v512
        %v947 = vunpack.c.l.b16 %v513
        %v948 = vunpack.c.h.b16 %v513
        %v949 = vunpack.c.l.b16 %v514
        %v950 = vunpack.c.h.b16 %v514
        %v951 = vunpack.c.l.b16 %v515
        %v952 = vunpack.c.h.b16 %v515
        %v953 = vunpack.c.l.b16 %v516
        %v954 = vunpack.c.h.b16 %v516
        %v955 = vunpack.c.l.b16 %v517
        %v956 = vunpack.c.h.b16 %v517
        %v957 = vunpack.c.l.b16 %v518
        %v958 = vunpack.c.h.b16 %v518
        %v959 = vunpack.c.l.b16 %v519
        %v960 = vunpack.c.h.b16 %v519
        %v961 = vunpack.c.l.b16 %v520
        %v962 = vunpack.c.h.b16 %v520
        %v963 = vunpack.c.l.b16 %v521
        %v964 = vunpack.c.h.b16 %v521
        %v965 = vunpack.c.l.b16 %v522
        %v966 = vunpack.c.h.b16 %v522
        %v967 = vunpack.c.l.b16 %v523
        %v968 = vunpack.c.h.b16 %v523
        %v969 = vunpack.c.l.b16 %v524
        %v970 = vunpack.c.h.b16 %v524
        %v971 = vunpack.c.l.b16 %v525
        %v972 = vunpack.c.h.b16 %v525
        %v973 = vunpack.c.l.b16 %v526
        %v974 = vunpack.c.h.b16 %v526
        %v975 = vpack.c.b16 %v855, %v847
        %v976 = vpack.c.b16 %v856, %v848
        %v977 = vpack.c.b16 %v857, %v849
        %v978 = vpack.c.b16 %v858, %v850
        %v979 = vpack.c.b16 %v859, %v851
        %v980 = vpack.c.b16 %v860, %v852
        %v981 = vpack.c.b16 %v861, %v853
        %v982 = vpack.c.b16 %v862, %v854
        %v983 = vpack.c.b16 %v871, %v863
        %v984 = vpack.c.b16 %v872, %v864
        %v985 = vpack.c.b16 %v873, %v865
        %v986 = vpack.c.b16 %v874, %v866
        %v987 = vpack.c.b16 %v875, %v867
        %v988 = vpack.c.b16 %v876, %v868
        %v989 = vpack.c.b16 %v877, %v869
        %v990 = vpack.c.b16 %v878, %v870
        %v991 = vpack.c.b16 %v887, %v879
        %v992 = vpack.c.b16 %v888, %v880
        %v993 = vpack.c.b16 %v889, %v881
        %v994 = vpack.c.b16 %v890, %v882
        %v995 = vpack.c.b16 %v891, %v883
        %v996 = vpack.c.b16 %v892, %v884
        %v997 = vpack.c.b16 %v893, %v885
        %v998 = vpack.c.b16 %v894, %v886
        %v999 = vpack.c.b16 %v903, %v895
        %v1000 = vpack.c.b16 %v904, %v896
        %v1001 = vpack.c.b16 %v905, %v897
        %v1002 = vpack.c.b16 %v906, %v898
        %v1003 = vpack.c.b16 %v907, %v899
        %v1004 = vpack.c.b16 %v908, %v900
        %v1005 = vpack.c.b16 %v909, %v901
        %v1006 = vpack.c.b16 %v910, %v902
        %v1007 = vpack.c.b16 %v919, %v911
        %v1008 = vpack.c.b16 %v920, %v912
        %v1009 = vpack.c.b16 %v921, %v913
        %v1010 = vpack.c.b16 %v922, %v914
        %v1011 = vpack.c.b16 %v923, %v915
        %v1012 = vpack.c.b16 %v924, %v916
        %v1013 = vpack.c.b16 %v925, %v917
        %v1014 = vpack.c.b16 %v926, %v918
        %v1015 = vpack.c.b16 %v935, %v927
        %v1016 = vpack.c.b16 %v936, %v928
        %v1017 = vpack.c.b16 %v937, %v929
        %v1018 = vpack.c.b16 %v938, %v930
        %v1019 = vpack.c.b16 %v939, %v931
        %v1020 = vpack.c.b16 %v940, %v932
        %v1021 = vpack.c.b16 %v941, %v933
        %v1022 = vpack.c.b16 %v942, %v934
        %v1023 = vpack.c.b16 %v951, %v943
        %v1024 = vpack.c.b16 %v952, %v944
        %v1025 = vpack.c.b16 %v953, %v945
        %v1026 = vpack.c.b16 %v954, %v946
        %v1027 = vpack.c.b16 %v955, %v947
        %v1028 = vpack.c.b16 %v956, %v948
        %v1029 = vpack.c.b16 %v957, %v949
        %v1030 = vpack.c.b16 %v958, %v950
        %v1031 = vpack.c.b16 %v967, %v959
        %v1032 = vpack.c.b16 %v968, %v960
        %v1033 = vpack.c.b16 %v969, %v961
        %v1034 = vpack.c.b16 %v970, %v962
        %v1035 = vpack.c.b16 %v971, %v963
        %v1036 = vpack.c.b16 %v972, %v964
        %v1037 = vpack.c.b16 %v973, %v965
        %v1038 = vpack.c.b16 %v974, %v966
        %v1359 = vunpack.c.l.b16 %v527
        %v1360 = vunpack.c.h.b16 %v527
        %v1361 = vunpack.c.l.b16 %v528
        %v1362 = vunpack.c.h.b16 %v528
        %v1363 = vunpack.c.l.b16 %v529
        %v1364 = vunpack.c.h.b16 %v529
        %v1365 = vunpack.c.l.b16 %v530
        %v1366 = vunpack.c.h.b16 %v530
        %v1367 = vunpack.c.l.b16 %v531
        %v1368 = vunpack.c.h.b16 %v531
        %v1369 = vunpack.c.l.b16 %v532
        %v1370 = vunpack.c.h.b16 %v532
        %v1371 = vunpack.c.l.b16 %v533
        %v1372 = vunpack.c.h.b16 %v533
        %v1373 = vunpack.c.l.b16 %v534
        %v1374 = vunpack.c.h.b16 %v534
        %v1375 = vunpack.c.l.b16 %v535
        %v1376 = vunpack.c.h.b16 %v535
        %v1377 = vunpack.c.l.b16 %v536
        %v1378 = vunpack.c.h.b16 %v536
        %v1379 = vunpack.c.l.b16 %v537
        %v1380 = vunpack.c.h.b16 %v537
        %v1381 = vunpack.c.l.b16 %v538
        %v1382 = vunpack.c.h.b16 %v538
        %v1383 = vunpack.c.l.b16 %v539
        %v1384 = vunpack.c.h.b16 %v539
        %v1385 = vunpack.c.l.b16 %v540
        %v1386 = vunpack.c.h.b16 %v540
        %v1387 = vunpack.c.l.b16 %v541
        %v1388 = vunpack.c.h.b16 %v541
        %v1389 = vunpack.c.l.b16 %v542
        %v1390 = vunpack.c.h.b16 %v542
        %v1391 = vunpack.c.l.b16 %v543
        %v1392 = vunpack.c.h.b16 %v543
        %v1393 = vunpack.c.l.b16 %v544
        %v1394 = vunpack.c.h.b16 %v544
        %v1395 = vunpack.c.l.b16 %v545
        %v1396 = vunpack.c.h.b16 %v545
        %v1397 = vunpack.c.l.b16 %v546
        %v1398 = vunpack.c.h.b16 %v546
        %v1399 = vunpack.c.l.b16 %v547
        %v1400 = vunpack.c.h.b16 %v547
        %v1401 = vunpack.c.l.b16 %v548
        %v1402 = vunpack.c.h.b16 %v548
        %v1403 = vunpack.c.l.b16 %v549
        %v1404 = vunpack.c.h.b16 %v549
        %v1405 = vunpack.c.l.b16 %v550
        %v1406 = vunpack.c.h.b16 %v550
        %v1407 = vunpack.c.l.b16 %v551
        %v1408 = vunpack.c.h.b16 %v551
        %v1409 = vunpack.c.l.b16 %v552
        %v1410 = vunpack.c.h.b16 %v552
        %v1411 = vunpack.c.l.b16 %v553
        %v1412 = vunpack.c.h.b16 %v553
        %v1413 = vunpack.c.l.b16 %v554
        %v1414 = vunpack.c.h.b16 %v554
        %v1415 = vunpack.c.l.b16 %v555
        %v1416 = vunpack.c.h.b16 %v555
        %v1417 = vunpack.c.l.b16 %v556
        %v1418 = vunpack.c.h.b16 %v556
        %v1419 = vunpack.c.l.b16 %v557
        %v1420 = vunpack.c.h.b16 %v557
        %v1421 = vunpack.c.l.b16 %v558
        %v1422 = vunpack.c.h.b16 %v558
        %v1423 = vunpack.c.l.b16 %v559
        %v1424 = vunpack.c.h.b16 %v559
        %v1425 = vunpack.c.l.b16 %v560
        %v1426 = vunpack.c.h.b16 %v560
        %v1427 = vunpack.c.l.b16 %v561
        %v1428 = vunpack.c.h.b16 %v561
        %v1429 = vunpack.c.l.b16 %v562
        %v1430 = vunpack.c.h.b16 %v562
        %v1431 = vunpack.c.l.b16 %v563
        %v1432 = vunpack.c.h.b16 %v563
        %v1433 = vunpack.c.l.b16 %v564
        %v1434 = vunpack.c.h.b16 %v564
        %v1435 = vunpack.c.l.b16 %v565
        %v1436 = vunpack.c.h.b16 %v565
        %v1437 = vunpack.c.l.b16 %v566
        %v1438 = vunpack.c.h.b16 %v566
        %v1439 = vunpack.c.l.b16 %v567
        %v1440 = vunpack.c.h.b16 %v567
        %v1441 = vunpack.c.l.b16 %v568
        %v1442 = vunpack.c.h.b16 %v568
        %v1443 = vunpack.c.l.b16 %v569
        %v1444 = vunpack.c.h.b16 %v569
        %v1445 = vunpack.c.l.b16 %v570
        %v1446 = vunpack.c.h.b16 %v570
        %v1447 = vunpack.c.l.b16 %v571
        %v1448 = vunpack.c.h.b16 %v571
        %v1449 = vunpack.c.l.b16 %v572
        %v1450 = vunpack.c.h.b16 %v572
        %v1451 = vunpack.c.l.b16 %v573
        %v1452 = vunpack.c.h.b16 %v573
        %v1453 = vunpack.c.l.b16 %v574
        %v1454 = vunpack.c.h.b16 %v574
        %v1455 = vunpack.c.l.b16 %v575
        %v1456 = vunpack.c.h.b16 %v575
        %v1457 = vunpack.c.l.b16 %v576
        %v1458 = vunpack.c.h.b16 %v576
        %v1459 = vunpack.c.l.b16 %v577
        %v1460 = vunpack.c.h.b16 %v577
        %v1461 = vunpack.c.l.b16 %v578
        %v1462 = vunpack.c.h.b16 %v578
        %v1463 = vunpack.c.l.b16 %v579
        %v1464 = vunpack.c.h.b16 %v579
        %v1465 = vunpack.c.l.b16 %v580
        %v1466 = vunpack.c.h.b16 %v580
        %v1467 = vunpack.c.l.b16 %v581
        %v1468 = vunpack.c.h.b16 %v581
        %v1469 = vunpack.c.l.b16 %v582
        %v1470 = vunpack.c.h.b16 %v582
        %v1471 = vunpack.c.l.b16 %v583
        %v1472 = vunpack.c.h.b16 %v583
        %v1473 = vunpack.c.l.b16 %v584
        %v1474 = vunpack.c.h.b16 %v584
        %v1475 = vunpack.c.l.b16 %v585
        %v1476 = vunpack.c.h.b16 %v585
        %v1477 = vunpack.c.l.b16 %v586
        %v1478 = vunpack.c.h.b16 %v586
        %v1479 = vunpack.c.l.b16 %v587
        %v1480 = vunpack.c.h.b16 %v587
        %v1481 = vunpack.c.l.b16 %v588
        %v1482 = vunpack.c.h.b16 %v588
        %v1483 = vunpack.c.l.b16 %v589
        %v1484 = vunpack.c.h.b16 %v589
        %v1485 = vunpack.c.l.b16 %v590
        %v1486 = vunpack.c.h.b16 %v590
        %v1487 = vunpack.c.l.b16 %v591
        %v1488 = vunpack.c.h.b16 %v591
        %v1489 = vunpack.c.l.b16 %v592
        %v1490 = vunpack.c.h.b16 %v592
        %v1491 = vunpack.c.l.b16 %v593
        %v1492 = vunpack.c.h.b16 %v593
        %v1493 = vunpack.c.l.b16 %v594
        %v1494 = vunpack.c.h.b16 %v594
        %v1495 = vunpack.c.l.b16 %v595
        %v1496 = vunpack.c.h.b16 %v595
        %v1497 = vunpack.c.l.b16 %v596
        %v1498 = vunpack.c.h.b16 %v596
        %v1499 = vunpack.c.l.b16 %v597
        %v1500 = vunpack.c.h.b16 %v597
        %v1501 = vunpack.c.l.b16 %v598
        %v1502 = vunpack.c.h.b16 %v598
        %v1503 = vunpack.c.l.b16 %v599
        %v1504 = vunpack.c.h.b16 %v599
        %v1505 = vunpack.c.l.b16 %v600
        %v1506 = vunpack.c.h.b16 %v600
        %v1507 = vunpack.c.l.b16 %v601
        %v1508 = vunpack.c.h.b16 %v601
        %v1509 = vunpack.c.l.b16 %v602
        %v1510 = vunpack.c.h.b16 %v602
        %v1511 = vunpack.c.l.b16 %v603
        %v1512 = vunpack.c.h.b16 %v603
        %v1513 = vunpack.c.l.b16 %v604
        %v1514 = vunpack.c.h.b16 %v604
        %v1515 = vunpack.c.l.b16 %v605
        %v1516 = vunpack.c.h.b16 %v605
        %v1517 = vunpack.c.l.b16 %v606
        %v1518 = vunpack.c.h.b16 %v606
        %v1519 = vunpack.c.l.b16 %v607
        %v1520 = vunpack.c.h.b16 %v607
        %v1521 = vunpack.c.l.b16 %v608
        %v1522 = vunpack.c.h.b16 %v608
        %v1523 = vunpack.c.l.b16 %v609
        %v1524 = vunpack.c.h.b16 %v609
        %v1525 = vunpack.c.l.b16 %v610
        %v1526 = vunpack.c.h.b16 %v610
        %v1527 = vunpack.c.l.b16 %v611
        %v1528 = vunpack.c.h.b16 %v611
        %v1529 = vunpack.c.l.b16 %v612
        %v1530 = vunpack.c.h.b16 %v612
        %v1531 = vunpack.c.l.b16 %v613
        %v1532 = vunpack.c.h.b16 %v613
        %v1533 = vunpack.c.l.b16 %v614
        %v1534 = vunpack.c.h.b16 %v614
        %v1535 = vunpack.c.l.b16 %v615
        %v1536 = vunpack.c.h.b16 %v615
        %v1537 = vunpack.c.l.b16 %v616
        %v1538 = vunpack.c.h.b16 %v616
        %v1539 = vunpack.c.l.b16 %v617
        %v1540 = vunpack.c.h.b16 %v617
        %v1541 = vunpack.c.l.b16 %v618
        %v1542 = vunpack.c.h.b16 %v618
        %v1543 = vunpack.c.l.b16 %v619
        %v1544 = vunpack.c.h.b16 %v619
        %v1545 = vunpack.c.l.b16 %v620
        %v1546 = vunpack.c.h.b16 %v620
        %v1547 = vunpack.c.l.b16 %v621
        %v1548 = vunpack.c.h.b16 %v621
        %v1549 = vunpack.c.l.b16 %v622
        %v1550 = vunpack.c.h.b16 %v622
        %v1551 = vunpack.c.l.b16 %v623
        %v1552 = vunpack.c.h.b16 %v623
        %v1553 = vunpack.c.l.b16 %v624
        %v1554 = vunpack.c.h.b16 %v624
        %v1555 = vunpack.c.l.b16 %v625
        %v1556 = vunpack.c.h.b16 %v625
        %v1557 = vunpack.c.l.b16 %v626
        %v1558 = vunpack.c.h.b16 %v626
        %v1559 = vunpack.c.l.b16 %v627
        %v1560 = vunpack.c.h.b16 %v627
        %v1561 = vunpack.c.l.b16 %v628
        %v1562 = vunpack.c.h.b16 %v628
        %v1563 = vunpack.c.l.b16 %v629
        %v1564 = vunpack.c.h.b16 %v629
        %v1565 = vunpack.c.l.b16 %v630
        %v1566 = vunpack.c.h.b16 %v630
        %v1567 = vunpack.c.l.b16 %v631
        %v1568 = vunpack.c.h.b16 %v631
        %v1569 = vunpack.c.l.b16 %v632
        %v1570 = vunpack.c.h.b16 %v632
        %v1571 = vunpack.c.l.b16 %v633
        %v1572 = vunpack.c.h.b16 %v633
        %v1573 = vunpack.c.l.b16 %v634
        %v1574 = vunpack.c.h.b16 %v634
        %v1575 = vunpack.c.l.b16 %v635
        %v1576 = vunpack.c.h.b16 %v635
        %v1577 = vunpack.c.l.b16 %v636
        %v1578 = vunpack.c.h.b16 %v636
        %v1579 = vunpack.c.l.b16 %v637
        %v1580 = vunpack.c.h.b16 %v637
        %v1581 = vunpack.c.l.b16 %v638
        %v1582 = vunpack.c.h.b16 %v638
        %v1583 = vunpack.c.l.b16 %v639
        %v1584 = vunpack.c.h.b16 %v639
        %v1585 = vunpack.c.l.b16 %v640
        %v1586 = vunpack.c.h.b16 %v640
        %v1587 = vunpack.c.l.b16 %v641
        %v1588 = vunpack.c.h.b16 %v641
        %v1589 = vunpack.c.l.b16 %v642
        %v1590 = vunpack.c.h.b16 %v642
        %v1591 = vunpack.c.l.b16 %v643
        %v1592 = vunpack.c.h.b16 %v643
        %v1593 = vunpack.c.l.b16 %v644
        %v1594 = vunpack.c.h.b16 %v644
        %v1595 = vunpack.c.l.b16 %v645
        %v1596 = vunpack.c.h.b16 %v645
        %v1597 = vunpack.c.l.b16 %v646
        %v1598 = vunpack.c.h.b16 %v646
        %v1599 = vunpack.c.l.b16 %v647
        %v1600 = vunpack.c.h.b16 %v647
        %v1601 = vunpack.c.l.b16 %v648
        %v1602 = vunpack.c.h.b16 %v648
        %v1603 = vunpack.c.l.b16 %v649
        %v1604 = vunpack.c.h.b16 %v649
        %v1605 = vunpack.c.l.b16 %v650
        %v1606 = vunpack.c.h.b16 %v650
        %v1607 = vunpack.c.l.b16 %v651
        %v1608 = vunpack.c.h.b16 %v651
        %v1609 = vunpack.c.l.b16 %v652
        %v1610 = vunpack.c.h.b16 %v652
        %v1611 = vunpack.c.l.b16 %v653
        %v1612 = vunpack.c.h.b16 %v653
        %v1613 = vunpack.c.l.b16 %v654
        %v1614 = vunpack.c.h.b16 %v654
        %v1615 = vunpack.c.l.b16 %v655
        %v1616 = vunpack.c.h.b16 %v655
        %v1617 = vunpack.c.l.b16 %v656
        %v1618 = vunpack.c.h.b16 %v656
        %v1619 = vunpack.c.l.b16 %v657
        %v1620 = vunpack.c.h.b16 %v657
        %v1621 = vunpack.c.l.b16 %v658
        %v1622 = vunpack.c.h.b16 %v658
        %v1623 = vunpack.c.l.b16 %v659
        %v1624 = vunpack.c.h.b16 %v659
        %v1625 = vunpack.c.l.b16 %v660
        %v1626 = vunpack.c.h.b16 %v660
        %v1627 = vunpack.c.l.b16 %v661
        %v1628 = vunpack.c.h.b16 %v661
        %v1629 = vunpack.c.l.b16 %v662
        %v1630 = vunpack.c.h.b16 %v662
        %v1631 = vunpack.c.l.b16 %v663
        %v1632 = vunpack.c.h.b16 %v663
        %v1633 = vunpack.c.l.b16 %v664
        %v1634 = vunpack.c.h.b16 %v664
        %v1635 = vunpack.c.l.b16 %v665
        %v1636 = vunpack.c.h.b16 %v665
        %v1637 = vunpack.c.l.b16 %v666
        %v1638 = vunpack.c.h.b16 %v666
        %v1639 = vunpack.c.l.b16 %v667
        %v1640 = vunpack.c.h.b16 %v667
        %v1641 = vunpack.c.l.b16 %v668
        %v1642 = vunpack.c.h.b16 %v668
        %v1643 = vunpack.c.l.b16 %v669
        %v1644 = vunpack.c.h.b16 %v669
        %v1645 = vunpack.c.l.b16 %v670
        %v1646 = vunpack.c.h.b16 %v670
        %v1647 = vunpack.c.l.b16 %v671
        %v1648 = vunpack.c.h.b16 %v671
        %v1649 = vunpack.c.l.b16 %v672
        %v1650 = vunpack.c.h.b16 %v672
        %v1651 = vunpack.c.l.b16 %v673
        %v1652 = vunpack.c.h.b16 %v673
        %v1653 = vunpack.c.l.b16 %v674
        %v1654 = vunpack.c.h.b16 %v674
        %v1655 = vunpack.c.l.b16 %v675
        %v1656 = vunpack.c.h.b16 %v675
        %v1657 = vunpack.c.l.b16 %v676
        %v1658 = vunpack.c.h.b16 %v676
        %v1659 = vunpack.c.l.b16 %v677
        %v1660 = vunpack.c.h.b16 %v677
        %v1661 = vunpack.c.l.b16 %v678
        %v1662 = vunpack.c.h.b16 %v678
        %v1663 = vunpack.c.l.b16 %v679
        %v1664 = vunpack.c.h.b16 %v679
        %v1665 = vunpack.c.l.b16 %v680
        %v1666 = vunpack.c.h.b16 %v680
        %v1667 = vunpack.c.l.b16 %v681
        %v1668 = vunpack.c.h.b16 %v681
        %v1669 = vunpack.c.l.b16 %v682
        %v1670 = vunpack.c.h.b16 %v682
        %v1671 = vunpack.c.l.b16 %v683
        %v1672 = vunpack.c.h.b16 %v683
        %v1673 = vunpack.c.l.b16 %v684
        %v1674 = vunpack.c.h.b16 %v684
        %v1675 = vunpack.c.l.b16 %v685
        %v1676 = vunpack.c.h.b16 %v685
        %v1677 = vunpack.c.l.b16 %v686
        %v1678 = vunpack.c.h.b16 %v686
        %v1679 = vunpack.c.l.b16 %v687
        %v1680 = vunpack.c.h.b16 %v687
        %v1681 = vunpack.c.l.b16 %v688
        %v1682 = vunpack.c.h.b16 %v688
        %v1683 = vunpack.c.l.b16 %v689
        %v1684 = vunpack.c.h.b16 %v689
        %v1685 = vunpack.c.l.b16 %v690
        %v1686 = vunpack.c.h.b16 %v690
        %v1687 = vunpack.c.l.b16 %v691
        %v1688 = vunpack.c.h.b16 %v691
        %v1689 = vunpack.c.l.b16 %v692
        %v1690 = vunpack.c.h.b16 %v692
        %v1691 = vunpack.c.l.b16 %v693
        %v1692 = vunpack.c.h.b16 %v693
        %v1693 = vunpack.c.l.b16 %v694
        %v1694 = vunpack.c.h.b16 %v694
        %v1695 = vunpack.c.l.b16 %v695
        %v1696 = vunpack.c.h.b16 %v695
        %v1697 = vunpack.c.l.b16 %v696
        %v1698 = vunpack.c.h.b16 %v696
        %v1699 = vunpack.c.l.b16 %v697
        %v1700 = vunpack.c.h.b16 %v697
        %v1701 = vunpack.c.l.b16 %v698
        %v1702 = vunpack.c.h.b16 %v698
        %v1703 = vunpack.c.l.b16 %v699
        %v1704 = vunpack.c.h.b16 %v699
        %v1705 = vunpack.c.l.b16 %v700
        %v1706 = vunpack.c.h.b16 %v700
        %v1707 = vunpack.c.l.b16 %v701
        %v1708 = vunpack.c.h.b16 %v701
        %v1709 = vunpack.c.l.b16 %v702
        %v1710 = vunpack.c.h.b16 %v702
        %v1711 = vunpack.c.l.b16 %v703
        %v1712 = vunpack.c.h.b16 %v703
        %v1713 = vunpack.c.l.b16 %v704
        %v1714 = vunpack.c.h.b16 %v704
        %v1715 = vunpack.c.l.b16 %v705
        %v1716 = vunpack.c.h.b16 %v705
        %v1717 = vunpack.c.l.b16 %v706
        %v1718 = vunpack.c.h.b16 %v706
        %v1719 = vunpack.c.l.b16 %v707
        %v1720 = vunpack.c.h.b16 %v707
        %v1721 = vunpack.c.l.b16 %v708
        %v1722 = vunpack.c.h.b16 %v708
        %v1723 = vunpack.c.l.b16 %v709
        %v1724 = vunpack.c.h.b16 %v709
        %v1725 = vunpack.c.l.b16 %v710
        %v1726 = vunpack.c.h.b16 %v710
        %v1727 = vunpack.c.l.b16 %v711
        %v1728 = vunpack.c.h.b16 %v711
        %v1729 = vunpack.c.l.b16 %v712
        %v1730 = vunpack.c.h.b16 %v712
        %v1731 = vunpack.c.l.b16 %v713
        %v1732 = vunpack.c.h.b16 %v713
        %v1733 = vunpack.c.l.b16 %v714
        %v1734 = vunpack.c.h.b16 %v714
        %v1735 = vunpack.c.l.b16 %v715
        %v1736 = vunpack.c.h.b16 %v715
        %v1737 = vunpack.c.l.b16 %v716
        %v1738 = vunpack.c.h.b16 %v716
        %v1739 = vunpack.c.l.b16 %v717
        %v1740 = vunpack.c.h.b16 %v717
        %v1741 = vunpack.c.l.b16 %v718
        %v1742 = vunpack.c.h.b16 %v718
        %v1743 = vunpack.c.l.b16 %v719
        %v1744 = vunpack.c.h.b16 %v719
        %v1745 = vunpack.c.l.b16 %v720
        %v1746 = vunpack.c.h.b16 %v720
        %v1747 = vunpack.c.l.b16 %v721
        %v1748 = vunpack.c.h.b16 %v721
        %v1749 = vunpack.c.l.b16 %v722
        %v1750 = vunpack.c.h.b16 %v722
        %v1751 = vunpack.c.l.b16 %v723
        %v1752 = vunpack.c.h.b16 %v723
        %v1753 = vunpack.c.l.b16 %v724
        %v1754 = vunpack.c.h.b16 %v724
        %v1755 = vunpack.c.l.b16 %v725
        %v1756 = vunpack.c.h.b16 %v725
        %v1757 = vunpack.c.l.b16 %v726
        %v1758 = vunpack.c.h.b16 %v726
        %v1759 = vunpack.c.l.b16 %v727
        %v1760 = vunpack.c.h.b16 %v727
        %v1761 = vunpack.c.l.b16 %v728
        %v1762 = vunpack.c.h.b16 %v728
        %v1763 = vunpack.c.l.b16 %v729
        %v1764 = vunpack.c.h.b16 %v729
        %v1765 = vunpack.c.l.b16 %v730
        %v1766 = vunpack.c.h.b16 %v730
        %v1767 = vunpack.c.l.b16 %v731
        %v1768 = vunpack.c.h.b16 %v731
        %v1769 = vunpack.c.l.b16 %v732
        %v1770 = vunpack.c.h.b16 %v732
        %v1771 = vunpack.c.l.b16 %v733
        %v1772 = vunpack.c.h.b16 %v733
        %v1773 = vunpack.c.l.b16 %v734
        %v1774 = vunpack.c.h.b16 %v734
        %v1775 = vunpack.c.l.b16 %v735
        %v1776 = vunpack.c.h.b16 %v735
        %v1777 = vunpack.c.l.b16 %v736
        %v1778 = vunpack.c.h.b16 %v736
        %v1779 = vunpack.c.l.b16 %v737
        %v1780 = vunpack.c.h.b16 %v737
        %v1781 = vunpack.c.l.b16 %v738
        %v1782 = vunpack.c.h.b16 %v738
        %v1783 = vunpack.c.l.b16 %v739
        %v1784 = vunpack.c.h.b16 %v739
        %v1785 = vunpack.c.l.b16 %v740
        %v1786 = vunpack.c.h.b16 %v740
        %v1787 = vunpack.c.l.b16 %v741
        %v1788 = vunpack.c.h.b16 %v741
        %v1789 = vunpack.c.l.b16 %v742
        %v1790 = vunpack.c.h.b16 %v742
        %v1791 = vunpack.c.l.b16 %v743
        %v1792 = vunpack.c.h.b16 %v743
        %v1793 = vunpack.c.l.b16 %v744
        %v1794 = vunpack.c.h.b16 %v744
        %v1795 = vunpack.c.l.b16 %v745
        %v1796 = vunpack.c.h.b16 %v745
        %v1797 = vunpack.c.l.b16 %v746
        %v1798 = vunpack.c.h.b16 %v746
        %v1799 = vunpack.c.l.b16 %v747
        %v1800 = vunpack.c.h.b16 %v747
        %v1801 = vunpack.c.l.b16 %v748
        %v1802 = vunpack.c.h.b16 %v748
        %v1803 = vunpack.c.l.b16 %v749
        %v1804 = vunpack.c.h.b16 %v749
        %v1805 = vunpack.c.l.b16 %v750
        %v1806 = vunpack.c.h.b16 %v750
        %v1807 = vunpack.c.l.b16 %v751
        %v1808 = vunpack.c.h.b16 %v751
        %v1809 = vunpack.c.l.b16 %v752
        %v1810 = vunpack.c.h.b16 %v752
        %v1811 = vunpack.c.l.b16 %v753
        %v1812 = vunpack.c.h.b16 %v753
        %v1813 = vunpack.c.l.b16 %v754
        %v1814 = vunpack.c.h.b16 %v754
        %v1815 = vunpack.c.l.b16 %v755
        %v1816 = vunpack.c.h.b16 %v755
        %v1817 = vunpack.c.l.b16 %v756
        %v1818 = vunpack.c.h.b16 %v756
        %v1819 = vunpack.c.l.b16 %v757
        %v1820 = vunpack.c.h.b16 %v757
        %v1821 = vunpack.c.l.b16 %v758
        %v1822 = vunpack.c.h.b16 %v758
        %v1823 = vunpack.c.l.b16 %v759
        %v1824 = vunpack.c.h.b16 %v759
        %v1825 = vunpack.c.l.b16 %v760
        %v1826 = vunpack.c.h.b16 %v760
        %v1827 = vunpack.c.l.b16 %v761
        %v1828 = vunpack.c.h.b16 %v761
        %v1829 = vunpack.c.l.b16 %v762
        %v1830 = vunpack.c.h.b16 %v762
        %v1831 = vunpack.c.l.b16 %v763
        %v1832 = vunpack.c.h.b16 %v763
        %v1833 = vunpack.c.l.b16 %v764
        %v1834 = vunpack.c.h.b16 %v764
        %v1835 = vunpack.c.l.b16 %v765
        %v1836 = vunpack.c.h.b16 %v765
        %v1837 = vunpack.c.l.b16 %v766
        %v1838 = vunpack.c.h.b16 %v766
        %v1839 = vunpack.c.l.b16 %v767
        %v1840 = vunpack.c.h.b16 %v767
        %v1841 = vunpack.c.l.b16 %v768
        %v1842 = vunpack.c.h.b16 %v768
        %v1843 = vunpack.c.l.b16 %v769
        %v1844 = vunpack.c.h.b16 %v769
        %v1845 = vunpack.c.l.b16 %v770
        %v1846 = vunpack.c.h.b16 %v770
        %v1847 = vunpack.c.l.b16 %v771
        %v1848 = vunpack.c.h.b16 %v771
        %v1849 = vunpack.c.l.b16 %v772
        %v1850 = vunpack.c.h.b16 %v772
        %v1851 = vunpack.c.l.b16 %v773
        %v1852 = vunpack.c.h.b16 %v773
        %v1853 = vunpack.c.l.b16 %v774
        %v1854 = vunpack.c.h.b16 %v774
        %v1855 = vunpack.c.l.b16 %v775
        %v1856 = vunpack.c.h.b16 %v775
        %v1857 = vunpack.c.l.b16 %v776
        %v1858 = vunpack.c.h.b16 %v776
        %v1859 = vunpack.c.l.b16 %v777
        %v1860 = vunpack.c.h.b16 %v777
        %v1861 = vunpack.c.l.b16 %v778
        %v1862 = vunpack.c.h.b16 %v778
        %v1863 = vunpack.c.l.b16 %v779
        %v1864 = vunpack.c.h.b16 %v779
        %v1865 = vunpack.c.l.b16 %v780
        %v1866 = vunpack.c.h.b16 %v780
        %v1867 = vunpack.c.l.b16 %v781
        %v1868 = vunpack.c.h.b16 %v781
        %v1869 = vunpack.c.l.b16 %v782
        %v1870 = vunpack.c.h.b16 %v782
        %v1871 = vpack.c.b16 %v1363, %v1359
        %v1872 = vpack.c.b16 %v1364, %v1360
        %v1873 = vpack.c.b16 %v1365, %v1361
        %v1874 = vpack.c.b16 %v1366, %v1362
        %v1875 = vpack.c.b16 %v1371, %v1367
        %v1876 = vpack.c.b16 %v1372, %v1368
        %v1877 = vpack.c.b16 %v1373, %v1369
        %v1878 = vpack.c.b16 %v1374, %v1370
        %v1879 = vpack.c.b16 %v1379, %v1375
        %v1880 = vpack.c.b16 %v1380, %v1376
        %v1881 = vpack.c.b16 %v1381, %v1377
        %v1882 = vpack.c.b16 %v1382, %v1378
        %v1883 = vpack.c.b16 %v1387, %v1383
        %v1884 = vpack.c.b16 %v1388, %v1384
        %v1885 = vpack.c.b16 %v1389, %v1385
        %v1886 = vpack.c.b16 %v1390, %v1386
        %v1887 = vpack.c.b16 %v1395, %v1391
        %v1888 = vpack.c.b16 %v1396, %v1392
        %v1889 = vpack.c.b16 %v1397, %v1393
        %v1890 = vpack.c.b16 %v1398, %v1394
        %v1891 = vpack.c.b16 %v1403, %v1399
        %v1892 = vpack.c.b16 %v1404, %v1400
        %v1893 = vpack.c.b16 %v1405, %v1401
        %v1894 = vpack.c.b16 %v1406, %v1402
        %v1895 = vpack.c.b16 %v1411, %v1407
        %v1896 = vpack.c.b16 %v1412, %v1408
        %v1897 = vpack.c.b16 %v1413, %v1409
        %v1898 = vpack.c.b16 %v1414, %v1410
        %v1899 = vpack.c.b16 %v1419, %v1415
        %v1900 = vpack.c.b16 %v1420, %v1416
        %v1901 = vpack.c.b16 %v1421, %v1417
        %v1902 = vpack.c.b16 %v1422, %v1418
        %v1903 = vpack.c.b16 %v1427, %v1423
        %v1904 = vpack.c.b16 %v1428, %v1424
        %v1905 = vpack.c.b16 %v1429, %v1425
        %v1906 = vpack.c.b16 %v1430, %v1426
        %v1907 = vpack.c.b16 %v1435, %v1431
        %v1908 = vpack.c.b16 %v1436, %v1432
        %v1909 = vpack.c.b16 %v1437, %v1433
        %v1910 = vpack.c.b16 %v1438, %v1434
        %v1911 = vpack.c.b16 %v1443, %v1439
        %v1912 = vpack.c.b16 %v1444, %v1440
        %v1913 = vpack.c.b16 %v1445, %v1441
        %v1914 = vpack.c.b16 %v1446, %v1442
        %v1915 = vpack.c.b16 %v1451, %v1447
        %v1916 = vpack.c.b16 %v1452, %v1448
        %v1917 = vpack.c.b16 %v1453, %v1449
        %v1918 = vpack.c.b16 %v1454, %v1450
        %v1919 = vpack.c.b16 %v1459, %v1455
        %v1920 = vpack.c.b16 %v1460, %v1456
        %v1921 = vpack.c.b16 %v1461, %v1457
        %v1922 = vpack.c.b16 %v1462, %v1458
        %v1923 = vpack.c.b16 %v1467, %v1463
        %v1924 = vpack.c.b16 %v1468, %v1464
        %v1925 = vpack.c.b16 %v1469, %v1465
        %v1926 = vpack.c.b16 %v1470, %v1466
        %v1927 = vpack.c.b16 %v1475, %v1471
        %v1928 = vpack.c.b16 %v1476, %v1472
        %v1929 = vpack.c.b16 %v1477, %v1473
        %v1930 = vpack.c.b16 %v1478, %v1474
        %v1931 = vpack.c.b16 %v1483, %v1479
        %v1932 = vpack.c.b16 %v1484, %v1480
        %v1933 = vpack.c.b16 %v1485, %v1481
        %v1934 = vpack.c.b16 %v1486, %v1482
        %v1935 = vpack.c.b16 %v1491, %v1487
        %v1936 = vpack.c.b16 %v1492, %v1488
        %v1937 = vpack.c.b16 %v1493, %v1489
        %v1938 = vpack.c.b16 %v1494, %v1490
        %v1939 = vpack.c.b16 %v1499, %v1495
        %v1940 = vpack.c.b16 %v1500, %v1496
        %v1941 = vpack.c.b16 %v1501, %v1497
        %v1942 = vpack.c.b16 %v1502, %v1498
        %v1943 = vpack.c.b16 %v1507, %v1503
        %v1944 = vpack.c.b16 %v1508, %v1504
        %v1945 = vpack.c.b16 %v1509, %v1505
        %v1946 = vpack.c.b16 %v1510, %v1506
        %v1947 = vpack.c.b16 %v1515, %v1511
        %v1948 = vpack.c.b16 %v1516, %v1512
        %v1949 = vpack.c.b16 %v1517, %v1513
        %v1950 = vpack.c.b16 %v1518, %v1514
        %v1951 = vpack.c.b16 %v1523, %v1519
        %v1952 = vpack.c.b16 %v1524, %v1520
        %v1953 = vpack.c.b16 %v1525, %v1521
        %v1954 = vpack.c.b16 %v1526, %v1522
        %v1955 = vpack.c.b16 %v1531, %v1527
        %v1956 = vpack.c.b16 %v1532, %v1528
        %v1957 = vpack.c.b16 %v1533, %v1529
        %v1958 = vpack.c.b16 %v1534, %v1530
        %v1959 = vpack.c.b16 %v1539, %v1535
        %v1960 = vpack.c.b16 %v1540, %v1536
        %v1961 = vpack.c.b16 %v1541, %v1537
        %v1962 = vpack.c.b16 %v1542, %v1538
        %v1963 = vpack.c.b16 %v1547, %v1543
        %v1964 = vpack.c.b16 %v1548, %v1544
        %v1965 = vpack.c.b16 %v1549, %v1545
        %v1966 = vpack.c.b16 %v1550, %v1546
        %v1967 = vpack.c.b16 %v1555, %v1551
        %v1968 = vpack.c.b16 %v1556, %v1552
        %v1969 = vpack.c.b16 %v1557, %v1553
        %v1970 = vpack.c.b16 %v1558, %v1554
        %v1971 = vpack.c.b16 %v1563, %v1559
        %v1972 = vpack.c.b16 %v1564, %v1560
        %v1973 = vpack.c.b16 %v1565, %v1561
        %v1974 = vpack.c.b16 %v1566, %v1562
        %v1975 = vpack.c.b16 %v1571, %v1567
        %v1976 = vpack.c.b16 %v1572, %v1568
        %v1977 = vpack.c.b16 %v1573, %v1569
        %v1978 = vpack.c.b16 %v1574, %v1570
        %v1979 = vpack.c.b16 %v1579, %v1575
        %v1980 = vpack.c.b16 %v1580, %v1576
        %v1981 = vpack.c.b16 %v1581, %v1577
        %v1982 = vpack.c.b16 %v1582, %v1578
        %v1983 = vpack.c.b16 %v1587, %v1583
        %v1984 = vpack.c.b16 %v1588, %v1584
        %v1985 = vpack.c.b16 %v1589, %v1585
        %v1986 = vpack.c.b16 %v1590, %v1586
        %v1987 = vpack.c.b16 %v1595, %v1591
        %v1988 = vpack.c.b16 %v1596, %v1592
        %v1989 = vpack.c.b16 %v1597, %v1593
        %v1990 = vpack.c.b16 %v1598, %v1594
        %v1991 = vpack.c.b16 %v1603, %v1599
        %v1992 = vpack.c.b16 %v1604, %v1600
        %v1993 = vpack.c.b16 %v1605, %v1601
        %v1994 = vpack.c.b16 %v1606, %v1602
        %v1995 = vpack.c.b16 %v1611, %v1607
        %v1996 = vpack.c.b16 %v1612, %v1608
        %v1997 = vpack.c.b16 %v1613, %v1609
        %v1998 = vpack.c.b16 %v1614, %v1610
        %v1999 = vpack.c.b16 %v1619, %v1615
        %v2000 = vpack.c.b16 %v1620, %v1616
        %v2001 = vpack.c.b16 %v1621, %v1617
        %v2002 = vpack.c.b16 %v1622, %v1618
        %v2003 = vpack.c.b16 %v1627, %v1623
        %v2004 = vpack.c.b16 %v1628, %v1624
        %v2005 = vpack.c.b16 %v1629, %v1625
        %v2006 = vpack.c.b16 %v1630, %v1626
        %v2007 = vpack.c.b16 %v1635, %v1631
        %v2008 = vpack.c.b16 %v1636, %v1632
        %v2009 = vpack.c.b16 %v1637, %v1633
        %v2010 = vpack.c.b16 %v1638, %v1634
        %v2011 = vpack.c.b16 %v1643, %v1639
        %v2012 = vpack.c.b16 %v1644, %v1640
        %v2013 = vpack.c.b16 %v1645, %v1641
        %v2014 = vpack.c.b16 %v1646, %v1642
        %v2015 = vpack.c.b16 %v1651, %v1647
        %v2016 = vpack.c.b16 %v1652, %v1648
        %v2017 = vpack.c.b16 %v1653, %v1649
        %v2018 = vpack.c.b16 %v1654, %v1650
        %v2019 = vpack.c.b16 %v1659, %v1655
        %v2020 = vpack.c.b16 %v1660, %v1656
        %v2021 = vpack.c.b16 %v1661, %v1657
        %v2022 = vpack.c.b16 %v1662, %v1658
        %v2023 = vpack.c.b16 %v1667, %v1663
        %v2024 = vpack.c.b16 %v1668, %v1664
        %v2025 = vpack.c.b16 %v1669, %v1665
        %v2026 = vpack.c.b16 %v1670, %v1666
        %v2027 = vpack.c.b16 %v1675, %v1671
        %v2028 = vpack.c.b16 %v1676, %v1672
        %v2029 = vpack.c.b16 %v1677, %v1673
        %v2030 = vpack.c.b16 %v1678, %v1674
        %v2031 = vpack.c.b16 %v1683, %v1679
        %v2032 = vpack.c.b16 %v1684, %v1680
        %v2033 = vpack.c.b16 %v1685, %v1681
        %v2034 = vpack.c.b16 %v1686, %v1682
        %v2035 = vpack.c.b16 %v1691, %v1687
        %v2036 = vpack.c.b16 %v1692, %v1688
        %v2037 = vpack.c.b16 %v1693, %v1689
        %v2038 = vpack.c.b16 %v1694, %v1690
        %v2039 = vpack.c.b16 %v1699, %v1695
        %v2040 = vpack.c.b16 %v1700, %v1696
        %v2041 = vpack.c.b16 %v1701, %v1697
        %v2042 = vpack.c.b16 %v1702, %v1698
        %v2043 = vpack.c.b16 %v1707, %v1703
        %v2044 = vpack.c.b16 %v1708, %v1704
        %v2045 = vpack.c.b16 %v1709, %v1705
        %v2046 = vpack.c.b16 %v1710, %v1706
        %v2047 = vpack.c.b16 %v1715, %v1711
        %v2048 = vpack.c.b16 %v1716, %v1712
        %v2049 = vpack.c.b16 %v1717, %v1713
        %v2050 = vpack.c.b16 %v1718, %v1714
        %v2051 = vpack.c.b16 %v1723, %v1719
        %v2052 = vpack.c.b16 %v1724, %v1720
        %v2053 = vpack.c.b16 %v1725, %v1721
        %v2054 = vpack.c.b16 %v1726, %v1722
        %v2055 = vpack.c.b16 %v1731, %v1727
        %v2056 = vpack.c.b16 %v1732, %v1728
        %v2057 = vpack.c.b16 %v1733, %v1729
        %v2058 = vpack.c.b16 %v1734, %v1730
        %v2059 = vpack.c.b16 %v1739, %v1735
        %v2060 = vpack.c.b16 %v1740, %v1736
        %v2061 = vpack.c.b16 %v1741, %v1737
        %v2062 = vpack.c.b16 %v1742, %v1738
        %v2063 = vpack.c.b16 %v1747, %v1743
        %v2064 = vpack.c.b16 %v1748, %v1744
        %v2065 = vpack.c.b16 %v1749, %v1745
        %v2066 = vpack.c.b16 %v1750, %v1746
        %v2067 = vpack.c.b16 %v1755, %v1751
        %v2068 = vpack.c.b16 %v1756, %v1752
        %v2069 = vpack.c.b16 %v1757, %v1753
        %v2070 = vpack.c.b16 %v1758, %v1754
        %v2071 = vpack.c.b16 %v1763, %v1759
        %v2072 = vpack.c.b16 %v1764, %v1760
        %v2073 = vpack.c.b16 %v1765, %v1761
        %v2074 = vpack.c.b16 %v1766, %v1762
        %v2075 = vpack.c.b16 %v1771, %v1767
        %v2076 = vpack.c.b16 %v1772, %v1768
        %v2077 = vpack.c.b16 %v1773, %v1769
        %v2078 = vpack.c.b16 %v1774, %v1770
        %v2079 = vpack.c.b16 %v1779, %v1775
        %v2080 = vpack.c.b16 %v1780, %v1776
        %v2081 = vpack.c.b16 %v1781, %v1777
        %v2082 = vpack.c.b16 %v1782, %v1778
        %v2083 = vpack.c.b16 %v1787, %v1783
        %v2084 = vpack.c.b16 %v1788, %v1784
        %v2085 = vpack.c.b16 %v1789, %v1785
        %v2086 = vpack.c.b16 %v1790, %v1786
        %v2087 = vpack.c.b16 %v1795, %v1791
        %v2088 = vpack.c.b16 %v1796, %v1792
        %v2089 = vpack.c.b16 %v1797, %v1793
        %v2090 = vpack.c.b16 %v1798, %v1794
        %v2091 = vpack.c.b16 %v1803, %v1799
        %v2092 = vpack.c.b16 %v1804, %v1800
        %v2093 = vpack.c.b16 %v1805, %v1801
        %v2094 = vpack.c.b16 %v1806, %v1802
        %v2095 = vpack.c.b16 %v1811, %v1807
        %v2096 = vpack.c.b16 %v1812, %v1808
        %v2097 = vpack.c.b16 %v1813, %v1809
        %v2098 = vpack.c.b16 %v1814, %v1810
        %v2099 = vpack.c.b16 %v1819, %v1815
        %v2100 = vpack.c.b16 %v1820, %v1816
        %v2101 = vpack.c.b16 %v1821, %v1817
        %v2102 = vpack.c.b16 %v1822, %v1818
        %v2103 = vpack.c.b16 %v1827, %v1823
        %v2104 = vpack.c.b16 %v1828, %v1824
        %v2105 = vpack.c.b16 %v1829, %v1825
        %v2106 = vpack.c.b16 %v1830, %v1826
        %v2107 = vpack.c.b16 %v1835, %v1831
        %v2108 = vpack.c.b16 %v1836, %v1832
        %v2109 = vpack.c.b16 %v1837, %v1833
        %v2110 = vpack.c.b16 %v1838, %v1834
        %v2111 = vpack.c.b16 %v1843, %v1839
        %v2112 = vpack.c.b16 %v1844, %v1840
        %v2113 = vpack.c.b16 %v1845, %v1841
        %v2114 = vpack.c.b16 %v1846, %v1842
        %v2115 = vpack.c.b16 %v1851, %v1847
        %v2116 = vpack.c.b16 %v1852, %v1848
        %v2117 = vpack.c.b16 %v1853, %v1849
        %v2118 = vpack.c.b16 %v1854, %v1850
        %v2119 = vpack.c.b16 %v1859, %v1855
        %v2120 = vpack.c.b16 %v1860, %v1856
        %v2121 = vpack.c.b16 %v1861, %v1857
        %v2122 = vpack.c.b16 %v1862, %v1858
        %v2123 = vpack.c.b16 %v1867, %v1863
        %v2124 = vpack.c.b16 %v1868, %v1864
        %v2125 = vpack.c.b16 %v1869, %v1865
        %v2126 = vpack.c.b16 %v1870, %v1866
        %2383 = vmatpush.bf16.msra.mxu0 %v1899
        %2384 = vmatpush.bf16.msra.mxu0 %v1895
        %2385 = vmatpush.bf16.msra.mxu0 %v1891
        %2386 = vmatpush.bf16.msra.mxu0 %v1887
        %2387 = vmatpush.bf16.msra.mxu0 %v1883
        %2388 = vmatpush.bf16.msra.mxu0 %v1879
        %2389 = vmatpush.bf16.msra.mxu0 %v1875
        %2390 = vmatpush.bf16.msra.mxu0 %v1871
        %2391 = vmatmul.bf16.gmra.mxu0 %v975
        %v2392 = vpop.f32.mrf.mxu0
        %v2393 = vadd.f32 0.0, %v2392
        %v2394 = vpop.f32.mrf.mxu0
        %v2395 = vadd.f32 0.0, %v2394
        %2396 = vmatmul.bf16.gmra.mxu0 %v983
        %v2397 = vpop.f32.mrf.mxu0
        %v2398 = vadd.f32 0.0, %v2397
        %v2399 = vpop.f32.mrf.mxu0
        %v2400 = vadd.f32 0.0, %v2399
        %2401 = vmatmul.bf16.gmra.mxu0 %v991
        %v2402 = vpop.f32.mrf.mxu0
        %v2403 = vadd.f32 0.0, %v2402
        %v2404 = vpop.f32.mrf.mxu0
        %v2405 = vadd.f32 0.0, %v2404
        %2406 = vmatmul.bf16.gmra.mxu0 %v999
        %v2407 = vpop.f32.mrf.mxu0
        %v2408 = vadd.f32 0.0, %v2407
        %v2409 = vpop.f32.mrf.mxu0
        %v2410 = vadd.f32 0.0, %v2409
        %2411 = vmatmul.bf16.gmra.mxu0 %v1007
        %v2412 = vpop.f32.mrf.mxu0
        %v2413 = vadd.f32 0.0, %v2412
        %v2414 = vpop.f32.mrf.mxu0
        %v2415 = vadd.f32 0.0, %v2414
        %2416 = vmatmul.bf16.gmra.mxu0 %v1015
        %v2417 = vpop.f32.mrf.mxu0
        %v2418 = vadd.f32 0.0, %v2417
        %v2419 = vpop.f32.mrf.mxu0
        %v2420 = vadd.f32 0.0, %v2419
        %2421 = vmatmul.bf16.gmra.mxu0 %v1023
        %v2422 = vpop.f32.mrf.mxu0
        %v2423 = vadd.f32 0.0, %v2422
        %v2424 = vpop.f32.mrf.mxu0
        %v2425 = vadd.f32 0.0, %v2424
        %2426 = vmatmul.bf16.gmra.mxu0 %v1031
        %v2427 = vpop.f32.mrf.mxu0
        %v2428 = vadd.f32 0.0, %v2427
        %v2429 = vpop.f32.mrf.mxu0
        %v2430 = vadd.f32 0.0, %v2429
        %2431 = vdwg.mxu0
        %2432 = vmatpush.bf16.msra.mxu0 %v1931
        %2433 = vmatpush.bf16.msra.mxu0 %v1927
        %2434 = vmatpush.bf16.msra.mxu0 %v1923
        %2435 = vmatpush.bf16.msra.mxu0 %v1919
        %2436 = vmatpush.bf16.msra.mxu0 %v1915
        %2437 = vmatpush.bf16.msra.mxu0 %v1911
        %2438 = vmatpush.bf16.msra.mxu0 %v1907
        %2439 = vmatpush.bf16.msra.mxu0 %v1903
        %2440 = vmatmul.bf16.gmra.mxu0 %v976
        %v2441 = vpop.f32.mrf.mxu0
        %v2442 = vadd.f32 %v2393, %v2441
        %v2443 = vpop.f32.mrf.mxu0
        %v2444 = vadd.f32 %v2395, %v2443
        %2445 = vmatmul.bf16.gmra.mxu0 %v984
        %v2446 = vpop.f32.mrf.mxu0
        %v2447 = vadd.f32 %v2398, %v2446
        %v2448 = vpop.f32.mrf.mxu0
        %v2449 = vadd.f32 %v2400, %v2448
        %2450 = vmatmul.bf16.gmra.mxu0 %v992
        %v2451 = vpop.f32.mrf.mxu0
        %v2452 = vadd.f32 %v2403, %v2451
        %v2453 = vpop.f32.mrf.mxu0
        %v2454 = vadd.f32 %v2405, %v2453
        %2455 = vmatmul.bf16.gmra.mxu0 %v1000
        %v2456 = vpop.f32.mrf.mxu0
        %v2457 = vadd.f32 %v2408, %v2456
        %v2458 = vpop.f32.mrf.mxu0
        %v2459 = vadd.f32 %v2410, %v2458
        %2460 = vmatmul.bf16.gmra.mxu0 %v1008
        %v2461 = vpop.f32.mrf.mxu0
        %v2462 = vadd.f32 %v2413, %v2461
        %v2463 = vpop.f32.mrf.mxu0
        %v2464 = vadd.f32 %v2415, %v2463
        %2465 = vmatmul.bf16.gmra.mxu0 %v1016
        %v2466 = vpop.f32.mrf.mxu0
        %v2467 = vadd.f32 %v2418, %v2466
        %v2468 = vpop.f32.mrf.mxu0
        %v2469 = vadd.f32 %v2420, %v2468
        %2470 = vmatmul.bf16.gmra.mxu0 %v1024
        %v2471 = vpop.f32.mrf.mxu0
        %v2472 = vadd.f32 %v2423, %v2471
        %v2473 = vpop.f32.mrf.mxu0
        %v2474 = vadd.f32 %v2425, %v2473
        %2475 = vmatmul.bf16.gmra.mxu0 %v1032
        %v2476 = vpop.f32.mrf.mxu0
        %v2477 = vadd.f32 %v2428, %v2476
        %v2478 = vpop.f32.mrf.mxu0
        %v2479 = vadd.f32 %v2430, %v2478
        %2480 = vdwg.mxu0
        %2481 = vmatpush.bf16.msra.mxu0 %v1963
        %2482 = vmatpush.bf16.msra.mxu0 %v1959
        %2483 = vmatpush.bf16.msra.mxu0 %v1955
        %2484 = vmatpush.bf16.msra.mxu0 %v1951
        %2485 = vmatpush.bf16.msra.mxu0 %v1947
        %2486 = vmatpush.bf16.msra.mxu0 %v1943
        %2487 = vmatpush.bf16.msra.mxu0 %v1939
        %2488 = vmatpush.bf16.msra.mxu0 %v1935
        %2489 = vmatmul.bf16.gmra.mxu0 %v977
        %v2490 = vpop.f32.mrf.mxu0
        %v2491 = vadd.f32 %v2442, %v2490
        %v2492 = vpop.f32.mrf.mxu0
        %v2493 = vadd.f32 %v2444, %v2492
        %2494 = vmatmul.bf16.gmra.mxu0 %v985
        %v2495 = vpop.f32.mrf.mxu0
        %v2496 = vadd.f32 %v2447, %v2495
        %v2497 = vpop.f32.mrf.mxu0
        %v2498 = vadd.f32 %v2449, %v2497
        %2499 = vmatmul.bf16.gmra.mxu0 %v993
        %v2500 = vpop.f32.mrf.mxu0
        %v2501 = vadd.f32 %v2452, %v2500
        %v2502 = vpop.f32.mrf.mxu0
        %v2503 = vadd.f32 %v2454, %v2502
        %2504 = vmatmul.bf16.gmra.mxu0 %v1001
        %v2505 = vpop.f32.mrf.mxu0
        %v2506 = vadd.f32 %v2457, %v2505
        %v2507 = vpop.f32.mrf.mxu0
        %v2508 = vadd.f32 %v2459, %v2507
        %2509 = vmatmul.bf16.gmra.mxu0 %v1009
        %v2510 = vpop.f32.mrf.mxu0
        %v2511 = vadd.f32 %v2462, %v2510
        %v2512 = vpop.f32.mrf.mxu0
        %v2513 = vadd.f32 %v2464, %v2512
        %2514 = vmatmul.bf16.gmra.mxu0 %v1017
        %v2515 = vpop.f32.mrf.mxu0
        %v2516 = vadd.f32 %v2467, %v2515
        %v2517 = vpop.f32.mrf.mxu0
        %v2518 = vadd.f32 %v2469, %v2517
        %2519 = vmatmul.bf16.gmra.mxu0 %v1025
        %v2520 = vpop.f32.mrf.mxu0
        %v2521 = vadd.f32 %v2472, %v2520
        %v2522 = vpop.f32.mrf.mxu0
        %v2523 = vadd.f32 %v2474, %v2522
        %2524 = vmatmul.bf16.gmra.mxu0 %v1033
        %v2525 = vpop.f32.mrf.mxu0
        %v2526 = vadd.f32 %v2477, %v2525
        %v2527 = vpop.f32.mrf.mxu0
        %v2528 = vadd.f32 %v2479, %v2527
        %2529 = vdwg.mxu0
        %2530 = vmatpush.bf16.msra.mxu0 %v1995
        %2531 = vmatpush.bf16.msra.mxu0 %v1991
        %2532 = vmatpush.bf16.msra.mxu0 %v1987
        %2533 = vmatpush.bf16.msra.mxu0 %v1983
        %2534 = vmatpush.bf16.msra.mxu0 %v1979
        %2535 = vmatpush.bf16.msra.mxu0 %v1975
        %2536 = vmatpush.bf16.msra.mxu0 %v1971
        %2537 = vmatpush.bf16.msra.mxu0 %v1967
        %2538 = vmatmul.bf16.gmra.mxu0 %v978
        %v2539 = vpop.f32.mrf.mxu0
        %v2540 = vadd.f32 %v2491, %v2539
        %v2541 = vpop.f32.mrf.mxu0
        %v2542 = vadd.f32 %v2493, %v2541
        %2543 = vmatmul.bf16.gmra.mxu0 %v986
        %v2544 = vpop.f32.mrf.mxu0
        %v2545 = vadd.f32 %v2496, %v2544
        %v2546 = vpop.f32.mrf.mxu0
        %v2547 = vadd.f32 %v2498, %v2546
        %2548 = vmatmul.bf16.gmra.mxu0 %v994
        %v2549 = vpop.f32.mrf.mxu0
        %v2550 = vadd.f32 %v2501, %v2549
        %v2551 = vpop.f32.mrf.mxu0
        %v2552 = vadd.f32 %v2503, %v2551
        %2553 = vmatmul.bf16.gmra.mxu0 %v1002
        %v2554 = vpop.f32.mrf.mxu0
        %v2555 = vadd.f32 %v2506, %v2554
        %v2556 = vpop.f32.mrf.mxu0
        %v2557 = vadd.f32 %v2508, %v2556
        %2558 = vmatmul.bf16.gmra.mxu0 %v1010
        %v2559 = vpop.f32.mrf.mxu0
        %v2560 = vadd.f32 %v2511, %v2559
        %v2561 = vpop.f32.mrf.mxu0
        %v2562 = vadd.f32 %v2513, %v2561
        %2563 = vmatmul.bf16.gmra.mxu0 %v1018
        %v2564 = vpop.f32.mrf.mxu0
        %v2565 = vadd.f32 %v2516, %v2564
        %v2566 = vpop.f32.mrf.mxu0
        %v2567 = vadd.f32 %v2518, %v2566
        %2568 = vmatmul.bf16.gmra.mxu0 %v1026
        %v2569 = vpop.f32.mrf.mxu0
        %v2570 = vadd.f32 %v2521, %v2569
        %v2571 = vpop.f32.mrf.mxu0
        %v2572 = vadd.f32 %v2523, %v2571
        %2573 = vmatmul.bf16.gmra.mxu0 %v1034
        %v2574 = vpop.f32.mrf.mxu0
        %v2575 = vadd.f32 %v2526, %v2574
        %v2576 = vpop.f32.mrf.mxu0
        %v2577 = vadd.f32 %v2528, %v2576
        %2578 = vdwg.mxu0
        %2579 = vmatpush.bf16.msra.mxu0 %v2027
        %2580 = vmatpush.bf16.msra.mxu0 %v2023
        %2581 = vmatpush.bf16.msra.mxu0 %v2019
        %2582 = vmatpush.bf16.msra.mxu0 %v2015
        %2583 = vmatpush.bf16.msra.mxu0 %v2011
        %2584 = vmatpush.bf16.msra.mxu0 %v2007
        %2585 = vmatpush.bf16.msra.mxu0 %v2003
        %2586 = vmatpush.bf16.msra.mxu0 %v1999
        %2587 = vmatmul.bf16.gmra.mxu0 %v979
        %v2588 = vpop.f32.mrf.mxu0
        %v2589 = vadd.f32 %v2540, %v2588
        %v2590 = vpop.f32.mrf.mxu0
        %v2591 = vadd.f32 %v2542, %v2590
        %2592 = vmatmul.bf16.gmra.mxu0 %v987
        %v2593 = vpop.f32.mrf.mxu0
        %v2594 = vadd.f32 %v2545, %v2593
        %v2595 = vpop.f32.mrf.mxu0
        %v2596 = vadd.f32 %v2547, %v2595
        %2597 = vmatmul.bf16.gmra.mxu0 %v995
        %v2598 = vpop.f32.mrf.mxu0
        %v2599 = vadd.f32 %v2550, %v2598
        %v2600 = vpop.f32.mrf.mxu0
        %v2601 = vadd.f32 %v2552, %v2600
        %2602 = vmatmul.bf16.gmra.mxu0 %v1003
        %v2603 = vpop.f32.mrf.mxu0
        %v2604 = vadd.f32 %v2555, %v2603
        %v2605 = vpop.f32.mrf.mxu0
        %v2606 = vadd.f32 %v2557, %v2605
        %2607 = vmatmul.bf16.gmra.mxu0 %v1011
        %v2608 = vpop.f32.mrf.mxu0
        %v2609 = vadd.f32 %v2560, %v2608
        %v2610 = vpop.f32.mrf.mxu0
        %v2611 = vadd.f32 %v2562, %v2610
        %2612 = vmatmul.bf16.gmra.mxu0 %v1019
        %v2613 = vpop.f32.mrf.mxu0
        %v2614 = vadd.f32 %v2565, %v2613
        %v2615 = vpop.f32.mrf.mxu0
        %v2616 = vadd.f32 %v2567, %v2615
        %2617 = vmatmul.bf16.gmra.mxu0 %v1027
        %v2618 = vpop.f32.mrf.mxu0
        %v2619 = vadd.f32 %v2570, %v2618
        %v2620 = vpop.f32.mrf.mxu0
        %v2621 = vadd.f32 %v2572, %v2620
        %2622 = vmatmul.bf16.gmra.mxu0 %v1035
        %v2623 = vpop.f32.mrf.mxu0
        %v2624 = vadd.f32 %v2575, %v2623
        %v2625 = vpop.f32.mrf.mxu0
        %v2626 = vadd.f32 %v2577, %v2625
        %2627 = vdwg.mxu0
        %2628 = vmatpush.bf16.msra.mxu0 %v2059
        %2629 = vmatpush.bf16.msra.mxu0 %v2055
        %2630 = vmatpush.bf16.msra.mxu0 %v2051
        %2631 = vmatpush.bf16.msra.mxu0 %v2047
        %2632 = vmatpush.bf16.msra.mxu0 %v2043
        %2633 = vmatpush.bf16.msra.mxu0 %v2039
        %2634 = vmatpush.bf16.msra.mxu0 %v2035
        %2635 = vmatpush.bf16.msra.mxu0 %v2031
        %2636 = vmatmul.bf16.gmra.mxu0 %v980
        %v2637 = vpop.f32.mrf.mxu0
        %v2638 = vadd.f32 %v2589, %v2637
        %v2639 = vpop.f32.mrf.mxu0
        %v2640 = vadd.f32 %v2591, %v2639
        %2641 = vmatmul.bf16.gmra.mxu0 %v988
        %v2642 = vpop.f32.mrf.mxu0
        %v2643 = vadd.f32 %v2594, %v2642
        %v2644 = vpop.f32.mrf.mxu0
        %v2645 = vadd.f32 %v2596, %v2644
        %2646 = vmatmul.bf16.gmra.mxu0 %v996
        %v2647 = vpop.f32.mrf.mxu0
        %v2648 = vadd.f32 %v2599, %v2647
        %v2649 = vpop.f32.mrf.mxu0
        %v2650 = vadd.f32 %v2601, %v2649
        %2651 = vmatmul.bf16.gmra.mxu0 %v1004
        %v2652 = vpop.f32.mrf.mxu0
        %v2653 = vadd.f32 %v2604, %v2652
        %v2654 = vpop.f32.mrf.mxu0
        %v2655 = vadd.f32 %v2606, %v2654
        %2656 = vmatmul.bf16.gmra.mxu0 %v1012
        %v2657 = vpop.f32.mrf.mxu0
        %v2658 = vadd.f32 %v2609, %v2657
        %v2659 = vpop.f32.mrf.mxu0
        %v2660 = vadd.f32 %v2611, %v2659
        %2661 = vmatmul.bf16.gmra.mxu0 %v1020
        %v2662 = vpop.f32.mrf.mxu0
        %v2663 = vadd.f32 %v2614, %v2662
        %v2664 = vpop.f32.mrf.mxu0
        %v2665 = vadd.f32 %v2616, %v2664
        %2666 = vmatmul.bf16.gmra.mxu0 %v1028
        %v2667 = vpop.f32.mrf.mxu0
        %v2668 = vadd.f32 %v2619, %v2667
        %v2669 = vpop.f32.mrf.mxu0
        %v2670 = vadd.f32 %v2621, %v2669
        %2671 = vmatmul.bf16.gmra.mxu0 %v1036
        %v2672 = vpop.f32.mrf.mxu0
        %v2673 = vadd.f32 %v2624, %v2672
        %v2674 = vpop.f32.mrf.mxu0
        %v2675 = vadd.f32 %v2626, %v2674
        %2676 = vdwg.mxu0
        %2677 = vmatpush.bf16.msra.mxu0 %v2091
        %2678 = vmatpush.bf16.msra.mxu0 %v2087
        %2679 = vmatpush.bf16.msra.mxu0 %v2083
        %2680 = vmatpush.bf16.msra.mxu0 %v2079
        %2681 = vmatpush.bf16.msra.mxu0 %v2075
        %2682 = vmatpush.bf16.msra.mxu0 %v2071
        %2683 = vmatpush.bf16.msra.mxu0 %v2067
        %2684 = vmatpush.bf16.msra.mxu0 %v2063
        %2685 = vmatmul.bf16.gmra.mxu0 %v981
        %v2686 = vpop.f32.mrf.mxu0
        %v2687 = vadd.f32 %v2638, %v2686
        %v2688 = vpop.f32.mrf.mxu0
        %v2689 = vadd.f32 %v2640, %v2688
        %2690 = vmatmul.bf16.gmra.mxu0 %v989
        %v2691 = vpop.f32.mrf.mxu0
        %v2692 = vadd.f32 %v2643, %v2691
        %v2693 = vpop.f32.mrf.mxu0
        %v2694 = vadd.f32 %v2645, %v2693
        %2695 = vmatmul.bf16.gmra.mxu0 %v997
        %v2696 = vpop.f32.mrf.mxu0
        %v2697 = vadd.f32 %v2648, %v2696
        %v2698 = vpop.f32.mrf.mxu0
        %v2699 = vadd.f32 %v2650, %v2698
        %2700 = vmatmul.bf16.gmra.mxu0 %v1005
        %v2701 = vpop.f32.mrf.mxu0
        %v2702 = vadd.f32 %v2653, %v2701
        %v2703 = vpop.f32.mrf.mxu0
        %v2704 = vadd.f32 %v2655, %v2703
        %2705 = vmatmul.bf16.gmra.mxu0 %v1013
        %v2706 = vpop.f32.mrf.mxu0
        %v2707 = vadd.f32 %v2658, %v2706
        %v2708 = vpop.f32.mrf.mxu0
        %v2709 = vadd.f32 %v2660, %v2708
        %2710 = vmatmul.bf16.gmra.mxu0 %v1021
        %v2711 = vpop.f32.mrf.mxu0
        %v2712 = vadd.f32 %v2663, %v2711
        %v2713 = vpop.f32.mrf.mxu0
        %v2714 = vadd.f32 %v2665, %v2713
        %2715 = vmatmul.bf16.gmra.mxu0 %v1029
        %v2716 = vpop.f32.mrf.mxu0
        %v2717 = vadd.f32 %v2668, %v2716
        %v2718 = vpop.f32.mrf.mxu0
        %v2719 = vadd.f32 %v2670, %v2718
        %2720 = vmatmul.bf16.gmra.mxu0 %v1037
        %v2721 = vpop.f32.mrf.mxu0
        %v2722 = vadd.f32 %v2673, %v2721
        %v2723 = vpop.f32.mrf.mxu0
        %v2724 = vadd.f32 %v2675, %v2723
        %2725 = vdwg.mxu0
        %2726 = vmatpush.bf16.msra.mxu0 %v2123
        %2727 = vmatpush.bf16.msra.mxu0 %v2119
        %2728 = vmatpush.bf16.msra.mxu0 %v2115
        %2729 = vmatpush.bf16.msra.mxu0 %v2111
        %2730 = vmatpush.bf16.msra.mxu0 %v2107
        %2731 = vmatpush.bf16.msra.mxu0 %v2103
        %2732 = vmatpush.bf16.msra.mxu0 %v2099
        %2733 = vmatpush.bf16.msra.mxu0 %v2095
        %2734 = vmatmul.bf16.gmra.mxu0 %v982
        %v2735 = vpop.f32.mrf.mxu0
        %v2736 = vadd.f32 %v2687, %v2735
        %v2737 = vpop.f32.mrf.mxu0
        %v2738 = vadd.f32 %v2689, %v2737
        %2739 = vmatmul.bf16.gmra.mxu0 %v990
        %v2740 = vpop.f32.mrf.mxu0
        %v2741 = vadd.f32 %v2692, %v2740
        %v2742 = vpop.f32.mrf.mxu0
        %v2743 = vadd.f32 %v2694, %v2742
        %2744 = vmatmul.bf16.gmra.mxu0 %v998
        %v2745 = vpop.f32.mrf.mxu0
        %v2746 = vadd.f32 %v2697, %v2745
        %v2747 = vpop.f32.mrf.mxu0
        %v2748 = vadd.f32 %v2699, %v2747
        %2749 = vmatmul.bf16.gmra.mxu0 %v1006
        %v2750 = vpop.f32.mrf.mxu0
        %v2751 = vadd.f32 %v2702, %v2750
        %v2752 = vpop.f32.mrf.mxu0
        %v2753 = vadd.f32 %v2704, %v2752
        %2754 = vmatmul.bf16.gmra.mxu0 %v1014
        %v2755 = vpop.f32.mrf.mxu0
        %v2756 = vadd.f32 %v2707, %v2755
        %v2757 = vpop.f32.mrf.mxu0
        %v2758 = vadd.f32 %v2709, %v2757
        %2759 = vmatmul.bf16.gmra.mxu0 %v1022
        %v2760 = vpop.f32.mrf.mxu0
        %v2761 = vadd.f32 %v2712, %v2760
        %v2762 = vpop.f32.mrf.mxu0
        %v2763 = vadd.f32 %v2714, %v2762
        %2764 = vmatmul.bf16.gmra.mxu0 %v1030
        %v2765 = vpop.f32.mrf.mxu0
        %v2766 = vadd.f32 %v2717, %v2765
        %v2767 = vpop.f32.mrf.mxu0
        %v2768 = vadd.f32 %v2719, %v2767
        %2769 = vmatmul.bf16.gmra.mxu0 %v1038
        %v2770 = vpop.f32.mrf.mxu0
        %v2771 = vadd.f32 %v2722, %v2770
        %v2772 = vpop.f32.mrf.mxu0
        %v2773 = vadd.f32 %v2724, %v2772
        %2774 = vdwg.mxu0
        %2775 = vmatpush.bf16.msra.mxu0 %v1900
        %2776 = vmatpush.bf16.msra.mxu0 %v1896
        %2777 = vmatpush.bf16.msra.mxu0 %v1892
        %2778 = vmatpush.bf16.msra.mxu0 %v1888
        %2779 = vmatpush.bf16.msra.mxu0 %v1884
        %2780 = vmatpush.bf16.msra.mxu0 %v1880
        %2781 = vmatpush.bf16.msra.mxu0 %v1876
        %2782 = vmatpush.bf16.msra.mxu0 %v1872
        %2783 = vmatmul.bf16.gmra.mxu0 %v975
        %v2784 = vpop.f32.mrf.mxu0
        %v2785 = vadd.f32 0.0, %v2784
        %v2786 = vpop.f32.mrf.mxu0
        %v2787 = vadd.f32 0.0, %v2786
        %2788 = vmatmul.bf16.gmra.mxu0 %v983
        %v2789 = vpop.f32.mrf.mxu0
        %v2790 = vadd.f32 0.0, %v2789
        %v2791 = vpop.f32.mrf.mxu0
        %v2792 = vadd.f32 0.0, %v2791
        %2793 = vmatmul.bf16.gmra.mxu0 %v991
        %v2794 = vpop.f32.mrf.mxu0
        %v2795 = vadd.f32 0.0, %v2794
        %v2796 = vpop.f32.mrf.mxu0
        %v2797 = vadd.f32 0.0, %v2796
        %2798 = vmatmul.bf16.gmra.mxu0 %v999
        %v2799 = vpop.f32.mrf.mxu0
        %v2800 = vadd.f32 0.0, %v2799
        %v2801 = vpop.f32.mrf.mxu0
        %v2802 = vadd.f32 0.0, %v2801
        %2803 = vmatmul.bf16.gmra.mxu0 %v1007
        %v2804 = vpop.f32.mrf.mxu0
        %v2805 = vadd.f32 0.0, %v2804
        %v2806 = vpop.f32.mrf.mxu0
        %v2807 = vadd.f32 0.0, %v2806
        %2808 = vmatmul.bf16.gmra.mxu0 %v1015
        %v2809 = vpop.f32.mrf.mxu0
        %v2810 = vadd.f32 0.0, %v2809
        %v2811 = vpop.f32.mrf.mxu0
        %v2812 = vadd.f32 0.0, %v2811
        %2813 = vmatmul.bf16.gmra.mxu0 %v1023
        %v2814 = vpop.f32.mrf.mxu0
        %v2815 = vadd.f32 0.0, %v2814
        %v2816 = vpop.f32.mrf.mxu0
        %v2817 = vadd.f32 0.0, %v2816
        %2818 = vmatmul.bf16.gmra.mxu0 %v1031
        %v2819 = vpop.f32.mrf.mxu0
        %v2820 = vadd.f32 0.0, %v2819
        %v2821 = vpop.f32.mrf.mxu0
        %v2822 = vadd.f32 0.0, %v2821
        %2823 = vdwg.mxu0
        %2824 = vmatpush.bf16.msra.mxu0 %v1932
        %2825 = vmatpush.bf16.msra.mxu0 %v1928
        %2826 = vmatpush.bf16.msra.mxu0 %v1924
        %2827 = vmatpush.bf16.msra.mxu0 %v1920
        %2828 = vmatpush.bf16.msra.mxu0 %v1916
        %2829 = vmatpush.bf16.msra.mxu0 %v1912
        %2830 = vmatpush.bf16.msra.mxu0 %v1908
        %2831 = vmatpush.bf16.msra.mxu0 %v1904
        %2832 = vmatmul.bf16.gmra.mxu0 %v976
        %v2833 = vpop.f32.mrf.mxu0
        %v2834 = vadd.f32 %v2785, %v2833
        %v2835 = vpop.f32.mrf.mxu0
        %v2836 = vadd.f32 %v2787, %v2835
        %2837 = vmatmul.bf16.gmra.mxu0 %v984
        %v2838 = vpop.f32.mrf.mxu0
        %v2839 = vadd.f32 %v2790, %v2838
        %v2840 = vpop.f32.mrf.mxu0
        %v2841 = vadd.f32 %v2792, %v2840
        %2842 = vmatmul.bf16.gmra.mxu0 %v992
        %v2843 = vpop.f32.mrf.mxu0
        %v2844 = vadd.f32 %v2795, %v2843
        %v2845 = vpop.f32.mrf.mxu0
        %v2846 = vadd.f32 %v2797, %v2845
        %2847 = vmatmul.bf16.gmra.mxu0 %v1000
        %v2848 = vpop.f32.mrf.mxu0
        %v2849 = vadd.f32 %v2800, %v2848
        %v2850 = vpop.f32.mrf.mxu0
        %v2851 = vadd.f32 %v2802, %v2850
        %2852 = vmatmul.bf16.gmra.mxu0 %v1008
        %v2853 = vpop.f32.mrf.mxu0
        %v2854 = vadd.f32 %v2805, %v2853
        %v2855 = vpop.f32.mrf.mxu0
        %v2856 = vadd.f32 %v2807, %v2855
        %2857 = vmatmul.bf16.gmra.mxu0 %v1016
        %v2858 = vpop.f32.mrf.mxu0
        %v2859 = vadd.f32 %v2810, %v2858
        %v2860 = vpop.f32.mrf.mxu0
        %v2861 = vadd.f32 %v2812, %v2860
        %2862 = vmatmul.bf16.gmra.mxu0 %v1024
        %v2863 = vpop.f32.mrf.mxu0
        %v2864 = vadd.f32 %v2815, %v2863
        %v2865 = vpop.f32.mrf.mxu0
        %v2866 = vadd.f32 %v2817, %v2865
        %2867 = vmatmul.bf16.gmra.mxu0 %v1032
        %v2868 = vpop.f32.mrf.mxu0
        %v2869 = vadd.f32 %v2820, %v2868
        %v2870 = vpop.f32.mrf.mxu0
        %v2871 = vadd.f32 %v2822, %v2870
        %2872 = vdwg.mxu0
        %2873 = vmatpush.bf16.msra.mxu0 %v1964
        %2874 = vmatpush.bf16.msra.mxu0 %v1960
        %2875 = vmatpush.bf16.msra.mxu0 %v1956
        %2876 = vmatpush.bf16.msra.mxu0 %v1952
        %2877 = vmatpush.bf16.msra.mxu0 %v1948
        %2878 = vmatpush.bf16.msra.mxu0 %v1944
        %2879 = vmatpush.bf16.msra.mxu0 %v1940
        %2880 = vmatpush.bf16.msra.mxu0 %v1936
        %2881 = vmatmul.bf16.gmra.mxu0 %v977
        %v2882 = vpop.f32.mrf.mxu0
        %v2883 = vadd.f32 %v2834, %v2882
        %v2884 = vpop.f32.mrf.mxu0
        %v2885 = vadd.f32 %v2836, %v2884
        %2886 = vmatmul.bf16.gmra.mxu0 %v985
        %v2887 = vpop.f32.mrf.mxu0
        %v2888 = vadd.f32 %v2839, %v2887
        %v2889 = vpop.f32.mrf.mxu0
        %v2890 = vadd.f32 %v2841, %v2889
        %2891 = vmatmul.bf16.gmra.mxu0 %v993
        %v2892 = vpop.f32.mrf.mxu0
        %v2893 = vadd.f32 %v2844, %v2892
        %v2894 = vpop.f32.mrf.mxu0
        %v2895 = vadd.f32 %v2846, %v2894
        %2896 = vmatmul.bf16.gmra.mxu0 %v1001
        %v2897 = vpop.f32.mrf.mxu0
        %v2898 = vadd.f32 %v2849, %v2897
        %v2899 = vpop.f32.mrf.mxu0
        %v2900 = vadd.f32 %v2851, %v2899
        %2901 = vmatmul.bf16.gmra.mxu0 %v1009
        %v2902 = vpop.f32.mrf.mxu0
        %v2903 = vadd.f32 %v2854, %v2902
        %v2904 = vpop.f32.mrf.mxu0
        %v2905 = vadd.f32 %v2856, %v2904
        %2906 = vmatmul.bf16.gmra.mxu0 %v1017
        %v2907 = vpop.f32.mrf.mxu0
        %v2908 = vadd.f32 %v2859, %v2907
        %v2909 = vpop.f32.mrf.mxu0
        %v2910 = vadd.f32 %v2861, %v2909
        %2911 = vmatmul.bf16.gmra.mxu0 %v1025
        %v2912 = vpop.f32.mrf.mxu0
        %v2913 = vadd.f32 %v2864, %v2912
        %v2914 = vpop.f32.mrf.mxu0
        %v2915 = vadd.f32 %v2866, %v2914
        %2916 = vmatmul.bf16.gmra.mxu0 %v1033
        %v2917 = vpop.f32.mrf.mxu0
        %v2918 = vadd.f32 %v2869, %v2917
        %v2919 = vpop.f32.mrf.mxu0
        %v2920 = vadd.f32 %v2871, %v2919
        %2921 = vdwg.mxu0
        %2922 = vmatpush.bf16.msra.mxu0 %v1996
        %2923 = vmatpush.bf16.msra.mxu0 %v1992
        %2924 = vmatpush.bf16.msra.mxu0 %v1988
        %2925 = vmatpush.bf16.msra.mxu0 %v1984
        %2926 = vmatpush.bf16.msra.mxu0 %v1980
        %2927 = vmatpush.bf16.msra.mxu0 %v1976
        %2928 = vmatpush.bf16.msra.mxu0 %v1972
        %2929 = vmatpush.bf16.msra.mxu0 %v1968
        %2930 = vmatmul.bf16.gmra.mxu0 %v978
        %v2931 = vpop.f32.mrf.mxu0
        %v2932 = vadd.f32 %v2883, %v2931
        %v2933 = vpop.f32.mrf.mxu0
        %v2934 = vadd.f32 %v2885, %v2933
        %2935 = vmatmul.bf16.gmra.mxu0 %v986
        %v2936 = vpop.f32.mrf.mxu0
        %v2937 = vadd.f32 %v2888, %v2936
        %v2938 = vpop.f32.mrf.mxu0
        %v2939 = vadd.f32 %v2890, %v2938
        %2940 = vmatmul.bf16.gmra.mxu0 %v994
        %v2941 = vpop.f32.mrf.mxu0
        %v2942 = vadd.f32 %v2893, %v2941
        %v2943 = vpop.f32.mrf.mxu0
        %v2944 = vadd.f32 %v2895, %v2943
        %2945 = vmatmul.bf16.gmra.mxu0 %v1002
        %v2946 = vpop.f32.mrf.mxu0
        %v2947 = vadd.f32 %v2898, %v2946
        %v2948 = vpop.f32.mrf.mxu0
        %v2949 = vadd.f32 %v2900, %v2948
        %2950 = vmatmul.bf16.gmra.mxu0 %v1010
        %v2951 = vpop.f32.mrf.mxu0
        %v2952 = vadd.f32 %v2903, %v2951
        %v2953 = vpop.f32.mrf.mxu0
        %v2954 = vadd.f32 %v2905, %v2953
        %2955 = vmatmul.bf16.gmra.mxu0 %v1018
        %v2956 = vpop.f32.mrf.mxu0
        %v2957 = vadd.f32 %v2908, %v2956
        %v2958 = vpop.f32.mrf.mxu0
        %v2959 = vadd.f32 %v2910, %v2958
        %2960 = vmatmul.bf16.gmra.mxu0 %v1026
        %v2961 = vpop.f32.mrf.mxu0
        %v2962 = vadd.f32 %v2913, %v2961
        %v2963 = vpop.f32.mrf.mxu0
        %v2964 = vadd.f32 %v2915, %v2963
        %2965 = vmatmul.bf16.gmra.mxu0 %v1034
        %v2966 = vpop.f32.mrf.mxu0
        %v2967 = vadd.f32 %v2918, %v2966
        %v2968 = vpop.f32.mrf.mxu0
        %v2969 = vadd.f32 %v2920, %v2968
        %2970 = vdwg.mxu0
        %2971 = vmatpush.bf16.msra.mxu0 %v2028
        %2972 = vmatpush.bf16.msra.mxu0 %v2024
        %2973 = vmatpush.bf16.msra.mxu0 %v2020
        %2974 = vmatpush.bf16.msra.mxu0 %v2016
        %2975 = vmatpush.bf16.msra.mxu0 %v2012
        %2976 = vmatpush.bf16.msra.mxu0 %v2008
        %2977 = vmatpush.bf16.msra.mxu0 %v2004
        %2978 = vmatpush.bf16.msra.mxu0 %v2000
        %2979 = vmatmul.bf16.gmra.mxu0 %v979
        %v2980 = vpop.f32.mrf.mxu0
        %v2981 = vadd.f32 %v2932, %v2980
        %v2982 = vpop.f32.mrf.mxu0
        %v2983 = vadd.f32 %v2934, %v2982
        %2984 = vmatmul.bf16.gmra.mxu0 %v987
        %v2985 = vpop.f32.mrf.mxu0
        %v2986 = vadd.f32 %v2937, %v2985
        %v2987 = vpop.f32.mrf.mxu0
        %v2988 = vadd.f32 %v2939, %v2987
        %2989 = vmatmul.bf16.gmra.mxu0 %v995
        %v2990 = vpop.f32.mrf.mxu0
        %v2991 = vadd.f32 %v2942, %v2990
        %v2992 = vpop.f32.mrf.mxu0
        %v2993 = vadd.f32 %v2944, %v2992
        %2994 = vmatmul.bf16.gmra.mxu0 %v1003
        %v2995 = vpop.f32.mrf.mxu0
        %v2996 = vadd.f32 %v2947, %v2995
        %v2997 = vpop.f32.mrf.mxu0
        %v2998 = vadd.f32 %v2949, %v2997
        %2999 = vmatmul.bf16.gmra.mxu0 %v1011
        %v3000 = vpop.f32.mrf.mxu0
        %v3001 = vadd.f32 %v2952, %v3000
        %v3002 = vpop.f32.mrf.mxu0
        %v3003 = vadd.f32 %v2954, %v3002
        %3004 = vmatmul.bf16.gmra.mxu0 %v1019
        %v3005 = vpop.f32.mrf.mxu0
        %v3006 = vadd.f32 %v2957, %v3005
        %v3007 = vpop.f32.mrf.mxu0
        %v3008 = vadd.f32 %v2959, %v3007
        %3009 = vmatmul.bf16.gmra.mxu0 %v1027
        %v3010 = vpop.f32.mrf.mxu0
        %v3011 = vadd.f32 %v2962, %v3010
        %v3012 = vpop.f32.mrf.mxu0
        %v3013 = vadd.f32 %v2964, %v3012
        %3014 = vmatmul.bf16.gmra.mxu0 %v1035
        %v3015 = vpop.f32.mrf.mxu0
        %v3016 = vadd.f32 %v2967, %v3015
        %v3017 = vpop.f32.mrf.mxu0
        %v3018 = vadd.f32 %v2969, %v3017
        %3019 = vdwg.mxu0
        %3020 = vmatpush.bf16.msra.mxu0 %v2060
        %3021 = vmatpush.bf16.msra.mxu0 %v2056
        %3022 = vmatpush.bf16.msra.mxu0 %v2052
        %3023 = vmatpush.bf16.msra.mxu0 %v2048
        %3024 = vmatpush.bf16.msra.mxu0 %v2044
        %3025 = vmatpush.bf16.msra.mxu0 %v2040
        %3026 = vmatpush.bf16.msra.mxu0 %v2036
        %3027 = vmatpush.bf16.msra.mxu0 %v2032
        %3028 = vmatmul.bf16.gmra.mxu0 %v980
        %v3029 = vpop.f32.mrf.mxu0
        %v3030 = vadd.f32 %v2981, %v3029
        %v3031 = vpop.f32.mrf.mxu0
        %v3032 = vadd.f32 %v2983, %v3031
        %3033 = vmatmul.bf16.gmra.mxu0 %v988
        %v3034 = vpop.f32.mrf.mxu0
        %v3035 = vadd.f32 %v2986, %v3034
        %v3036 = vpop.f32.mrf.mxu0
        %v3037 = vadd.f32 %v2988, %v3036
        %3038 = vmatmul.bf16.gmra.mxu0 %v996
        %v3039 = vpop.f32.mrf.mxu0
        %v3040 = vadd.f32 %v2991, %v3039
        %v3041 = vpop.f32.mrf.mxu0
        %v3042 = vadd.f32 %v2993, %v3041
        %3043 = vmatmul.bf16.gmra.mxu0 %v1004
        %v3044 = vpop.f32.mrf.mxu0
        %v3045 = vadd.f32 %v2996, %v3044
        %v3046 = vpop.f32.mrf.mxu0
        %v3047 = vadd.f32 %v2998, %v3046
        %3048 = vmatmul.bf16.gmra.mxu0 %v1012
        %v3049 = vpop.f32.mrf.mxu0
        %v3050 = vadd.f32 %v3001, %v3049
        %v3051 = vpop.f32.mrf.mxu0
        %v3052 = vadd.f32 %v3003, %v3051
        %3053 = vmatmul.bf16.gmra.mxu0 %v1020
        %v3054 = vpop.f32.mrf.mxu0
        %v3055 = vadd.f32 %v3006, %v3054
        %v3056 = vpop.f32.mrf.mxu0
        %v3057 = vadd.f32 %v3008, %v3056
        %3058 = vmatmul.bf16.gmra.mxu0 %v1028
        %v3059 = vpop.f32.mrf.mxu0
        %v3060 = vadd.f32 %v3011, %v3059
        %v3061 = vpop.f32.mrf.mxu0
        %v3062 = vadd.f32 %v3013, %v3061
        %3063 = vmatmul.bf16.gmra.mxu0 %v1036
        %v3064 = vpop.f32.mrf.mxu0
        %v3065 = vadd.f32 %v3016, %v3064
        %v3066 = vpop.f32.mrf.mxu0
        %v3067 = vadd.f32 %v3018, %v3066
        %3068 = vdwg.mxu0
        %3069 = vmatpush.bf16.msra.mxu0 %v2092
        %3070 = vmatpush.bf16.msra.mxu0 %v2088
        %3071 = vmatpush.bf16.msra.mxu0 %v2084
        %3072 = vmatpush.bf16.msra.mxu0 %v2080
        %3073 = vmatpush.bf16.msra.mxu0 %v2076
        %3074 = vmatpush.bf16.msra.mxu0 %v2072
        %3075 = vmatpush.bf16.msra.mxu0 %v2068
        %3076 = vmatpush.bf16.msra.mxu0 %v2064
        %3077 = vmatmul.bf16.gmra.mxu0 %v981
        %v3078 = vpop.f32.mrf.mxu0
        %v3079 = vadd.f32 %v3030, %v3078
        %v3080 = vpop.f32.mrf.mxu0
        %v3081 = vadd.f32 %v3032, %v3080
        %3082 = vmatmul.bf16.gmra.mxu0 %v989
        %v3083 = vpop.f32.mrf.mxu0
        %v3084 = vadd.f32 %v3035, %v3083
        %v3085 = vpop.f32.mrf.mxu0
        %v3086 = vadd.f32 %v3037, %v3085
        %3087 = vmatmul.bf16.gmra.mxu0 %v997
        %v3088 = vpop.f32.mrf.mxu0
        %v3089 = vadd.f32 %v3040, %v3088
        %v3090 = vpop.f32.mrf.mxu0
        %v3091 = vadd.f32 %v3042, %v3090
        %3092 = vmatmul.bf16.gmra.mxu0 %v1005
        %v3093 = vpop.f32.mrf.mxu0
        %v3094 = vadd.f32 %v3045, %v3093
        %v3095 = vpop.f32.mrf.mxu0
        %v3096 = vadd.f32 %v3047, %v3095
        %3097 = vmatmul.bf16.gmra.mxu0 %v1013
        %v3098 = vpop.f32.mrf.mxu0
        %v3099 = vadd.f32 %v3050, %v3098
        %v3100 = vpop.f32.mrf.mxu0
        %v3101 = vadd.f32 %v3052, %v3100
        %3102 = vmatmul.bf16.gmra.mxu0 %v1021
        %v3103 = vpop.f32.mrf.mxu0
        %v3104 = vadd.f32 %v3055, %v3103
        %v3105 = vpop.f32.mrf.mxu0
        %v3106 = vadd.f32 %v3057, %v3105
        %3107 = vmatmul.bf16.gmra.mxu0 %v1029
        %v3108 = vpop.f32.mrf.mxu0
        %v3109 = vadd.f32 %v3060, %v3108
        %v3110 = vpop.f32.mrf.mxu0
        %v3111 = vadd.f32 %v3062, %v3110
        %3112 = vmatmul.bf16.gmra.mxu0 %v1037
        %v3113 = vpop.f32.mrf.mxu0
        %v3114 = vadd.f32 %v3065, %v3113
        %v3115 = vpop.f32.mrf.mxu0
        %v3116 = vadd.f32 %v3067, %v3115
        %3117 = vdwg.mxu0
        %3118 = vmatpush.bf16.msra.mxu0 %v2124
        %3119 = vmatpush.bf16.msra.mxu0 %v2120
        %3120 = vmatpush.bf16.msra.mxu0 %v2116
        %3121 = vmatpush.bf16.msra.mxu0 %v2112
        %3122 = vmatpush.bf16.msra.mxu0 %v2108
        %3123 = vmatpush.bf16.msra.mxu0 %v2104
        %3124 = vmatpush.bf16.msra.mxu0 %v2100
        %3125 = vmatpush.bf16.msra.mxu0 %v2096
        %3126 = vmatmul.bf16.gmra.mxu0 %v982
        %v3127 = vpop.f32.mrf.mxu0
        %v3128 = vadd.f32 %v3079, %v3127
        %v3129 = vpop.f32.mrf.mxu0
        %v3130 = vadd.f32 %v3081, %v3129
        %3131 = vmatmul.bf16.gmra.mxu0 %v990
        %v3132 = vpop.f32.mrf.mxu0
        %v3133 = vadd.f32 %v3084, %v3132
        %v3134 = vpop.f32.mrf.mxu0
        %v3135 = vadd.f32 %v3086, %v3134
        %3136 = vmatmul.bf16.gmra.mxu0 %v998
        %v3137 = vpop.f32.mrf.mxu0
        %v3138 = vadd.f32 %v3089, %v3137
        %v3139 = vpop.f32.mrf.mxu0
        %v3140 = vadd.f32 %v3091, %v3139
        %3141 = vmatmul.bf16.gmra.mxu0 %v1006
        %v3142 = vpop.f32.mrf.mxu0
        %v3143 = vadd.f32 %v3094, %v3142
        %v3144 = vpop.f32.mrf.mxu0
        %v3145 = vadd.f32 %v3096, %v3144
        %3146 = vmatmul.bf16.gmra.mxu0 %v1014
        %v3147 = vpop.f32.mrf.mxu0
        %v3148 = vadd.f32 %v3099, %v3147
        %v3149 = vpop.f32.mrf.mxu0
        %v3150 = vadd.f32 %v3101, %v3149
        %3151 = vmatmul.bf16.gmra.mxu0 %v1022
        %v3152 = vpop.f32.mrf.mxu0
        %v3153 = vadd.f32 %v3104, %v3152
        %v3154 = vpop.f32.mrf.mxu0
        %v3155 = vadd.f32 %v3106, %v3154
        %3156 = vmatmul.bf16.gmra.mxu0 %v1030
        %v3157 = vpop.f32.mrf.mxu0
        %v3158 = vadd.f32 %v3109, %v3157
        %v3159 = vpop.f32.mrf.mxu0
        %v3160 = vadd.f32 %v3111, %v3159
        %3161 = vmatmul.bf16.gmra.mxu0 %v1038
        %v3162 = vpop.f32.mrf.mxu0
        %v3163 = vadd.f32 %v3114, %v3162
        %v3164 = vpop.f32.mrf.mxu0
        %v3165 = vadd.f32 %v3116, %v3164
        %3166 = vdwg.mxu0
        %3167 = vmatpush.bf16.msra.mxu0 %v1901
        %3168 = vmatpush.bf16.msra.mxu0 %v1897
        %3169 = vmatpush.bf16.msra.mxu0 %v1893
        %3170 = vmatpush.bf16.msra.mxu0 %v1889
        %3171 = vmatpush.bf16.msra.mxu0 %v1885
        %3172 = vmatpush.bf16.msra.mxu0 %v1881
        %3173 = vmatpush.bf16.msra.mxu0 %v1877
        %3174 = vmatpush.bf16.msra.mxu0 %v1873
        %3175 = vmatmul.bf16.gmra.mxu0 %v975
        %v3176 = vpop.f32.mrf.mxu0
        %v3177 = vadd.f32 0.0, %v3176
        %v3178 = vpop.f32.mrf.mxu0
        %v3179 = vadd.f32 0.0, %v3178
        %3180 = vmatmul.bf16.gmra.mxu0 %v983
        %v3181 = vpop.f32.mrf.mxu0
        %v3182 = vadd.f32 0.0, %v3181
        %v3183 = vpop.f32.mrf.mxu0
        %v3184 = vadd.f32 0.0, %v3183
        %3185 = vmatmul.bf16.gmra.mxu0 %v991
        %v3186 = vpop.f32.mrf.mxu0
        %v3187 = vadd.f32 0.0, %v3186
        %v3188 = vpop.f32.mrf.mxu0
        %v3189 = vadd.f32 0.0, %v3188
        %3190 = vmatmul.bf16.gmra.mxu0 %v999
        %v3191 = vpop.f32.mrf.mxu0
        %v3192 = vadd.f32 0.0, %v3191
        %v3193 = vpop.f32.mrf.mxu0
        %v3194 = vadd.f32 0.0, %v3193
        %3195 = vmatmul.bf16.gmra.mxu0 %v1007
        %v3196 = vpop.f32.mrf.mxu0
        %v3197 = vadd.f32 0.0, %v3196
        %v3198 = vpop.f32.mrf.mxu0
        %v3199 = vadd.f32 0.0, %v3198
        %3200 = vmatmul.bf16.gmra.mxu0 %v1015
        %v3201 = vpop.f32.mrf.mxu0
        %v3202 = vadd.f32 0.0, %v3201
        %v3203 = vpop.f32.mrf.mxu0
        %v3204 = vadd.f32 0.0, %v3203
        %3205 = vmatmul.bf16.gmra.mxu0 %v1023
        %v3206 = vpop.f32.mrf.mxu0
        %v3207 = vadd.f32 0.0, %v3206
        %v3208 = vpop.f32.mrf.mxu0
        %v3209 = vadd.f32 0.0, %v3208
        %3210 = vmatmul.bf16.gmra.mxu0 %v1031
        %v3211 = vpop.f32.mrf.mxu0
        %v3212 = vadd.f32 0.0, %v3211
        %v3213 = vpop.f32.mrf.mxu0
        %v3214 = vadd.f32 0.0, %v3213
        %3215 = vdwg.mxu0
        %3216 = vmatpush.bf16.msra.mxu0 %v1933
        %3217 = vmatpush.bf16.msra.mxu0 %v1929
        %3218 = vmatpush.bf16.msra.mxu0 %v1925
        %3219 = vmatpush.bf16.msra.mxu0 %v1921
        %3220 = vmatpush.bf16.msra.mxu0 %v1917
        %3221 = vmatpush.bf16.msra.mxu0 %v1913
        %3222 = vmatpush.bf16.msra.mxu0 %v1909
        %3223 = vmatpush.bf16.msra.mxu0 %v1905
        %3224 = vmatmul.bf16.gmra.mxu0 %v976
        %v3225 = vpop.f32.mrf.mxu0
        %v3226 = vadd.f32 %v3177, %v3225
        %v3227 = vpop.f32.mrf.mxu0
        %v3228 = vadd.f32 %v3179, %v3227
        %3229 = vmatmul.bf16.gmra.mxu0 %v984
        %v3230 = vpop.f32.mrf.mxu0
        %v3231 = vadd.f32 %v3182, %v3230
        %v3232 = vpop.f32.mrf.mxu0
        %v3233 = vadd.f32 %v3184, %v3232
        %3234 = vmatmul.bf16.gmra.mxu0 %v992
        %v3235 = vpop.f32.mrf.mxu0
        %v3236 = vadd.f32 %v3187, %v3235
        %v3237 = vpop.f32.mrf.mxu0
        %v3238 = vadd.f32 %v3189, %v3237
        %3239 = vmatmul.bf16.gmra.mxu0 %v1000
        %v3240 = vpop.f32.mrf.mxu0
        %v3241 = vadd.f32 %v3192, %v3240
        %v3242 = vpop.f32.mrf.mxu0
        %v3243 = vadd.f32 %v3194, %v3242
        %3244 = vmatmul.bf16.gmra.mxu0 %v1008
        %v3245 = vpop.f32.mrf.mxu0
        %v3246 = vadd.f32 %v3197, %v3245
        %v3247 = vpop.f32.mrf.mxu0
        %v3248 = vadd.f32 %v3199, %v3247
        %3249 = vmatmul.bf16.gmra.mxu0 %v1016
        %v3250 = vpop.f32.mrf.mxu0
        %v3251 = vadd.f32 %v3202, %v3250
        %v3252 = vpop.f32.mrf.mxu0
        %v3253 = vadd.f32 %v3204, %v3252
        %3254 = vmatmul.bf16.gmra.mxu0 %v1024
        %v3255 = vpop.f32.mrf.mxu0
        %v3256 = vadd.f32 %v3207, %v3255
        %v3257 = vpop.f32.mrf.mxu0
        %v3258 = vadd.f32 %v3209, %v3257
        %3259 = vmatmul.bf16.gmra.mxu0 %v1032
        %v3260 = vpop.f32.mrf.mxu0
        %v3261 = vadd.f32 %v3212, %v3260
        %v3262 = vpop.f32.mrf.mxu0
        %v3263 = vadd.f32 %v3214, %v3262
        %3264 = vdwg.mxu0
        %3265 = vmatpush.bf16.msra.mxu0 %v1965
        %3266 = vmatpush.bf16.msra.mxu0 %v1961
        %3267 = vmatpush.bf16.msra.mxu0 %v1957
        %3268 = vmatpush.bf16.msra.mxu0 %v1953
        %3269 = vmatpush.bf16.msra.mxu0 %v1949
        %3270 = vmatpush.bf16.msra.mxu0 %v1945
        %3271 = vmatpush.bf16.msra.mxu0 %v1941
        %3272 = vmatpush.bf16.msra.mxu0 %v1937
        %3273 = vmatmul.bf16.gmra.mxu0 %v977
        %v3274 = vpop.f32.mrf.mxu0
        %v3275 = vadd.f32 %v3226, %v3274
        %v3276 = vpop.f32.mrf.mxu0
        %v3277 = vadd.f32 %v3228, %v3276
        %3278 = vmatmul.bf16.gmra.mxu0 %v985
        %v3279 = vpop.f32.mrf.mxu0
        %v3280 = vadd.f32 %v3231, %v3279
        %v3281 = vpop.f32.mrf.mxu0
        %v3282 = vadd.f32 %v3233, %v3281
        %3283 = vmatmul.bf16.gmra.mxu0 %v993
        %v3284 = vpop.f32.mrf.mxu0
        %v3285 = vadd.f32 %v3236, %v3284
        %v3286 = vpop.f32.mrf.mxu0
        %v3287 = vadd.f32 %v3238, %v3286
        %3288 = vmatmul.bf16.gmra.mxu0 %v1001
        %v3289 = vpop.f32.mrf.mxu0
        %v3290 = vadd.f32 %v3241, %v3289
        %v3291 = vpop.f32.mrf.mxu0
        %v3292 = vadd.f32 %v3243, %v3291
        %3293 = vmatmul.bf16.gmra.mxu0 %v1009
        %v3294 = vpop.f32.mrf.mxu0
        %v3295 = vadd.f32 %v3246, %v3294
        %v3296 = vpop.f32.mrf.mxu0
        %v3297 = vadd.f32 %v3248, %v3296
        %3298 = vmatmul.bf16.gmra.mxu0 %v1017
        %v3299 = vpop.f32.mrf.mxu0
        %v3300 = vadd.f32 %v3251, %v3299
        %v3301 = vpop.f32.mrf.mxu0
        %v3302 = vadd.f32 %v3253, %v3301
        %3303 = vmatmul.bf16.gmra.mxu0 %v1025
        %v3304 = vpop.f32.mrf.mxu0
        %v3305 = vadd.f32 %v3256, %v3304
        %v3306 = vpop.f32.mrf.mxu0
        %v3307 = vadd.f32 %v3258, %v3306
        %3308 = vmatmul.bf16.gmra.mxu0 %v1033
        %v3309 = vpop.f32.mrf.mxu0
        %v3310 = vadd.f32 %v3261, %v3309
        %v3311 = vpop.f32.mrf.mxu0
        %v3312 = vadd.f32 %v3263, %v3311
        %3313 = vdwg.mxu0
        %3314 = vmatpush.bf16.msra.mxu0 %v1997
        %3315 = vmatpush.bf16.msra.mxu0 %v1993
        %3316 = vmatpush.bf16.msra.mxu0 %v1989
        %3317 = vmatpush.bf16.msra.mxu0 %v1985
        %3318 = vmatpush.bf16.msra.mxu0 %v1981
        %3319 = vmatpush.bf16.msra.mxu0 %v1977
        %3320 = vmatpush.bf16.msra.mxu0 %v1973
        %3321 = vmatpush.bf16.msra.mxu0 %v1969
        %3322 = vmatmul.bf16.gmra.mxu0 %v978
        %v3323 = vpop.f32.mrf.mxu0
        %v3324 = vadd.f32 %v3275, %v3323
        %v3325 = vpop.f32.mrf.mxu0
        %v3326 = vadd.f32 %v3277, %v3325
        %3327 = vmatmul.bf16.gmra.mxu0 %v986
        %v3328 = vpop.f32.mrf.mxu0
        %v3329 = vadd.f32 %v3280, %v3328
        %v3330 = vpop.f32.mrf.mxu0
        %v3331 = vadd.f32 %v3282, %v3330
        %3332 = vmatmul.bf16.gmra.mxu0 %v994
        %v3333 = vpop.f32.mrf.mxu0
        %v3334 = vadd.f32 %v3285, %v3333
        %v3335 = vpop.f32.mrf.mxu0
        %v3336 = vadd.f32 %v3287, %v3335
        %3337 = vmatmul.bf16.gmra.mxu0 %v1002
        %v3338 = vpop.f32.mrf.mxu0
        %v3339 = vadd.f32 %v3290, %v3338
        %v3340 = vpop.f32.mrf.mxu0
        %v3341 = vadd.f32 %v3292, %v3340
        %3342 = vmatmul.bf16.gmra.mxu0 %v1010
        %v3343 = vpop.f32.mrf.mxu0
        %v3344 = vadd.f32 %v3295, %v3343
        %v3345 = vpop.f32.mrf.mxu0
        %v3346 = vadd.f32 %v3297, %v3345
        %3347 = vmatmul.bf16.gmra.mxu0 %v1018
        %v3348 = vpop.f32.mrf.mxu0
        %v3349 = vadd.f32 %v3300, %v3348
        %v3350 = vpop.f32.mrf.mxu0
        %v3351 = vadd.f32 %v3302, %v3350
        %3352 = vmatmul.bf16.gmra.mxu0 %v1026
        %v3353 = vpop.f32.mrf.mxu0
        %v3354 = vadd.f32 %v3305, %v3353
        %v3355 = vpop.f32.mrf.mxu0
        %v3356 = vadd.f32 %v3307, %v3355
        %3357 = vmatmul.bf16.gmra.mxu0 %v1034
        %v3358 = vpop.f32.mrf.mxu0
        %v3359 = vadd.f32 %v3310, %v3358
        %v3360 = vpop.f32.mrf.mxu0
        %v3361 = vadd.f32 %v3312, %v3360
        %3362 = vdwg.mxu0
        %3363 = vmatpush.bf16.msra.mxu0 %v2029
        %3364 = vmatpush.bf16.msra.mxu0 %v2025
        %3365 = vmatpush.bf16.msra.mxu0 %v2021
        %3366 = vmatpush.bf16.msra.mxu0 %v2017
        %3367 = vmatpush.bf16.msra.mxu0 %v2013
        %3368 = vmatpush.bf16.msra.mxu0 %v2009
        %3369 = vmatpush.bf16.msra.mxu0 %v2005
        %3370 = vmatpush.bf16.msra.mxu0 %v2001
        %3371 = vmatmul.bf16.gmra.mxu0 %v979
        %v3372 = vpop.f32.mrf.mxu0
        %v3373 = vadd.f32 %v3324, %v3372
        %v3374 = vpop.f32.mrf.mxu0
        %v3375 = vadd.f32 %v3326, %v3374
        %3376 = vmatmul.bf16.gmra.mxu0 %v987
        %v3377 = vpop.f32.mrf.mxu0
        %v3378 = vadd.f32 %v3329, %v3377
        %v3379 = vpop.f32.mrf.mxu0
        %v3380 = vadd.f32 %v3331, %v3379
        %3381 = vmatmul.bf16.gmra.mxu0 %v995
        %v3382 = vpop.f32.mrf.mxu0
        %v3383 = vadd.f32 %v3334, %v3382
        %v3384 = vpop.f32.mrf.mxu0
        %v3385 = vadd.f32 %v3336, %v3384
        %3386 = vmatmul.bf16.gmra.mxu0 %v1003
        %v3387 = vpop.f32.mrf.mxu0
        %v3388 = vadd.f32 %v3339, %v3387
        %v3389 = vpop.f32.mrf.mxu0
        %v3390 = vadd.f32 %v3341, %v3389
        %3391 = vmatmul.bf16.gmra.mxu0 %v1011
        %v3392 = vpop.f32.mrf.mxu0
        %v3393 = vadd.f32 %v3344, %v3392
        %v3394 = vpop.f32.mrf.mxu0
        %v3395 = vadd.f32 %v3346, %v3394
        %3396 = vmatmul.bf16.gmra.mxu0 %v1019
        %v3397 = vpop.f32.mrf.mxu0
        %v3398 = vadd.f32 %v3349, %v3397
        %v3399 = vpop.f32.mrf.mxu0
        %v3400 = vadd.f32 %v3351, %v3399
        %3401 = vmatmul.bf16.gmra.mxu0 %v1027
        %v3402 = vpop.f32.mrf.mxu0
        %v3403 = vadd.f32 %v3354, %v3402
        %v3404 = vpop.f32.mrf.mxu0
        %v3405 = vadd.f32 %v3356, %v3404
        %3406 = vmatmul.bf16.gmra.mxu0 %v1035
        %v3407 = vpop.f32.mrf.mxu0
        %v3408 = vadd.f32 %v3359, %v3407
        %v3409 = vpop.f32.mrf.mxu0
        %v3410 = vadd.f32 %v3361, %v3409
        %3411 = vdwg.mxu0
        %3412 = vmatpush.bf16.msra.mxu0 %v2061
        %3413 = vmatpush.bf16.msra.mxu0 %v2057
        %3414 = vmatpush.bf16.msra.mxu0 %v2053
        %3415 = vmatpush.bf16.msra.mxu0 %v2049
        %3416 = vmatpush.bf16.msra.mxu0 %v2045
        %3417 = vmatpush.bf16.msra.mxu0 %v2041
        %3418 = vmatpush.bf16.msra.mxu0 %v2037
        %3419 = vmatpush.bf16.msra.mxu0 %v2033
        %3420 = vmatmul.bf16.gmra.mxu0 %v980
        %v3421 = vpop.f32.mrf.mxu0
        %v3422 = vadd.f32 %v3373, %v3421
        %v3423 = vpop.f32.mrf.mxu0
        %v3424 = vadd.f32 %v3375, %v3423
        %3425 = vmatmul.bf16.gmra.mxu0 %v988
        %v3426 = vpop.f32.mrf.mxu0
        %v3427 = vadd.f32 %v3378, %v3426
        %v3428 = vpop.f32.mrf.mxu0
        %v3429 = vadd.f32 %v3380, %v3428
        %3430 = vmatmul.bf16.gmra.mxu0 %v996
        %v3431 = vpop.f32.mrf.mxu0
        %v3432 = vadd.f32 %v3383, %v3431
        %v3433 = vpop.f32.mrf.mxu0
        %v3434 = vadd.f32 %v3385, %v3433
        %3435 = vmatmul.bf16.gmra.mxu0 %v1004
        %v3436 = vpop.f32.mrf.mxu0
        %v3437 = vadd.f32 %v3388, %v3436
        %v3438 = vpop.f32.mrf.mxu0
        %v3439 = vadd.f32 %v3390, %v3438
        %3440 = vmatmul.bf16.gmra.mxu0 %v1012
        %v3441 = vpop.f32.mrf.mxu0
        %v3442 = vadd.f32 %v3393, %v3441
        %v3443 = vpop.f32.mrf.mxu0
        %v3444 = vadd.f32 %v3395, %v3443
        %3445 = vmatmul.bf16.gmra.mxu0 %v1020
        %v3446 = vpop.f32.mrf.mxu0
        %v3447 = vadd.f32 %v3398, %v3446
        %v3448 = vpop.f32.mrf.mxu0
        %v3449 = vadd.f32 %v3400, %v3448
        %3450 = vmatmul.bf16.gmra.mxu0 %v1028
        %v3451 = vpop.f32.mrf.mxu0
        %v3452 = vadd.f32 %v3403, %v3451
        %v3453 = vpop.f32.mrf.mxu0
        %v3454 = vadd.f32 %v3405, %v3453
        %3455 = vmatmul.bf16.gmra.mxu0 %v1036
        %v3456 = vpop.f32.mrf.mxu0
        %v3457 = vadd.f32 %v3408, %v3456
        %v3458 = vpop.f32.mrf.mxu0
        %v3459 = vadd.f32 %v3410, %v3458
        %3460 = vdwg.mxu0
        %3461 = vmatpush.bf16.msra.mxu0 %v2093
        %3462 = vmatpush.bf16.msra.mxu0 %v2089
        %3463 = vmatpush.bf16.msra.mxu0 %v2085
        %3464 = vmatpush.bf16.msra.mxu0 %v2081
        %3465 = vmatpush.bf16.msra.mxu0 %v2077
        %3466 = vmatpush.bf16.msra.mxu0 %v2073
        %3467 = vmatpush.bf16.msra.mxu0 %v2069
        %3468 = vmatpush.bf16.msra.mxu0 %v2065
        %3469 = vmatmul.bf16.gmra.mxu0 %v981
        %v3470 = vpop.f32.mrf.mxu0
        %v3471 = vadd.f32 %v3422, %v3470
        %v3472 = vpop.f32.mrf.mxu0
        %v3473 = vadd.f32 %v3424, %v3472
        %3474 = vmatmul.bf16.gmra.mxu0 %v989
        %v3475 = vpop.f32.mrf.mxu0
        %v3476 = vadd.f32 %v3427, %v3475
        %v3477 = vpop.f32.mrf.mxu0
        %v3478 = vadd.f32 %v3429, %v3477
        %3479 = vmatmul.bf16.gmra.mxu0 %v997
        %v3480 = vpop.f32.mrf.mxu0
        %v3481 = vadd.f32 %v3432, %v3480
        %v3482 = vpop.f32.mrf.mxu0
        %v3483 = vadd.f32 %v3434, %v3482
        %3484 = vmatmul.bf16.gmra.mxu0 %v1005
        %v3485 = vpop.f32.mrf.mxu0
        %v3486 = vadd.f32 %v3437, %v3485
        %v3487 = vpop.f32.mrf.mxu0
        %v3488 = vadd.f32 %v3439, %v3487
        %3489 = vmatmul.bf16.gmra.mxu0 %v1013
        %v3490 = vpop.f32.mrf.mxu0
        %v3491 = vadd.f32 %v3442, %v3490
        %v3492 = vpop.f32.mrf.mxu0
        %v3493 = vadd.f32 %v3444, %v3492
        %3494 = vmatmul.bf16.gmra.mxu0 %v1021
        %v3495 = vpop.f32.mrf.mxu0
        %v3496 = vadd.f32 %v3447, %v3495
        %v3497 = vpop.f32.mrf.mxu0
        %v3498 = vadd.f32 %v3449, %v3497
        %3499 = vmatmul.bf16.gmra.mxu0 %v1029
        %v3500 = vpop.f32.mrf.mxu0
        %v3501 = vadd.f32 %v3452, %v3500
        %v3502 = vpop.f32.mrf.mxu0
        %v3503 = vadd.f32 %v3454, %v3502
        %3504 = vmatmul.bf16.gmra.mxu0 %v1037
        %v3505 = vpop.f32.mrf.mxu0
        %v3506 = vadd.f32 %v3457, %v3505
        %v3507 = vpop.f32.mrf.mxu0
        %v3508 = vadd.f32 %v3459, %v3507
        %3509 = vdwg.mxu0
        %3510 = vmatpush.bf16.msra.mxu0 %v2125
        %3511 = vmatpush.bf16.msra.mxu0 %v2121
        %3512 = vmatpush.bf16.msra.mxu0 %v2117
        %3513 = vmatpush.bf16.msra.mxu0 %v2113
        %3514 = vmatpush.bf16.msra.mxu0 %v2109
        %3515 = vmatpush.bf16.msra.mxu0 %v2105
        %3516 = vmatpush.bf16.msra.mxu0 %v2101
        %3517 = vmatpush.bf16.msra.mxu0 %v2097
        %3518 = vmatmul.bf16.gmra.mxu0 %v982
        %v3519 = vpop.f32.mrf.mxu0
        %v3520 = vadd.f32 %v3471, %v3519
        %v3521 = vpop.f32.mrf.mxu0
        %v3522 = vadd.f32 %v3473, %v3521
        %3523 = vmatmul.bf16.gmra.mxu0 %v990
        %v3524 = vpop.f32.mrf.mxu0
        %v3525 = vadd.f32 %v3476, %v3524
        %v3526 = vpop.f32.mrf.mxu0
        %v3527 = vadd.f32 %v3478, %v3526
        %3528 = vmatmul.bf16.gmra.mxu0 %v998
        %v3529 = vpop.f32.mrf.mxu0
        %v3530 = vadd.f32 %v3481, %v3529
        %v3531 = vpop.f32.mrf.mxu0
        %v3532 = vadd.f32 %v3483, %v3531
        %3533 = vmatmul.bf16.gmra.mxu0 %v1006
        %v3534 = vpop.f32.mrf.mxu0
        %v3535 = vadd.f32 %v3486, %v3534
        %v3536 = vpop.f32.mrf.mxu0
        %v3537 = vadd.f32 %v3488, %v3536
        %3538 = vmatmul.bf16.gmra.mxu0 %v1014
        %v3539 = vpop.f32.mrf.mxu0
        %v3540 = vadd.f32 %v3491, %v3539
        %v3541 = vpop.f32.mrf.mxu0
        %v3542 = vadd.f32 %v3493, %v3541
        %3543 = vmatmul.bf16.gmra.mxu0 %v1022
        %v3544 = vpop.f32.mrf.mxu0
        %v3545 = vadd.f32 %v3496, %v3544
        %v3546 = vpop.f32.mrf.mxu0
        %v3547 = vadd.f32 %v3498, %v3546
        %3548 = vmatmul.bf16.gmra.mxu0 %v1030
        %v3549 = vpop.f32.mrf.mxu0
        %v3550 = vadd.f32 %v3501, %v3549
        %v3551 = vpop.f32.mrf.mxu0
        %v3552 = vadd.f32 %v3503, %v3551
        %3553 = vmatmul.bf16.gmra.mxu0 %v1038
        %v3554 = vpop.f32.mrf.mxu0
        %v3555 = vadd.f32 %v3506, %v3554
        %v3556 = vpop.f32.mrf.mxu0
        %v3557 = vadd.f32 %v3508, %v3556
        %3558 = vdwg.mxu0
        %3559 = vmatpush.bf16.msra.mxu0 %v1902
        %3560 = vmatpush.bf16.msra.mxu0 %v1898
        %3561 = vmatpush.bf16.msra.mxu0 %v1894
        %3562 = vmatpush.bf16.msra.mxu0 %v1890
        %3563 = vmatpush.bf16.msra.mxu0 %v1886
        %3564 = vmatpush.bf16.msra.mxu0 %v1882
        %3565 = vmatpush.bf16.msra.mxu0 %v1878
        %3566 = vmatpush.bf16.msra.mxu0 %v1874
        %3567 = vmatmul.bf16.gmra.mxu0 %v975
        %v3568 = vpop.f32.mrf.mxu0
        %v3569 = vadd.f32 0.0, %v3568
        %v3570 = vpop.f32.mrf.mxu0
        %v3571 = vadd.f32 0.0, %v3570
        %3572 = vmatmul.bf16.gmra.mxu0 %v983
        %v3573 = vpop.f32.mrf.mxu0
        %v3574 = vadd.f32 0.0, %v3573
        %v3575 = vpop.f32.mrf.mxu0
        %v3576 = vadd.f32 0.0, %v3575
        %3577 = vmatmul.bf16.gmra.mxu0 %v991
        %v3578 = vpop.f32.mrf.mxu0
        %v3579 = vadd.f32 0.0, %v3578
        %v3580 = vpop.f32.mrf.mxu0
        %v3581 = vadd.f32 0.0, %v3580
        %3582 = vmatmul.bf16.gmra.mxu0 %v999
        %v3583 = vpop.f32.mrf.mxu0
        %v3584 = vadd.f32 0.0, %v3583
        %v3585 = vpop.f32.mrf.mxu0
        %v3586 = vadd.f32 0.0, %v3585
        %3587 = vmatmul.bf16.gmra.mxu0 %v1007
        %v3588 = vpop.f32.mrf.mxu0
        %v3589 = vadd.f32 0.0, %v3588
        %v3590 = vpop.f32.mrf.mxu0
        %v3591 = vadd.f32 0.0, %v3590
        %3592 = vmatmul.bf16.gmra.mxu0 %v1015
        %v3593 = vpop.f32.mrf.mxu0
        %v3594 = vadd.f32 0.0, %v3593
        %v3595 = vpop.f32.mrf.mxu0
        %v3596 = vadd.f32 0.0, %v3595
        %3597 = vmatmul.bf16.gmra.mxu0 %v1023
        %v3598 = vpop.f32.mrf.mxu0
        %v3599 = vadd.f32 0.0, %v3598
        %v3600 = vpop.f32.mrf.mxu0
        %v3601 = vadd.f32 0.0, %v3600
        %3602 = vmatmul.bf16.gmra.mxu0 %v1031
        %v3603 = vpop.f32.mrf.mxu0
        %v3604 = vadd.f32 0.0, %v3603
        %v3605 = vpop.f32.mrf.mxu0
        %v3606 = vadd.f32 0.0, %v3605
        %3607 = vdwg.mxu0
        %3608 = vmatpush.bf16.msra.mxu0 %v1934
        %3609 = vmatpush.bf16.msra.mxu0 %v1930
        %3610 = vmatpush.bf16.msra.mxu0 %v1926
        %3611 = vmatpush.bf16.msra.mxu0 %v1922
        %3612 = vmatpush.bf16.msra.mxu0 %v1918
        %3613 = vmatpush.bf16.msra.mxu0 %v1914
        %3614 = vmatpush.bf16.msra.mxu0 %v1910
        %3615 = vmatpush.bf16.msra.mxu0 %v1906
        %3616 = vmatmul.bf16.gmra.mxu0 %v976
        %v3617 = vpop.f32.mrf.mxu0
        %v3618 = vadd.f32 %v3569, %v3617
        %v3619 = vpop.f32.mrf.mxu0
        %v3620 = vadd.f32 %v3571, %v3619
        %3621 = vmatmul.bf16.gmra.mxu0 %v984
        %v3622 = vpop.f32.mrf.mxu0
        %v3623 = vadd.f32 %v3574, %v3622
        %v3624 = vpop.f32.mrf.mxu0
        %v3625 = vadd.f32 %v3576, %v3624
        %3626 = vmatmul.bf16.gmra.mxu0 %v992
        %v3627 = vpop.f32.mrf.mxu0
        %v3628 = vadd.f32 %v3579, %v3627
        %v3629 = vpop.f32.mrf.mxu0
        %v3630 = vadd.f32 %v3581, %v3629
        %3631 = vmatmul.bf16.gmra.mxu0 %v1000
        %v3632 = vpop.f32.mrf.mxu0
        %v3633 = vadd.f32 %v3584, %v3632
        %v3634 = vpop.f32.mrf.mxu0
        %v3635 = vadd.f32 %v3586, %v3634
        %3636 = vmatmul.bf16.gmra.mxu0 %v1008
        %v3637 = vpop.f32.mrf.mxu0
        %v3638 = vadd.f32 %v3589, %v3637
        %v3639 = vpop.f32.mrf.mxu0
        %v3640 = vadd.f32 %v3591, %v3639
        %3641 = vmatmul.bf16.gmra.mxu0 %v1016
        %v3642 = vpop.f32.mrf.mxu0
        %v3643 = vadd.f32 %v3594, %v3642
        %v3644 = vpop.f32.mrf.mxu0
        %v3645 = vadd.f32 %v3596, %v3644
        %3646 = vmatmul.bf16.gmra.mxu0 %v1024
        %v3647 = vpop.f32.mrf.mxu0
        %v3648 = vadd.f32 %v3599, %v3647
        %v3649 = vpop.f32.mrf.mxu0
        %v3650 = vadd.f32 %v3601, %v3649
        %3651 = vmatmul.bf16.gmra.mxu0 %v1032
        %v3652 = vpop.f32.mrf.mxu0
        %v3653 = vadd.f32 %v3604, %v3652
        %v3654 = vpop.f32.mrf.mxu0
        %v3655 = vadd.f32 %v3606, %v3654
        %3656 = vdwg.mxu0
        %3657 = vmatpush.bf16.msra.mxu0 %v1966
        %3658 = vmatpush.bf16.msra.mxu0 %v1962
        %3659 = vmatpush.bf16.msra.mxu0 %v1958
        %3660 = vmatpush.bf16.msra.mxu0 %v1954
        %3661 = vmatpush.bf16.msra.mxu0 %v1950
        %3662 = vmatpush.bf16.msra.mxu0 %v1946
        %3663 = vmatpush.bf16.msra.mxu0 %v1942
        %3664 = vmatpush.bf16.msra.mxu0 %v1938
        %3665 = vmatmul.bf16.gmra.mxu0 %v977
        %v3666 = vpop.f32.mrf.mxu0
        %v3667 = vadd.f32 %v3618, %v3666
        %v3668 = vpop.f32.mrf.mxu0
        %v3669 = vadd.f32 %v3620, %v3668
        %3670 = vmatmul.bf16.gmra.mxu0 %v985
        %v3671 = vpop.f32.mrf.mxu0
        %v3672 = vadd.f32 %v3623, %v3671
        %v3673 = vpop.f32.mrf.mxu0
        %v3674 = vadd.f32 %v3625, %v3673
        %3675 = vmatmul.bf16.gmra.mxu0 %v993
        %v3676 = vpop.f32.mrf.mxu0
        %v3677 = vadd.f32 %v3628, %v3676
        %v3678 = vpop.f32.mrf.mxu0
        %v3679 = vadd.f32 %v3630, %v3678
        %3680 = vmatmul.bf16.gmra.mxu0 %v1001
        %v3681 = vpop.f32.mrf.mxu0
        %v3682 = vadd.f32 %v3633, %v3681
        %v3683 = vpop.f32.mrf.mxu0
        %v3684 = vadd.f32 %v3635, %v3683
        %3685 = vmatmul.bf16.gmra.mxu0 %v1009
        %v3686 = vpop.f32.mrf.mxu0
        %v3687 = vadd.f32 %v3638, %v3686
        %v3688 = vpop.f32.mrf.mxu0
        %v3689 = vadd.f32 %v3640, %v3688
        %3690 = vmatmul.bf16.gmra.mxu0 %v1017
        %v3691 = vpop.f32.mrf.mxu0
        %v3692 = vadd.f32 %v3643, %v3691
        %v3693 = vpop.f32.mrf.mxu0
        %v3694 = vadd.f32 %v3645, %v3693
        %3695 = vmatmul.bf16.gmra.mxu0 %v1025
        %v3696 = vpop.f32.mrf.mxu0
        %v3697 = vadd.f32 %v3648, %v3696
        %v3698 = vpop.f32.mrf.mxu0
        %v3699 = vadd.f32 %v3650, %v3698
        %3700 = vmatmul.bf16.gmra.mxu0 %v1033
        %v3701 = vpop.f32.mrf.mxu0
        %v3702 = vadd.f32 %v3653, %v3701
        %v3703 = vpop.f32.mrf.mxu0
        %v3704 = vadd.f32 %v3655, %v3703
        %3705 = vdwg.mxu0
        %3706 = vmatpush.bf16.msra.mxu0 %v1998
        %3707 = vmatpush.bf16.msra.mxu0 %v1994
        %3708 = vmatpush.bf16.msra.mxu0 %v1990
        %3709 = vmatpush.bf16.msra.mxu0 %v1986
        %3710 = vmatpush.bf16.msra.mxu0 %v1982
        %3711 = vmatpush.bf16.msra.mxu0 %v1978
        %3712 = vmatpush.bf16.msra.mxu0 %v1974
        %3713 = vmatpush.bf16.msra.mxu0 %v1970
        %3714 = vmatmul.bf16.gmra.mxu0 %v978
        %v3715 = vpop.f32.mrf.mxu0
        %v3716 = vadd.f32 %v3667, %v3715
        %v3717 = vpop.f32.mrf.mxu0
        %v3718 = vadd.f32 %v3669, %v3717
        %3719 = vmatmul.bf16.gmra.mxu0 %v986
        %v3720 = vpop.f32.mrf.mxu0
        %v3721 = vadd.f32 %v3672, %v3720
        %v3722 = vpop.f32.mrf.mxu0
        %v3723 = vadd.f32 %v3674, %v3722
        %3724 = vmatmul.bf16.gmra.mxu0 %v994
        %v3725 = vpop.f32.mrf.mxu0
        %v3726 = vadd.f32 %v3677, %v3725
        %v3727 = vpop.f32.mrf.mxu0
        %v3728 = vadd.f32 %v3679, %v3727
        %3729 = vmatmul.bf16.gmra.mxu0 %v1002
        %v3730 = vpop.f32.mrf.mxu0
        %v3731 = vadd.f32 %v3682, %v3730
        %v3732 = vpop.f32.mrf.mxu0
        %v3733 = vadd.f32 %v3684, %v3732
        %3734 = vmatmul.bf16.gmra.mxu0 %v1010
        %v3735 = vpop.f32.mrf.mxu0
        %v3736 = vadd.f32 %v3687, %v3735
        %v3737 = vpop.f32.mrf.mxu0
        %v3738 = vadd.f32 %v3689, %v3737
        %3739 = vmatmul.bf16.gmra.mxu0 %v1018
        %v3740 = vpop.f32.mrf.mxu0
        %v3741 = vadd.f32 %v3692, %v3740
        %v3742 = vpop.f32.mrf.mxu0
        %v3743 = vadd.f32 %v3694, %v3742
        %3744 = vmatmul.bf16.gmra.mxu0 %v1026
        %v3745 = vpop.f32.mrf.mxu0
        %v3746 = vadd.f32 %v3697, %v3745
        %v3747 = vpop.f32.mrf.mxu0
        %v3748 = vadd.f32 %v3699, %v3747
        %3749 = vmatmul.bf16.gmra.mxu0 %v1034
        %v3750 = vpop.f32.mrf.mxu0
        %v3751 = vadd.f32 %v3702, %v3750
        %v3752 = vpop.f32.mrf.mxu0
        %v3753 = vadd.f32 %v3704, %v3752
        %3754 = vdwg.mxu0
        %3755 = vmatpush.bf16.msra.mxu0 %v2030
        %3756 = vmatpush.bf16.msra.mxu0 %v2026
        %3757 = vmatpush.bf16.msra.mxu0 %v2022
        %3758 = vmatpush.bf16.msra.mxu0 %v2018
        %3759 = vmatpush.bf16.msra.mxu0 %v2014
        %3760 = vmatpush.bf16.msra.mxu0 %v2010
        %3761 = vmatpush.bf16.msra.mxu0 %v2006
        %3762 = vmatpush.bf16.msra.mxu0 %v2002
        %3763 = vmatmul.bf16.gmra.mxu0 %v979
        %v3764 = vpop.f32.mrf.mxu0
        %v3765 = vadd.f32 %v3716, %v3764
        %v3766 = vpop.f32.mrf.mxu0
        %v3767 = vadd.f32 %v3718, %v3766
        %3768 = vmatmul.bf16.gmra.mxu0 %v987
        %v3769 = vpop.f32.mrf.mxu0
        %v3770 = vadd.f32 %v3721, %v3769
        %v3771 = vpop.f32.mrf.mxu0
        %v3772 = vadd.f32 %v3723, %v3771
        %3773 = vmatmul.bf16.gmra.mxu0 %v995
        %v3774 = vpop.f32.mrf.mxu0
        %v3775 = vadd.f32 %v3726, %v3774
        %v3776 = vpop.f32.mrf.mxu0
        %v3777 = vadd.f32 %v3728, %v3776
        %3778 = vmatmul.bf16.gmra.mxu0 %v1003
        %v3779 = vpop.f32.mrf.mxu0
        %v3780 = vadd.f32 %v3731, %v3779
        %v3781 = vpop.f32.mrf.mxu0
        %v3782 = vadd.f32 %v3733, %v3781
        %3783 = vmatmul.bf16.gmra.mxu0 %v1011
        %v3784 = vpop.f32.mrf.mxu0
        %v3785 = vadd.f32 %v3736, %v3784
        %v3786 = vpop.f32.mrf.mxu0
        %v3787 = vadd.f32 %v3738, %v3786
        %3788 = vmatmul.bf16.gmra.mxu0 %v1019
        %v3789 = vpop.f32.mrf.mxu0
        %v3790 = vadd.f32 %v3741, %v3789
        %v3791 = vpop.f32.mrf.mxu0
        %v3792 = vadd.f32 %v3743, %v3791
        %3793 = vmatmul.bf16.gmra.mxu0 %v1027
        %v3794 = vpop.f32.mrf.mxu0
        %v3795 = vadd.f32 %v3746, %v3794
        %v3796 = vpop.f32.mrf.mxu0
        %v3797 = vadd.f32 %v3748, %v3796
        %3798 = vmatmul.bf16.gmra.mxu0 %v1035
        %v3799 = vpop.f32.mrf.mxu0
        %v3800 = vadd.f32 %v3751, %v3799
        %v3801 = vpop.f32.mrf.mxu0
        %v3802 = vadd.f32 %v3753, %v3801
        %3803 = vdwg.mxu0
        %3804 = vmatpush.bf16.msra.mxu0 %v2062
        %3805 = vmatpush.bf16.msra.mxu0 %v2058
        %3806 = vmatpush.bf16.msra.mxu0 %v2054
        %3807 = vmatpush.bf16.msra.mxu0 %v2050
        %3808 = vmatpush.bf16.msra.mxu0 %v2046
        %3809 = vmatpush.bf16.msra.mxu0 %v2042
        %3810 = vmatpush.bf16.msra.mxu0 %v2038
        %3811 = vmatpush.bf16.msra.mxu0 %v2034
        %3812 = vmatmul.bf16.gmra.mxu0 %v980
        %v3813 = vpop.f32.mrf.mxu0
        %v3814 = vadd.f32 %v3765, %v3813
        %v3815 = vpop.f32.mrf.mxu0
        %v3816 = vadd.f32 %v3767, %v3815
        %3817 = vmatmul.bf16.gmra.mxu0 %v988
        %v3818 = vpop.f32.mrf.mxu0
        %v3819 = vadd.f32 %v3770, %v3818
        %v3820 = vpop.f32.mrf.mxu0
        %v3821 = vadd.f32 %v3772, %v3820
        %3822 = vmatmul.bf16.gmra.mxu0 %v996
        %v3823 = vpop.f32.mrf.mxu0
        %v3824 = vadd.f32 %v3775, %v3823
        %v3825 = vpop.f32.mrf.mxu0
        %v3826 = vadd.f32 %v3777, %v3825
        %3827 = vmatmul.bf16.gmra.mxu0 %v1004
        %v3828 = vpop.f32.mrf.mxu0
        %v3829 = vadd.f32 %v3780, %v3828
        %v3830 = vpop.f32.mrf.mxu0
        %v3831 = vadd.f32 %v3782, %v3830
        %3832 = vmatmul.bf16.gmra.mxu0 %v1012
        %v3833 = vpop.f32.mrf.mxu0
        %v3834 = vadd.f32 %v3785, %v3833
        %v3835 = vpop.f32.mrf.mxu0
        %v3836 = vadd.f32 %v3787, %v3835
        %3837 = vmatmul.bf16.gmra.mxu0 %v1020
        %v3838 = vpop.f32.mrf.mxu0
        %v3839 = vadd.f32 %v3790, %v3838
        %v3840 = vpop.f32.mrf.mxu0
        %v3841 = vadd.f32 %v3792, %v3840
        %3842 = vmatmul.bf16.gmra.mxu0 %v1028
        %v3843 = vpop.f32.mrf.mxu0
        %v3844 = vadd.f32 %v3795, %v3843
        %v3845 = vpop.f32.mrf.mxu0
        %v3846 = vadd.f32 %v3797, %v3845
        %3847 = vmatmul.bf16.gmra.mxu0 %v1036
        %v3848 = vpop.f32.mrf.mxu0
        %v3849 = vadd.f32 %v3800, %v3848
        %v3850 = vpop.f32.mrf.mxu0
        %v3851 = vadd.f32 %v3802, %v3850
        %3852 = vdwg.mxu0
        %3853 = vmatpush.bf16.msra.mxu0 %v2094
        %3854 = vmatpush.bf16.msra.mxu0 %v2090
        %3855 = vmatpush.bf16.msra.mxu0 %v2086
        %3856 = vmatpush.bf16.msra.mxu0 %v2082
        %3857 = vmatpush.bf16.msra.mxu0 %v2078
        %3858 = vmatpush.bf16.msra.mxu0 %v2074
        %3859 = vmatpush.bf16.msra.mxu0 %v2070
        %3860 = vmatpush.bf16.msra.mxu0 %v2066
        %3861 = vmatmul.bf16.gmra.mxu0 %v981
        %v3862 = vpop.f32.mrf.mxu0
        %v3863 = vadd.f32 %v3814, %v3862
        %v3864 = vpop.f32.mrf.mxu0
        %v3865 = vadd.f32 %v3816, %v3864
        %3866 = vmatmul.bf16.gmra.mxu0 %v989
        %v3867 = vpop.f32.mrf.mxu0
        %v3868 = vadd.f32 %v3819, %v3867
        %v3869 = vpop.f32.mrf.mxu0
        %v3870 = vadd.f32 %v3821, %v3869
        %3871 = vmatmul.bf16.gmra.mxu0 %v997
        %v3872 = vpop.f32.mrf.mxu0
        %v3873 = vadd.f32 %v3824, %v3872
        %v3874 = vpop.f32.mrf.mxu0
        %v3875 = vadd.f32 %v3826, %v3874
        %3876 = vmatmul.bf16.gmra.mxu0 %v1005
        %v3877 = vpop.f32.mrf.mxu0
        %v3878 = vadd.f32 %v3829, %v3877
        %v3879 = vpop.f32.mrf.mxu0
        %v3880 = vadd.f32 %v3831, %v3879
        %3881 = vmatmul.bf16.gmra.mxu0 %v1013
        %v3882 = vpop.f32.mrf.mxu0
        %v3883 = vadd.f32 %v3834, %v3882
        %v3884 = vpop.f32.mrf.mxu0
        %v3885 = vadd.f32 %v3836, %v3884
        %3886 = vmatmul.bf16.gmra.mxu0 %v1021
        %v3887 = vpop.f32.mrf.mxu0
        %v3888 = vadd.f32 %v3839, %v3887
        %v3889 = vpop.f32.mrf.mxu0
        %v3890 = vadd.f32 %v3841, %v3889
        %3891 = vmatmul.bf16.gmra.mxu0 %v1029
        %v3892 = vpop.f32.mrf.mxu0
        %v3893 = vadd.f32 %v3844, %v3892
        %v3894 = vpop.f32.mrf.mxu0
        %v3895 = vadd.f32 %v3846, %v3894
        %3896 = vmatmul.bf16.gmra.mxu0 %v1037
        %v3897 = vpop.f32.mrf.mxu0
        %v3898 = vadd.f32 %v3849, %v3897
        %v3899 = vpop.f32.mrf.mxu0
        %v3900 = vadd.f32 %v3851, %v3899
        %3901 = vdwg.mxu0
        %3902 = vmatpush.bf16.msra.mxu0 %v2126
        %3903 = vmatpush.bf16.msra.mxu0 %v2122
        %3904 = vmatpush.bf16.msra.mxu0 %v2118
        %3905 = vmatpush.bf16.msra.mxu0 %v2114
        %3906 = vmatpush.bf16.msra.mxu0 %v2110
        %3907 = vmatpush.bf16.msra.mxu0 %v2106
        %3908 = vmatpush.bf16.msra.mxu0 %v2102
        %3909 = vmatpush.bf16.msra.mxu0 %v2098
        %3910 = vmatmul.bf16.gmra.mxu0 %v982
        %v3911 = vpop.f32.mrf.mxu0
        %v3912 = vadd.f32 %v3863, %v3911
        %v3913 = vpop.f32.mrf.mxu0
        %v3914 = vadd.f32 %v3865, %v3913
        %3915 = vmatmul.bf16.gmra.mxu0 %v990
        %v3916 = vpop.f32.mrf.mxu0
        %v3917 = vadd.f32 %v3868, %v3916
        %v3918 = vpop.f32.mrf.mxu0
        %v3919 = vadd.f32 %v3870, %v3918
        %3920 = vmatmul.bf16.gmra.mxu0 %v998
        %v3921 = vpop.f32.mrf.mxu0
        %v3922 = vadd.f32 %v3873, %v3921
        %v3923 = vpop.f32.mrf.mxu0
        %v3924 = vadd.f32 %v3875, %v3923
        %3925 = vmatmul.bf16.gmra.mxu0 %v1006
        %v3926 = vpop.f32.mrf.mxu0
        %v3927 = vadd.f32 %v3878, %v3926
        %v3928 = vpop.f32.mrf.mxu0
        %v3929 = vadd.f32 %v3880, %v3928
        %3930 = vmatmul.bf16.gmra.mxu0 %v1014
        %v3931 = vpop.f32.mrf.mxu0
        %v3932 = vadd.f32 %v3883, %v3931
        %v3933 = vpop.f32.mrf.mxu0
        %v3934 = vadd.f32 %v3885, %v3933
        %3935 = vmatmul.bf16.gmra.mxu0 %v1022
        %v3936 = vpop.f32.mrf.mxu0
        %v3937 = vadd.f32 %v3888, %v3936
        %v3938 = vpop.f32.mrf.mxu0
        %v3939 = vadd.f32 %v3890, %v3938
        %3940 = vmatmul.bf16.gmra.mxu0 %v1030
        %v3941 = vpop.f32.mrf.mxu0
        %v3942 = vadd.f32 %v3893, %v3941
        %v3943 = vpop.f32.mrf.mxu0
        %v3944 = vadd.f32 %v3895, %v3943
        %3945 = vmatmul.bf16.gmra.mxu0 %v1038
        %v3946 = vpop.f32.mrf.mxu0
        %v3947 = vadd.f32 %v3898, %v3946
        %v3948 = vpop.f32.mrf.mxu0
        %v3949 = vadd.f32 %v3900, %v3948
        %3950 = vdwg.mxu0
        %v3951 = vadd.f32 %v399, %v2736
        %v3952 = vadd.f32 %v400, %v3128
        %v3953 = vadd.f32 %v401, %v3520
        %v3954 = vadd.f32 %v402, %v3912
        %v3955 = vadd.f32 %v403, %v2738
        %v3956 = vadd.f32 %v404, %v3130
        %v3957 = vadd.f32 %v405, %v3522
        %v3958 = vadd.f32 %v406, %v3914
        %v3959 = vadd.f32 %v407, %v2741
        %v3960 = vadd.f32 %v408, %v3133
        %v3961 = vadd.f32 %v409, %v3525
        %v3962 = vadd.f32 %v410, %v3917
        %v3963 = vadd.f32 %v411, %v2743
        %v3964 = vadd.f32 %v412, %v3135
        %v3965 = vadd.f32 %v413, %v3527
        %v3966 = vadd.f32 %v414, %v3919
        %v3967 = vadd.f32 %v415, %v2746
        %v3968 = vadd.f32 %v416, %v3138
        %v3969 = vadd.f32 %v417, %v3530
        %v3970 = vadd.f32 %v418, %v3922
        %v3971 = vadd.f32 %v419, %v2748
        %v3972 = vadd.f32 %v420, %v3140
        %v3973 = vadd.f32 %v421, %v3532
        %v3974 = vadd.f32 %v422, %v3924
        %v3975 = vadd.f32 %v423, %v2751
        %v3976 = vadd.f32 %v424, %v3143
        %v3977 = vadd.f32 %v425, %v3535
        %v3978 = vadd.f32 %v426, %v3927
        %v3979 = vadd.f32 %v427, %v2753
        %v3980 = vadd.f32 %v428, %v3145
        %v3981 = vadd.f32 %v429, %v3537
        %v3982 = vadd.f32 %v430, %v3929
        %v3983 = vadd.f32 %v431, %v2756
        %v3984 = vadd.f32 %v432, %v3148
        %v3985 = vadd.f32 %v433, %v3540
        %v3986 = vadd.f32 %v434, %v3932
        %v3987 = vadd.f32 %v435, %v2758
        %v3988 = vadd.f32 %v436, %v3150
        %v3989 = vadd.f32 %v437, %v3542
        %v3990 = vadd.f32 %v438, %v3934
        %v3991 = vadd.f32 %v439, %v2761
        %v3992 = vadd.f32 %v440, %v3153
        %v3993 = vadd.f32 %v441, %v3545
        %v3994 = vadd.f32 %v442, %v3937
        %v3995 = vadd.f32 %v443, %v2763
        %v3996 = vadd.f32 %v444, %v3155
        %v3997 = vadd.f32 %v445, %v3547
        %v3998 = vadd.f32 %v446, %v3939
        %v3999 = vadd.f32 %v447, %v2766
        %v4000 = vadd.f32 %v448, %v3158
        %v4001 = vadd.f32 %v449, %v3550
        %v4002 = vadd.f32 %v450, %v3942
        %v4003 = vadd.f32 %v451, %v2768
        %v4004 = vadd.f32 %v452, %v3160
        %v4005 = vadd.f32 %v453, %v3552
        %v4006 = vadd.f32 %v454, %v3944
        %v4007 = vadd.f32 %v455, %v2771
        %v4008 = vadd.f32 %v456, %v3163
        %v4009 = vadd.f32 %v457, %v3555
        %v4010 = vadd.f32 %v458, %v3947
        %v4011 = vadd.f32 %v459, %v2773
        %v4012 = vadd.f32 %v460, %v3165
        %v4013 = vadd.f32 %v461, %v3557
        %v4014 = vadd.f32 %v462, %v3949
        %4015 = vst [vmem:[#allocation2] sm:$0xff] %v3951
        %4016 = vst [vmem:[#allocation2 + $0x8] sm:$0xff] %v3952
        %4017 = vst [vmem:[#allocation2 + $0x10] sm:$0xff] %v3953
        %4018 = vst [vmem:[#allocation2 + $0x18] sm:$0xff] %v3954
        %4019 = vst [vmem:[#allocation2 + $0x20] sm:$0xff] %v3955
        %4020 = vst [vmem:[#allocation2 + $0x28] sm:$0xff] %v3956
        %4021 = vst [vmem:[#allocation2 + $0x30] sm:$0xff] %v3957
        %4022 = vst [vmem:[#allocation2 + $0x38] sm:$0xff] %v3958
        %4023 = vst [vmem:[#allocation2 + $0x40] sm:$0xff] %v3959
        %4024 = vst [vmem:[#allocation2 + $0x48] sm:$0xff] %v3960
        %4025 = vst [vmem:[#allocation2 + $0x50] sm:$0xff] %v3961
        %4026 = vst [vmem:[#allocation2 + $0x58] sm:$0xff] %v3962
        %4027 = vst [vmem:[#allocation2 + $0x60] sm:$0xff] %v3963
        %4028 = vst [vmem:[#allocation2 + $0x68] sm:$0xff] %v3964
        %4029 = vst [vmem:[#allocation2 + $0x70] sm:$0xff] %v3965
        %4030 = vst [vmem:[#allocation2 + $0x78] sm:$0xff] %v3966
        %4031 = vst [vmem:[#allocation2 + $0x80] sm:$0xff] %v3967
        %4032 = vst [vmem:[#allocation2 + $0x88] sm:$0xff] %v3968
        %4033 = vst [vmem:[#allocation2 + $0x90] sm:$0xff] %v3969
        %4034 = vst [vmem:[#allocation2 + $0x98] sm:$0xff] %v3970
        %4035 = vst [vmem:[#allocation2 + $0xa0] sm:$0xff] %v3971
        %4036 = vst [vmem:[#allocation2 + $0xa8] sm:$0xff] %v3972
        %4037 = vst [vmem:[#allocation2 + $0xb0] sm:$0xff] %v3973
        %4038 = vst [vmem:[#allocation2 + $0xb8] sm:$0xff] %v3974
        %4039 = vst [vmem:[#allocation2 + $0xc0] sm:$0xff] %v3975
        %4040 = vst [vmem:[#allocation2 + $0xc8] sm:$0xff] %v3976
        %4041 = vst [vmem:[#allocation2 + $0xd0] sm:$0xff] %v3977
        %4042 = vst [vmem:[#allocation2 + $0xd8] sm:$0xff] %v3978
        %4043 = vst [vmem:[#allocation2 + $0xe0] sm:$0xff] %v3979
        %4044 = vst [vmem:[#allocation2 + $0xe8] sm:$0xff] %v3980
        %4045 = vst [vmem:[#allocation2 + $0xf0] sm:$0xff] %v3981
        %4046 = vst [vmem:[#allocation2 + $0xf8] sm:$0xff] %v3982
        %4047 = vst [vmem:[#allocation2 + $0x100] sm:$0xff] %v3983
        %4048 = vst [vmem:[#allocation2 + $0x108] sm:$0xff] %v3984
        %4049 = vst [vmem:[#allocation2 + $0x110] sm:$0xff] %v3985
        %4050 = vst [vmem:[#allocation2 + $0x118] sm:$0xff] %v3986
        %4051 = vst [vmem:[#allocation2 + $0x120] sm:$0xff] %v3987
        %4052 = vst [vmem:[#allocation2 + $0x128] sm:$0xff] %v3988
        %4053 = vst [vmem:[#allocation2 + $0x130] sm:$0xff] %v3989
        %4054 = vst [vmem:[#allocation2 + $0x138] sm:$0xff] %v3990
        %4055 = vst [vmem:[#allocation2 + $0x140] sm:$0xff] %v3991
        %4056 = vst [vmem:[#allocation2 + $0x148] sm:$0xff] %v3992
        %4057 = vst [vmem:[#allocation2 + $0x150] sm:$0xff] %v3993
        %4058 = vst [vmem:[#allocation2 + $0x158] sm:$0xff] %v3994
        %4059 = vst [vmem:[#allocation2 + $0x160] sm:$0xff] %v3995
        %4060 = vst [vmem:[#allocation2 + $0x168] sm:$0xff] %v3996
        %4061 = vst [vmem:[#allocation2 + $0x170] sm:$0xff] %v3997
        %4062 = vst [vmem:[#allocation2 + $0x178] sm:$0xff] %v3998
        %4063 = vst [vmem:[#allocation2 + $0x180] sm:$0xff] %v3999
        %4064 = vst [vmem:[#allocation2 + $0x188] sm:$0xff] %v4000
        %4065 = vst [vmem:[#allocation2 + $0x190] sm:$0xff] %v4001
        %4066 = vst [vmem:[#allocation2 + $0x198] sm:$0xff] %v4002
        %4067 = vst [vmem:[#allocation2 + $0x1a0] sm:$0xff] %v4003
        %4068 = vst [vmem:[#allocation2 + $0x1a8] sm:$0xff] %v4004
        %4069 = vst [vmem:[#allocation2 + $0x1b0] sm:$0xff] %v4005
        %4070 = vst [vmem:[#allocation2 + $0x1b8] sm:$0xff] %v4006
        %4071 = vst [vmem:[#allocation2 + $0x1c0] sm:$0xff] %v4007
        %4072 = vst [vmem:[#allocation2 + $0x1c8] sm:$0xff] %v4008
        %4073 = vst [vmem:[#allocation2 + $0x1d0] sm:$0xff] %v4009
        %4074 = vst [vmem:[#allocation2 + $0x1d8] sm:$0xff] %v4010
        %4075 = vst [vmem:[#allocation2 + $0x1e0] sm:$0xff] %v4011
        %4076 = vst [vmem:[#allocation2 + $0x1e8] sm:$0xff] %v4012
        %4077 = vst [vmem:[#allocation2 + $0x1f0] sm:$0xff] %v4013
        %4078 = vst [vmem:[#allocation2 + $0x1f8] sm:$0xff] %v4014
        // Predicated region
        $region49: #{tpu_custom_call.1} parent=31 // pred_check
          %p4079 = pneg %p331
        $region50: #{tpu_custom_call.1} parent=31 // pred_check_branch
          %4081 = sbr.rel (%p4079) target = $region52
        $region51: #{tpu_custom_call.1} parent=31 // pred_region
          %v4082 = vld [vmem:[#allocation2] sm:$0xff]
          %v4083 = vld [vmem:[#allocation2 + $0x8] sm:$0xff]
          %v4084 = vld [vmem:[#allocation2 + $0x10] sm:$0xff]
          %v4085 = vld [vmem:[#allocation2 + $0x18] sm:$0xff]
          %v4086 = vld [vmem:[#allocation2 + $0x20] sm:$0xff]
          %v4087 = vld [vmem:[#allocation2 + $0x28] sm:$0xff]
          %v4088 = vld [vmem:[#allocation2 + $0x30] sm:$0xff]
          %v4089 = vld [vmem:[#allocation2 + $0x38] sm:$0xff]
          %v4090 = vld [vmem:[#allocation2 + $0x40] sm:$0xff]
          %v4091 = vld [vmem:[#allocation2 + $0x48] sm:$0xff]
          %v4092 = vld [vmem:[#allocation2 + $0x50] sm:$0xff]
          %v4093 = vld [vmem:[#allocation2 + $0x58] sm:$0xff]
          %v4094 = vld [vmem:[#allocation2 + $0x60] sm:$0xff]
          %v4095 = vld [vmem:[#allocation2 + $0x68] sm:$0xff]
          %v4096 = vld [vmem:[#allocation2 + $0x70] sm:$0xff]
          %v4097 = vld [vmem:[#allocation2 + $0x78] sm:$0xff]
          %v4098 = vld [vmem:[#allocation2 + $0x80] sm:$0xff]
          %v4099 = vld [vmem:[#allocation2 + $0x88] sm:$0xff]
          %v4100 = vld [vmem:[#allocation2 + $0x90] sm:$0xff]
          %v4101 = vld [vmem:[#allocation2 + $0x98] sm:$0xff]
          %v4102 = vld [vmem:[#allocation2 + $0xa0] sm:$0xff]
          %v4103 = vld [vmem:[#allocation2 + $0xa8] sm:$0xff]
          %v4104 = vld [vmem:[#allocation2 + $0xb0] sm:$0xff]
          %v4105 = vld [vmem:[#allocation2 + $0xb8] sm:$0xff]
          %v4106 = vld [vmem:[#allocation2 + $0xc0] sm:$0xff]
          %v4107 = vld [vmem:[#allocation2 + $0xc8] sm:$0xff]
          %v4108 = vld [vmem:[#allocation2 + $0xd0] sm:$0xff]
          %v4109 = vld [vmem:[#allocation2 + $0xd8] sm:$0xff]
          %v4110 = vld [vmem:[#allocation2 + $0xe0] sm:$0xff]
          %v4111 = vld [vmem:[#allocation2 + $0xe8] sm:$0xff]
          %v4112 = vld [vmem:[#allocation2 + $0xf0] sm:$0xff]
          %v4113 = vld [vmem:[#allocation2 + $0xf8] sm:$0xff]
          %v4114 = vld [vmem:[#allocation2 + $0x100] sm:$0xff]
          %v4115 = vld [vmem:[#allocation2 + $0x108] sm:$0xff]
          %v4116 = vld [vmem:[#allocation2 + $0x110] sm:$0xff]
          %v4117 = vld [vmem:[#allocation2 + $0x118] sm:$0xff]
          %v4118 = vld [vmem:[#allocation2 + $0x120] sm:$0xff]
          %v4119 = vld [vmem:[#allocation2 + $0x128] sm:$0xff]
          %v4120 = vld [vmem:[#allocation2 + $0x130] sm:$0xff]
          %v4121 = vld [vmem:[#allocation2 + $0x138] sm:$0xff]
          %v4122 = vld [vmem:[#allocation2 + $0x140] sm:$0xff]
          %v4123 = vld [vmem:[#allocation2 + $0x148] sm:$0xff]
          %v4124 = vld [vmem:[#allocation2 + $0x150] sm:$0xff]
          %v4125 = vld [vmem:[#allocation2 + $0x158] sm:$0xff]
          %v4126 = vld [vmem:[#allocation2 + $0x160] sm:$0xff]
          %v4127 = vld [vmem:[#allocation2 + $0x168] sm:$0xff]
          %v4128 = vld [vmem:[#allocation2 + $0x170] sm:$0xff]
          %v4129 = vld [vmem:[#allocation2 + $0x178] sm:$0xff]
          %v4130 = vld [vmem:[#allocation2 + $0x180] sm:$0xff]
          %v4131 = vld [vmem:[#allocation2 + $0x188] sm:$0xff]
          %v4132 = vld [vmem:[#allocation2 + $0x190] sm:$0xff]
          %v4133 = vld [vmem:[#allocation2 + $0x198] sm:$0xff]
          %v4134 = vld [vmem:[#allocation2 + $0x1a0] sm:$0xff]
          %v4135 = vld [vmem:[#allocation2 + $0x1a8] sm:$0xff]
          %v4136 = vld [vmem:[#allocation2 + $0x1b0] sm:$0xff]
          %v4137 = vld [vmem:[#allocation2 + $0x1b8] sm:$0xff]
          %v4138 = vld [vmem:[#allocation2 + $0x1c0] sm:$0xff]
          %v4139 = vld [vmem:[#allocation2 + $0x1c8] sm:$0xff]
          %v4140 = vld [vmem:[#allocation2 + $0x1d0] sm:$0xff]
          %v4141 = vld [vmem:[#allocation2 + $0x1d8] sm:$0xff]
          %v4142 = vld [vmem:[#allocation2 + $0x1e0] sm:$0xff]
          %v4143 = vld [vmem:[#allocation2 + $0x1e8] sm:$0xff]
          %v4144 = vld [vmem:[#allocation2 + $0x1f0] sm:$0xff]
          %v4145 = vld [vmem:[#allocation2 + $0x1f8] sm:$0xff]
          %v4146 = vmax.f32 %v4082, 0.0
          %v4147 = vmax.f32 %v4083, 0.0
          %v4148 = vmax.f32 %v4084, 0.0
          %v4149 = vmax.f32 %v4085, 0.0
          %v4150 = vmax.f32 %v4086, 0.0
          %v4151 = vmax.f32 %v4087, 0.0
          %v4152 = vmax.f32 %v4088, 0.0
          %v4153 = vmax.f32 %v4089, 0.0
          %v4154 = vmax.f32 %v4090, 0.0
          %v4155 = vmax.f32 %v4091, 0.0
          %v4156 = vmax.f32 %v4092, 0.0
          %v4157 = vmax.f32 %v4093, 0.0
          %v4158 = vmax.f32 %v4094, 0.0
          %v4159 = vmax.f32 %v4095, 0.0
          %v4160 = vmax.f32 %v4096, 0.0
          %v4161 = vmax.f32 %v4097, 0.0
          %v4162 = vmax.f32 %v4098, 0.0
          %v4163 = vmax.f32 %v4099, 0.0
          %v4164 = vmax.f32 %v4100, 0.0
          %v4165 = vmax.f32 %v4101, 0.0
          %v4166 = vmax.f32 %v4102, 0.0
          %v4167 = vmax.f32 %v4103, 0.0
          %v4168 = vmax.f32 %v4104, 0.0
          %v4169 = vmax.f32 %v4105, 0.0
          %v4170 = vmax.f32 %v4106, 0.0
          %v4171 = vmax.f32 %v4107, 0.0
          %v4172 = vmax.f32 %v4108, 0.0
          %v4173 = vmax.f32 %v4109, 0.0
          %v4174 = vmax.f32 %v4110, 0.0
          %v4175 = vmax.f32 %v4111, 0.0
          %v4176 = vmax.f32 %v4112, 0.0
          %v4177 = vmax.f32 %v4113, 0.0
          %v4178 = vmax.f32 %v4114, 0.0
          %v4179 = vmax.f32 %v4115, 0.0
          %v4180 = vmax.f32 %v4116, 0.0
          %v4181 = vmax.f32 %v4117, 0.0
          %v4182 = vmax.f32 %v4118, 0.0
          %v4183 = vmax.f32 %v4119, 0.0
          %v4184 = vmax.f32 %v4120, 0.0
          %v4185 = vmax.f32 %v4121, 0.0
          %v4186 = vmax.f32 %v4122, 0.0
          %v4187 = vmax.f32 %v4123, 0.0
          %v4188 = vmax.f32 %v4124, 0.0
          %v4189 = vmax.f32 %v4125, 0.0
          %v4190 = vmax.f32 %v4126, 0.0
          %v4191 = vmax.f32 %v4127, 0.0
          %v4192 = vmax.f32 %v4128, 0.0
          %v4193 = vmax.f32 %v4129, 0.0
          %v4194 = vmax.f32 %v4130, 0.0
          %v4195 = vmax.f32 %v4131, 0.0
          %v4196 = vmax.f32 %v4132, 0.0
          %v4197 = vmax.f32 %v4133, 0.0
          %v4198 = vmax.f32 %v4134, 0.0
          %v4199 = vmax.f32 %v4135, 0.0
          %v4200 = vmax.f32 %v4136, 0.0
          %v4201 = vmax.f32 %v4137, 0.0
          %v4202 = vmax.f32 %v4138, 0.0
          %v4203 = vmax.f32 %v4139, 0.0
          %v4204 = vmax.f32 %v4140, 0.0
          %v4205 = vmax.f32 %v4141, 0.0
          %v4206 = vmax.f32 %v4142, 0.0
          %v4207 = vmax.f32 %v4143, 0.0
          %v4208 = vmax.f32 %v4144, 0.0
          %v4209 = vmax.f32 %v4145, 0.0
          %v4210 = vpack.c.bf16 %v4147, %v4146
          %v4211 = vpack.c.bf16 %v4149, %v4148
          %v4212 = vpack.c.bf16 %v4151, %v4150
          %v4213 = vpack.c.bf16 %v4153, %v4152
          %v4214 = vpack.c.bf16 %v4155, %v4154
          %v4215 = vpack.c.bf16 %v4157, %v4156
          %v4216 = vpack.c.bf16 %v4159, %v4158
          %v4217 = vpack.c.bf16 %v4161, %v4160
          %v4218 = vpack.c.bf16 %v4163, %v4162
          %v4219 = vpack.c.bf16 %v4165, %v4164
          %v4220 = vpack.c.bf16 %v4167, %v4166
          %v4221 = vpack.c.bf16 %v4169, %v4168
          %v4222 = vpack.c.bf16 %v4171, %v4170
          %v4223 = vpack.c.bf16 %v4173, %v4172
          %v4224 = vpack.c.bf16 %v4175, %v4174
          %v4225 = vpack.c.bf16 %v4177, %v4176
          %v4226 = vpack.c.bf16 %v4179, %v4178
          %v4227 = vpack.c.bf16 %v4181, %v4180
          %v4228 = vpack.c.bf16 %v4183, %v4182
          %v4229 = vpack.c.bf16 %v4185, %v4184
          %v4230 = vpack.c.bf16 %v4187, %v4186
          %v4231 = vpack.c.bf16 %v4189, %v4188
          %v4232 = vpack.c.bf16 %v4191, %v4190
          %v4233 = vpack.c.bf16 %v4193, %v4192
          %v4234 = vpack.c.bf16 %v4195, %v4194
          %v4235 = vpack.c.bf16 %v4197, %v4196
          %v4236 = vpack.c.bf16 %v4199, %v4198
          %v4237 = vpack.c.bf16 %v4201, %v4200
          %v4238 = vpack.c.bf16 %v4203, %v4202
          %v4239 = vpack.c.bf16 %v4205, %v4204
          %v4240 = vpack.c.bf16 %v4207, %v4206
          %v4241 = vpack.c.bf16 %v4209, %v4208
          %4242 = vst [vmem:[%s310] sm:$0xff] %v4210
          %4243 = vst [vmem:[%s310 + $0x8] sm:$0xff] %v4211
          %4244 = vst [vmem:[%s310 + $0x10] sm:$0xff] %v4212
          %4245 = vst [vmem:[%s310 + $0x18] sm:$0xff] %v4213
          %4246 = vst [vmem:[%s310 + $0x20] sm:$0xff] %v4214
          %4247 = vst [vmem:[%s310 + $0x28] sm:$0xff] %v4215
          %4248 = vst [vmem:[%s310 + $0x30] sm:$0xff] %v4216
          %4249 = vst [vmem:[%s310 + $0x38] sm:$0xff] %v4217
          %4250 = vst [vmem:[%s310 + $0x40] sm:$0xff] %v4218
          %4251 = vst [vmem:[%s310 + $0x48] sm:$0xff] %v4219
          %4252 = vst [vmem:[%s310 + $0x50] sm:$0xff] %v4220
          %4253 = vst [vmem:[%s310 + $0x58] sm:$0xff] %v4221
          %4254 = vst [vmem:[%s310 + $0x60] sm:$0xff] %v4222
          %4255 = vst [vmem:[%s310 + $0x68] sm:$0xff] %v4223
          %4256 = vst [vmem:[%s310 + $0x70] sm:$0xff] %v4224
          %4257 = vst [vmem:[%s310 + $0x78] sm:$0xff] %v4225
          %4258 = vst [vmem:[%s310 + $0x80] sm:$0xff] %v4226
          %4259 = vst [vmem:[%s310 + $0x88] sm:$0xff] %v4227
          %4260 = vst [vmem:[%s310 + $0x90] sm:$0xff] %v4228
          %4261 = vst [vmem:[%s310 + $0x98] sm:$0xff] %v4229
          %4262 = vst [vmem:[%s310 + $0xa0] sm:$0xff] %v4230
          %4263 = vst [vmem:[%s310 + $0xa8] sm:$0xff] %v4231
          %4264 = vst [vmem:[%s310 + $0xb0] sm:$0xff] %v4232
          %4265 = vst [vmem:[%s310 + $0xb8] sm:$0xff] %v4233
          %4266 = vst [vmem:[%s310 + $0xc0] sm:$0xff] %v4234
          %4267 = vst [vmem:[%s310 + $0xc8] sm:$0xff] %v4235
          %4268 = vst [vmem:[%s310 + $0xd0] sm:$0xff] %v4236
          %4269 = vst [vmem:[%s310 + $0xd8] sm:$0xff] %v4237
          %4270 = vst [vmem:[%s310 + $0xe0] sm:$0xff] %v4238
          %4271 = vst [vmem:[%s310 + $0xe8] sm:$0xff] %v4239
          %4272 = vst [vmem:[%s310 + $0xf0] sm:$0xff] %v4240
          %4273 = vst [vmem:[%s310 + $0xf8] sm:$0xff] %v4241
          %v4274 = vld [vmem:[%s282] sm:$0xf]
          %v4276 = vperm.slane %v4274, 0
          %v4277 = vperm.slane %v4274, 1
          %v4278 = vperm.slane %v4274, 2
          %v4279 = vperm.slane %v4274, 3
          %v4284 = vmul.f32 %v4146, %v4276
          %v4285 = vmul.f32 %v4147, %v4277
          %v4286 = vmul.f32 %v4148, %v4278
          %v4287 = vmul.f32 %v4149, %v4279
          %v4288 = vmul.f32 %v4150, %v4276
          %v4289 = vmul.f32 %v4151, %v4277
          %v4290 = vmul.f32 %v4152, %v4278
          %v4291 = vmul.f32 %v4153, %v4279
          %v4292 = vmul.f32 %v4154, %v4276
          %v4293 = vmul.f32 %v4155, %v4277
          %v4294 = vmul.f32 %v4156, %v4278
          %v4295 = vmul.f32 %v4157, %v4279
          %v4296 = vmul.f32 %v4158, %v4276
          %v4297 = vmul.f32 %v4159, %v4277
          %v4298 = vmul.f32 %v4160, %v4278
          %v4299 = vmul.f32 %v4161, %v4279
          %v4300 = vmul.f32 %v4162, %v4276
          %v4301 = vmul.f32 %v4163, %v4277
          %v4302 = vmul.f32 %v4164, %v4278
          %v4303 = vmul.f32 %v4165, %v4279
          %v4304 = vmul.f32 %v4166, %v4276
          %v4305 = vmul.f32 %v4167, %v4277
          %v4306 = vmul.f32 %v4168, %v4278
          %v4307 = vmul.f32 %v4169, %v4279
          %v4308 = vmul.f32 %v4170, %v4276
          %v4309 = vmul.f32 %v4171, %v4277
          %v4310 = vmul.f32 %v4172, %v4278
          %v4311 = vmul.f32 %v4173, %v4279
          %v4312 = vmul.f32 %v4174, %v4276
          %v4313 = vmul.f32 %v4175, %v4277
          %v4314 = vmul.f32 %v4176, %v4278
          %v4315 = vmul.f32 %v4177, %v4279
          %v4316 = vmul.f32 %v4178, %v4276
          %v4317 = vmul.f32 %v4179, %v4277
          %v4318 = vmul.f32 %v4180, %v4278
          %v4319 = vmul.f32 %v4181, %v4279
          %v4320 = vmul.f32 %v4182, %v4276
          %v4321 = vmul.f32 %v4183, %v4277
          %v4322 = vmul.f32 %v4184, %v4278
          %v4323 = vmul.f32 %v4185, %v4279
          %v4324 = vmul.f32 %v4186, %v4276
          %v4325 = vmul.f32 %v4187, %v4277
          %v4326 = vmul.f32 %v4188, %v4278
          %v4327 = vmul.f32 %v4189, %v4279
          %v4328 = vmul.f32 %v4190, %v4276
          %v4329 = vmul.f32 %v4191, %v4277
          %v4330 = vmul.f32 %v4192, %v4278
          %v4331 = vmul.f32 %v4193, %v4279
          %v4332 = vmul.f32 %v4194, %v4276
          %v4333 = vmul.f32 %v4195, %v4277
          %v4334 = vmul.f32 %v4196, %v4278
          %v4335 = vmul.f32 %v4197, %v4279
          %v4336 = vmul.f32 %v4198, %v4276
          %v4337 = vmul.f32 %v4199, %v4277
          %v4338 = vmul.f32 %v4200, %v4278
          %v4339 = vmul.f32 %v4201, %v4279
          %v4340 = vmul.f32 %v4202, %v4276
          %v4341 = vmul.f32 %v4203, %v4277
          %v4342 = vmul.f32 %v4204, %v4278
          %v4343 = vmul.f32 %v4205, %v4279
          %v4344 = vmul.f32 %v4206, %v4276
          %v4345 = vmul.f32 %v4207, %v4277
          %v4346 = vmul.f32 %v4208, %v4278
          %v4347 = vmul.f32 %v4209, %v4279
          %v4348 = vadd.f32 %v4284, %v4285
          %v4349 = vadd.f32 %v4348, %v4286
          %v4350 = vadd.f32 %v4349, %v4287
          %4351 = vadd.xlane.f32.xlu0 %v4350
          %v4352 = vpop.xlane.xlu0 %4351
          %v4353 = vadd.f32 %v4288, %v4289
          %v4354 = vadd.f32 %v4353, %v4290
          %v4355 = vadd.f32 %v4354, %v4291
          %4356 = vadd.xlane.f32.xlu0 %v4355
          %v4357 = vpop.xlane.xlu0 %4356
          %v4358 = vadd.f32 %v4292, %v4293
          %v4359 = vadd.f32 %v4358, %v4294
          %v4360 = vadd.f32 %v4359, %v4295
          %4361 = vadd.xlane.f32.xlu0 %v4360
          %v4362 = vpop.xlane.xlu0 %4361
          %v4363 = vadd.f32 %v4296, %v4297
          %v4364 = vadd.f32 %v4363, %v4298
          %v4365 = vadd.f32 %v4364, %v4299
          %4366 = vadd.xlane.f32.xlu0 %v4365
          %v4367 = vpop.xlane.xlu0 %4366
          %v4368 = vadd.f32 %v4300, %v4301
          %v4369 = vadd.f32 %v4368, %v4302
          %v4370 = vadd.f32 %v4369, %v4303
          %4371 = vadd.xlane.f32.xlu0 %v4370
          %v4372 = vpop.xlane.xlu0 %4371
          %v4373 = vadd.f32 %v4304, %v4305
          %v4374 = vadd.f32 %v4373, %v4306
          %v4375 = vadd.f32 %v4374, %v4307
          %4376 = vadd.xlane.f32.xlu0 %v4375
          %v4377 = vpop.xlane.xlu0 %4376
          %v4378 = vadd.f32 %v4308, %v4309
          %v4379 = vadd.f32 %v4378, %v4310
          %v4380 = vadd.f32 %v4379, %v4311
          %4381 = vadd.xlane.f32.xlu0 %v4380
          %v4382 = vpop.xlane.xlu0 %4381
          %v4383 = vadd.f32 %v4312, %v4313
          %v4384 = vadd.f32 %v4383, %v4314
          %v4385 = vadd.f32 %v4384, %v4315
          %4386 = vadd.xlane.f32.xlu0 %v4385
          %v4387 = vpop.xlane.xlu0 %4386
          %v4388 = vadd.f32 %v4316, %v4317
          %v4389 = vadd.f32 %v4388, %v4318
          %v4390 = vadd.f32 %v4389, %v4319
          %4391 = vadd.xlane.f32.xlu0 %v4390
          %v4392 = vpop.xlane.xlu0 %4391
          %v4393 = vadd.f32 %v4320, %v4321
          %v4394 = vadd.f32 %v4393, %v4322
          %v4395 = vadd.f32 %v4394, %v4323
          %4396 = vadd.xlane.f32.xlu0 %v4395
          %v4397 = vpop.xlane.xlu0 %4396
          %v4398 = vadd.f32 %v4324, %v4325
          %v4399 = vadd.f32 %v4398, %v4326
          %v4400 = vadd.f32 %v4399, %v4327
          %4401 = vadd.xlane.f32.xlu0 %v4400
          %v4402 = vpop.xlane.xlu0 %4401
          %v4403 = vadd.f32 %v4328, %v4329
          %v4404 = vadd.f32 %v4403, %v4330
          %v4405 = vadd.f32 %v4404, %v4331
          %4406 = vadd.xlane.f32.xlu0 %v4405
          %v4407 = vpop.xlane.xlu0 %4406
          %v4408 = vadd.f32 %v4332, %v4333
          %v4409 = vadd.f32 %v4408, %v4334
          %v4410 = vadd.f32 %v4409, %v4335
          %4411 = vadd.xlane.f32.xlu0 %v4410
          %v4412 = vpop.xlane.xlu0 %4411
          %v4413 = vadd.f32 %v4336, %v4337
          %v4414 = vadd.f32 %v4413, %v4338
          %v4415 = vadd.f32 %v4414, %v4339
          %4416 = vadd.xlane.f32.xlu0 %v4415
          %v4417 = vpop.xlane.xlu0 %4416
          %v4418 = vadd.f32 %v4340, %v4341
          %v4419 = vadd.f32 %v4418, %v4342
          %v4420 = vadd.f32 %v4419, %v4343
          %4421 = vadd.xlane.f32.xlu0 %v4420
          %v4422 = vpop.xlane.xlu0 %4421
          %v4423 = vadd.f32 %v4344, %v4345
          %v4424 = vadd.f32 %v4423, %v4346
          %v4425 = vadd.f32 %v4424, %v4347
          %4426 = vadd.xlane.f32.xlu0 %v4425
          %v4427 = vpop.xlane.xlu0 %4426
          %p4428 = scmp.eq.s32.totalorder %s29, 0
          // Predicated region
          $region53: #{tpu_custom_call.1} parent=51 // pred_check
            %p4429 = pneg %p4428
          $region54: #{tpu_custom_call.1} parent=51 // pred_check_branch
            %4431 = sbr.rel (%p4429) target = $region56
          $region55: #{tpu_custom_call.1} parent=51 // pred_region
            %vm4432 = vcmask 7168
            %4433 = vst.msk [vmem:[%s329] sm:$0xff] %vm4432, %v4352
            %4434 = vst.msk [vmem:[%s329 + $0x8] sm:$0xff] %vm4432, %v4357
            %4435 = vst.msk [vmem:[%s329 + $0x10] sm:$0xff] %vm4432, %v4362
            %4436 = vst.msk [vmem:[%s329 + $0x18] sm:$0xff] %vm4432, %v4367
            %4437 = vst.msk [vmem:[%s329 + $0x20] sm:$0xff] %vm4432, %v4372
            %4438 = vst.msk [vmem:[%s329 + $0x28] sm:$0xff] %vm4432, %v4377
            %4439 = vst.msk [vmem:[%s329 + $0x30] sm:$0xff] %vm4432, %v4382
            %4440 = vst.msk [vmem:[%s329 + $0x38] sm:$0xff] %vm4432, %v4387
            %4441 = vst.msk [vmem:[%s329 + $0x40] sm:$0xff] %vm4432, %v4392
            %4442 = vst.msk [vmem:[%s329 + $0x48] sm:$0xff] %vm4432, %v4397
            %4443 = vst.msk [vmem:[%s329 + $0x50] sm:$0xff] %vm4432, %v4402
            %4444 = vst.msk [vmem:[%s329 + $0x58] sm:$0xff] %vm4432, %v4407
            %4445 = vst.msk [vmem:[%s329 + $0x60] sm:$0xff] %vm4432, %v4412
            %4446 = vst.msk [vmem:[%s329 + $0x68] sm:$0xff] %vm4432, %v4417
            %4447 = vst.msk [vmem:[%s329 + $0x70] sm:$0xff] %vm4432, %v4422
            %4448 = vst.msk [vmem:[%s329 + $0x78] sm:$0xff] %vm4432, %v4427
          $region56: #{tpu_custom_call.1} parent=51 // pred_fallthru
            _
          %p4449 = scmp.gt.s32.totalorder %s29, 0
          // Predicated region
          $region57: #{tpu_custom_call.1} parent=51 // pred_check
            %p4450 = pneg %p4449
          $region58: #{tpu_custom_call.1} parent=51 // pred_check_branch
            %4452 = sbr.rel (%p4450) target = $region60
          $region59: #{tpu_custom_call.1} parent=51 // pred_region
            %v4453 = vld [vmem:[%s329] sm:$0xff]
            %v4454 = vld [vmem:[%s329 + $0x8] sm:$0xff]
            %v4455 = vld [vmem:[%s329 + $0x10] sm:$0xff]
            %v4456 = vld [vmem:[%s329 + $0x18] sm:$0xff]
            %v4457 = vld [vmem:[%s329 + $0x20] sm:$0xff]
            %v4458 = vld [vmem:[%s329 + $0x28] sm:$0xff]
            %v4459 = vld [vmem:[%s329 + $0x30] sm:$0xff]
            %v4460 = vld [vmem:[%s329 + $0x38] sm:$0xff]
            %v4461 = vld [vmem:[%s329 + $0x40] sm:$0xff]
            %v4462 = vld [vmem:[%s329 + $0x48] sm:$0xff]
            %v4463 = vld [vmem:[%s329 + $0x50] sm:$0xff]
            %v4464 = vld [vmem:[%s329 + $0x58] sm:$0xff]
            %v4465 = vld [vmem:[%s329 + $0x60] sm:$0xff]
            %v4466 = vld [vmem:[%s329 + $0x68] sm:$0xff]
            %v4467 = vld [vmem:[%s329 + $0x70] sm:$0xff]
            %v4468 = vld [vmem:[%s329 + $0x78] sm:$0xff]
            %v4469 = vadd.f32 %v4453, %v4352
            %v4470 = vadd.f32 %v4454, %v4357
            %v4471 = vadd.f32 %v4455, %v4362
            %v4472 = vadd.f32 %v4456, %v4367
            %v4473 = vadd.f32 %v4457, %v4372
            %v4474 = vadd.f32 %v4458, %v4377
            %v4475 = vadd.f32 %v4459, %v4382
            %v4476 = vadd.f32 %v4460, %v4387
            %v4477 = vadd.f32 %v4461, %v4392
            %v4478 = vadd.f32 %v4462, %v4397
            %v4479 = vadd.f32 %v4463, %v4402
            %v4480 = vadd.f32 %v4464, %v4407
            %v4481 = vadd.f32 %v4465, %v4412
            %v4482 = vadd.f32 %v4466, %v4417
            %v4483 = vadd.f32 %v4467, %v4422
            %v4484 = vadd.f32 %v4468, %v4427
            %vm4485 = vcmask 7168
            %4486 = vst.msk [vmem:[%s329] sm:$0xff] %vm4485, %v4469
            %4487 = vst.msk [vmem:[%s329 + $0x8] sm:$0xff] %vm4485, %v4470
            %4488 = vst.msk [vmem:[%s329 + $0x10] sm:$0xff] %vm4485, %v4471
            %4489 = vst.msk [vmem:[%s329 + $0x18] sm:$0xff] %vm4485, %v4472
            %4490 = vst.msk [vmem:[%s329 + $0x20] sm:$0xff] %vm4485, %v4473
            %4491 = vst.msk [vmem:[%s329 + $0x28] sm:$0xff] %vm4485, %v4474
            %4492 = vst.msk [vmem:[%s329 + $0x30] sm:$0xff] %vm4485, %v4475
            %4493 = vst.msk [vmem:[%s329 + $0x38] sm:$0xff] %vm4485, %v4476
            %4494 = vst.msk [vmem:[%s329 + $0x40] sm:$0xff] %vm4485, %v4477
            %4495 = vst.msk [vmem:[%s329 + $0x48] sm:$0xff] %vm4485, %v4478
            %4496 = vst.msk [vmem:[%s329 + $0x50] sm:$0xff] %vm4485, %v4479
            %4497 = vst.msk [vmem:[%s329 + $0x58] sm:$0xff] %vm4485, %v4480
            %4498 = vst.msk [vmem:[%s329 + $0x60] sm:$0xff] %vm4485, %v4481
            %4499 = vst.msk [vmem:[%s329 + $0x68] sm:$0xff] %vm4485, %v4482
            %4500 = vst.msk [vmem:[%s329 + $0x70] sm:$0xff] %vm4485, %v4483
            %4501 = vst.msk [vmem:[%s329 + $0x78] sm:$0xff] %vm4485, %v4484
          $region60: #{tpu_custom_call.1} parent=51 // pred_fallthru
            _
        $region52: #{tpu_custom_call.1} parent=31 // pred_fallthru
          _
        %s4502 = sand.u32 %s134, 1
        %s4503 = scalar_lea.sflag [#allocation5], %s4502
        %s4504 = sand.u32 %s134, 1
        %s4505 = smul.addr %s4504, 256
        %s4506 = scalar_lea.vmem [#allocation9], %s4505
        %s4507 = smul.u32 16, %s28
        %p4508 = scmp.lt.s32.totalorder %s4507, 15
        %s4509 = scalar_select %p4508, %s4507, 15
        %s4510 = smul.addr %s4509, 8
        %s4511 = scalar_lea.vmem %s4, %s4510
        // Predicated region
        $region61: #{tpu_custom_call.1} parent=31 // pred_check
          %p4512 = pneg %p144
        $region62: #{tpu_custom_call.1} parent=31 // pred_check_branch
          %4514 = sbr.rel (%p4512) target = $region64
        $region63: #{tpu_custom_call.1} parent=31 // pred_region
          %s4515 = smul.u32 16, %s28
          %s4516 = smul.u32 4, %s29
          %4518 = vsyncadd %s4503, 0
          %s4519 = smul.addr %s4515, 16
          %s4520 = sadd.s32 %s4516, %s4519
          %s4521 = smul.addr %s4520, 4
          %s4522 = scalar_lea.hbm %s3, %s4521
          %s4523 = sshll.u32 %s4506, 4
          %s4524 = int_to_ptr.vmem [resolvable:$true] %s4523
          %s4525 = sshll.u32 %s4522, 4
          %s4526 = int_to_ptr.hbm [resolvable:$true] %s4525
          %4531 = dma.vmem_to_hbm [thread:$0]  %s4524, 4096, %s4526, %s4503, 256, 1024, 16
        $region64: #{tpu_custom_call.1} parent=31 // pred_fallthru
          _
        // Predicated region
        $region65: #{tpu_custom_call.1} parent=31 // pred_check
          %p4532 = pneg %p170
        $region66: #{tpu_custom_call.1} parent=31 // pred_check_branch
          %4534 = sbr.rel (%p4532) target = $region68
        $region67: #{tpu_custom_call.1} parent=31 // pred_region
          %s4535 = smul.u32 16, %s28
        $region68: #{tpu_custom_call.1} parent=31 // pred_fallthru
          _
        // Predicated region
        $region69: #{tpu_custom_call.1} parent=31 // pred_check
          %p4536 = pneg %p170
        $region70: #{tpu_custom_call.1} parent=31 // pred_check_branch
          %4538 = sbr.rel (%p4536) target = $region72
        $region71: #{tpu_custom_call.1} parent=31 // pred_region
          %s4539 = smul.u32 16, %s28
          %p4540 = scmp.lt.s32.totalorder %s4539, 15
          %s4541 = scalar_select %p4540, %s4539, 15
          %s4542 = smul.addr %s4541, 8
          %s4543 = scalar_lea.vmem %s4, %s4542
        $region72: #{tpu_custom_call.1} parent=31 // pred_fallthru
          _
      $region32: #{tpu_custom_call.1} parent=5 // pred_fallthru
        _
      %p4544 = scmp.le.s32.totalorder 2, %s18
      // Predicated region
      $region73: #{tpu_custom_call.1} parent=5 // pred_check
        %p4545 = pneg %p4544
      $region74: #{tpu_custom_call.1} parent=5 // pred_check_branch
        %4547 = sbr.rel (%p4545) target = $region76
      $region75: #{tpu_custom_call.1} parent=5 // pred_region
        %s4548 = ssub.s32 %s18, 2
        // Predicated region
        $region77: #{tpu_custom_call.1} parent=75 // pred_check
          %p4549 = pneg %p150
        $region78: #{tpu_custom_call.1} parent=75 // pred_check_branch
          %4551 = sbr.rel (%p4549) target = $region80
        $region79: #{tpu_custom_call.1} parent=75 // pred_region
          %s4552 = sand.u32 %s135, 1
          %s4553 = scalar_lea.sflag [#allocation5], %s4552
          %s4554 = sand.u32 %s135, 1
          %s4555 = smul.addr %s4554, 256
          %s4556 = scalar_lea.vmem [#allocation9], %s4555
          %4558 = dma.done %s4553, 4096
        $region80: #{tpu_custom_call.1} parent=75 // pred_fallthru
          _
      $region76: #{tpu_custom_call.1} parent=5 // pred_fallthru
        _
    $region6: #{tpu_custom_call.1} parent=1 // loop_footer
      %s22 = sadd.s32 1, %s18
    $region7: #{tpu_custom_call.1} parent=1 // loop_footer_branch
      %17 = sbr.rel target = $region3
    $region8: #{tpu_custom_call.1} parent=1 // loop_exit
      _
    %4559 = vsyncpa [#allocation4], 1
    %s4560 = scalar_lea.sflag [#allocation4], 1
    %4561 = vsyncpa %s4560, 1
    %4562 = vsyncpa [#allocation7], 1
    %s4563 = scalar_lea.sflag [#allocation7], 1
    %4564 = vsyncpa %s4563, 1
    %4565 = vsyncpa [#allocation5], 1
    %s4566 = scalar_lea.sflag [#allocation5], 1
    %4567 = vsyncpa %s4566, 1

</llo_original>
